<compile_context>
chip_gen: v6e
topology: v6e:2x2x1
jax: 0.10.0
libtpu: 0.0.40
codegen_flags: <defaults>
</compile_context>

<pallas_src>
import jax
import jax.numpy as jnp
from jax import lax
from jax.experimental import pallas as pl
from jax.experimental.pallas import tpu as pltpu


def _round_up(n, m):
    return ((n + m - 1) // m) * m


def _pick_time_chunk(T, max_chunk=256):
    Tc = min(T, max_chunk)
    while T % Tc != 0:
        Tc -= 1
    return Tc


def _pack_layer(w_ih, w_hh, b_ih, b_hh, in_pad):
    """Pack PyTorch LSTM weights into one fused, gate-padded matrix.

    w_ih: (4H, In), w_hh: (4H, H), biases: (4H,).
    Returns:
      W: (in_pad + Hp, 4*Hp) with gate g occupying columns [g*Hp, g*Hp + H)
      b: (1, 4*Hp)
      Hp: H rounded up to 128
    so that  gates = concat([inp_padded, h_padded]) @ W + b  equals
    inp @ w_ih.T + h @ w_hh.T + b_ih + b_hh on the first H lanes of each gate
    and exactly 0 on the padded lanes (which keeps padded h/c at 0 forever).
    """
    H = w_hh.shape[1]
    In = w_ih.shape[1]
    Hp = _round_up(H, 128)
    W = jnp.zeros((in_pad + Hp, 4 * Hp), jnp.float32)
    b = jnp.zeros((1, 4 * Hp), jnp.float32)
    for g in range(4):
        W = W.at[:In, g * Hp:g * Hp + H].set(w_ih[g * H:(g + 1) * H, :].T)
        W = W.at[in_pad:in_pad + H, g * Hp:g * Hp + H].set(w_hh[g * H:(g + 1) * H, :].T)
        b = b.at[0, g * Hp:g * Hp + H].set(b_ih[g * H:(g + 1) * H] + b_hh[g * H:(g + 1) * H])
    return W, b, Hp


def _encoder_kernel(x_ref, w1_ref, b1_ref, w2_ref, b2_ref, out_ref,
                    h1_ref, c1_ref, h2_ref, c2_ref):
    chunk = pl.program_id(0)

    @pl.when(chunk == 0)
    def _():
        h1_ref[...] = jnp.zeros_like(h1_ref)
        c1_ref[...] = jnp.zeros_like(c1_ref)
        h2_ref[...] = jnp.zeros_like(h2_ref)
        c2_ref[...] = jnp.zeros_like(c2_ref)

    w1 = w1_ref[...]
    b1 = b1_ref[...]
    w2 = w2_ref[...]
    b2 = b2_ref[...]
    Hp1 = h1_ref.shape[-1]
    Hp2 = h2_ref.shape[-1]
    Tc = x_ref.shape[0]

    def cell(inp, h, c, w, b, Hp):
        # One fused MXU push per cell: [x_t | h] @ [W_ih ; W_hh] + (b_ih + b_hh).
        gates = jnp.dot(jnp.concatenate([inp, h], axis=-1), w,
                        preferred_element_type=jnp.float32) + b
        # Gate boundaries are 128-lane aligned -> static, tile-aligned slices.
        i = jax.nn.sigmoid(gates[:, 0 * Hp:1 * Hp])
        f = jax.nn.sigmoid(gates[:, 1 * Hp:2 * Hp])
        g = jnp.tanh(gates[:, 2 * Hp:3 * Hp])
        o = jax.nn.sigmoid(gates[:, 3 * Hp:4 * Hp])
        c_new = f * c + i * g
        h_new = o * jnp.tanh(c_new)
        return h_new, c_new

    def step(t, carry):
        h1, c1, h2, c2 = carry
        x_t = x_ref[t]                                   # (Bp, Fp)
        h1, c1 = cell(x_t, h1, c1, w1, b1, Hp1)          # layer 1
        h2, c2 = cell(h1, h2, c2, w2, b2, Hp2)           # layer 2
        return (h1, c1, h2, c2)

    carry0 = (h1_ref[...], c1_ref[...], h2_ref[...], c2_ref[...])
    h1, c1, h2, c2 = lax.fori_loop(0, Tc, step, carry0, unroll=(Tc <= 16))

    # Persist recurrent state for the next time chunk.
    h1_ref[...] = h1
    c1_ref[...] = c1
    h2_ref[...] = h2
    c2_ref[...] = c2

    # Only the final h2 is the module's output; write it once.
    @pl.when(chunk == pl.num_programs(0) - 1)
    def _():
        out_ref[...] = h2


def encoder_forward(x, lstm1, lstm2, *, time_chunk=None):
    """Pallas TPU forward of the PyTorch Encoder.

    x: (B, T, F) float32, batch_first like the PyTorch module.
    lstm1 / lstm2: (w_ih, w_hh, b_ih, b_hh) in PyTorch layout
                   (w_ih: (4H, in), w_hh: (4H, H), biases: (4H,)).
    Returns (B, embedding_dim): rnn2 output at the last time step.
    """
    B, T, F = x.shape
    w_ih1, w_hh1, b_ih1, b_hh1 = lstm1
    w_ih2, w_hh2, b_ih2, b_hh2 = lstm2
    H1 = w_hh1.shape[1]   # hidden_dim = 2 * embedding_dim
    H2 = w_hh2.shape[1]   # embedding_dim

    Bp = _round_up(max(B, 8), 8)          # full sublane tiles
    Fp = _round_up(max(F, 128), 128)      # full lane tiles
    W1, b1, Hp1 = _pack_layer(w_ih1, w_hh1, b_ih1, b_hh1, Fp)
    W2, b2, Hp2 = _pack_layer(w_ih2, w_hh2, b_ih2, b_hh2, Hp1)

    # Time-major, pad batch (sublanes) and features (lanes) with zeros.
    x_tm = jnp.transpose(x, (1, 0, 2)).astype(jnp.float32)
    x_tm = jnp.pad(x_tm, ((0, 0), (0, Bp - B), (0, Fp - F)))

    Tc = _pick_time_chunk(T) if time_chunk is None else time_chunk
    assert T % Tc == 0, "time_chunk must divide the sequence length"
    n_chunks = T // Tc

    grid_spec = pltpu.PrefetchScalarGridSpec(
        num_scalar_prefetch=0,
        grid=(n_chunks,),
        in_specs=[
            pl.BlockSpec((Tc, Bp, Fp), lambda c: (c, 0, 0)),          # x chunk
            pl.BlockSpec((Fp + Hp1, 4 * Hp1), lambda c: (0, 0)),      # W1 (resident)
            pl.BlockSpec((1, 4 * Hp1), lambda c: (0, 0)),             # b1
            pl.BlockSpec((Hp1 + Hp2, 4 * Hp2), lambda c: (0, 0)),     # W2 (resident)
            pl.BlockSpec((1, 4 * Hp2), lambda c: (0, 0)),             # b2
        ],
        out_specs=pl.BlockSpec((Bp, Hp2), lambda c: (0, 0)),
        scratch_shapes=[
            pltpu.VMEM((Bp, Hp1), jnp.float32),  # h1
            pltpu.VMEM((Bp, Hp1), jnp.float32),  # c1
            pltpu.VMEM((Bp, Hp2), jnp.float32),  # h2
            pltpu.VMEM((Bp, Hp2), jnp.float32),  # c2
        ],
    )

    out_padded = pl.pallas_call(
        _encoder_kernel,
        out_shape=jax.ShapeDtypeStruct((Bp, Hp2), jnp.float32),
        grid_spec=grid_spec,
        compiler_params=pltpu.CompilerParams(
            dimension_semantics=("arbitrary",)),  # recurrence: time is sequential
    )(x_tm, W1, b1, W2, b2)

    return out_padded[:B, :H2]


def _init_lstm_params(key, input_size, hidden_size):
    """PyTorch-style LSTM params, uniform(-k, k), k = 1/sqrt(hidden)."""
    k = 1.0 / jnp.sqrt(jnp.float32(hidden_size))
    k1, k2, k3, k4 = jax.random.split(key, 4)
    w_ih = jax.random.uniform(k1, (4 * hidden_size, input_size), jnp.float32, -k, k)
    w_hh = jax.random.uniform(k2, (4 * hidden_size, hidden_size), jnp.float32, -k, k)
    b_ih = jax.random.uniform(k3, (4 * hidden_size,), jnp.float32, -k, k)
    b_hh = jax.random.uniform(k4, (4 * hidden_size,), jnp.float32, -k, k)
    return w_ih, w_hh, b_ih, b_hh


def _lstm_ref(x, w_ih, w_hh, b_ih, b_hh):
    """Pure-JAX reference (matches torch.nn.LSTM, batch_first, zero init)."""
    B, T, F = x.shape
    H = w_hh.shape[1]

    def step(carry, x_t):
        h, c = carry
        gates = x_t @ w_ih.T + h @ w_hh.T + b_ih + b_hh
        i, f, g, o = jnp.split(gates, 4, axis=-1)
        i, f, o = jax.nn.sigmoid(i), jax.nn.sigmoid(f), jax.nn.sigmoid(o)
        g = jnp.tanh(g)
        c = f * c + i * g
        h = o * jnp.tanh(c)
        return (h, c), h

    init = (jnp.zeros((B, H), jnp.float32), jnp.zeros((B, H), jnp.float32))
    (_, _), hs = jax.lax.scan(step, init, jnp.swapaxes(x, 0, 1))
    return jnp.swapaxes(hs, 0, 1)  # (B, T, H)


if __name__ == "__main__":
    # Small shapes consistent with the module's forward.
    batch, seq_len, n_features, embedding_dim = 2, 8, 4, 32
    hidden_dim = 2 * embedding_dim

    root = jax.random.PRNGKey(0)
    kx, k1, k2 = jax.random.split(root, 3)
    x = jax.random.normal(kx, (batch, seq_len, n_features), jnp.float32)

    lstm1 = _init_lstm_params(k1, n_features, hidden_dim)
    lstm2 = _init_lstm_params(k2, hidden_dim, embedding_dim)

    out = encoder_forward(x, lstm1, lstm2)
    out = jax.block_until_ready(out)

    # Pure-JAX reference for correctness.
    h1 = _lstm_ref(x, *lstm1)
    h2 = _lstm_ref(h1, *lstm2)
    ref = h2[:, -1, :]

    assert out.shape == (batch, embedding_dim)
    assert jnp.allclose(out, ref, atol=1e-5, rtol=1e-5), "mismatch vs reference"
    print("KERNEL_OK")
</pallas_src>

<mosaic_0001>
module attributes {stable_mosaic.version = 11 : i64} {
  func.func @_encoder_kernel(%arg0: i32, %arg1: memref<8x8x128xf32, #tpu.memory_space<vmem>>, %arg2: memref<256x512xf32, #tpu.memory_space<vmem>>, %arg3: memref<1x512xf32, #tpu.memory_space<vmem>>, %arg4: memref<256x512xf32, #tpu.memory_space<vmem>>, %arg5: memref<1x512xf32, #tpu.memory_space<vmem>>, %arg6: memref<8x128xf32, #tpu.memory_space<vmem>>, %arg7: memref<8x128xf32, #tpu.memory_space<vmem>>, %arg8: memref<8x128xf32, #tpu.memory_space<vmem>>, %arg9: memref<8x128xf32, #tpu.memory_space<vmem>>, %arg10: memref<8x128xf32, #tpu.memory_space<vmem>>) attributes {dimension_semantics = [#tpu.dimension_semantics<arbitrary>], iteration_bounds = array<i64: 1>, scalar_prefetch = 0 : i64, scratch_operands = 4 : i64, tpu.core_type = #tpu.core_type<tc>, window_params = [{transform_indices = @transform_0, window_bounds = array<i64: 8, 8, 128>}, {pipeline_mode = #tpu.pipeline_mode<synchronous>, transform_indices = @transform_1, window_bounds = array<i64: 256, 512>}, {pipeline_mode = #tpu.pipeline_mode<synchronous>, transform_indices = @transform_2, window_bounds = array<i64: 1, 512>}, {pipeline_mode = #tpu.pipeline_mode<synchronous>, transform_indices = @transform_3, window_bounds = array<i64: 256, 512>}, {pipeline_mode = #tpu.pipeline_mode<synchronous>, transform_indices = @transform_4, window_bounds = array<i64: 1, 512>}, {pipeline_mode = #tpu.pipeline_mode<synchronous>, transform_indices = @transform_5, window_bounds = array<i64: 8, 128>}]} {
    %c0_i32 = arith.constant 0 : i32
    %0 = arith.cmpi eq, %arg0, %c0_i32 : i32
    %1 = arith.extui %0 : i1 to i32
    %c0_i32_0 = arith.constant 0 : i32
    %2 = arith.cmpi ne, %1, %c0_i32_0 : i32
    scf.if %2 {
      %cst_106 = arith.constant 0.000000e+00 : f32
      %506 = vector.broadcast %cst_106 : f32 to vector<8x128xf32>
      %c0_107 = arith.constant 0 : index
      %c0_108 = arith.constant 0 : index
      %507 = vector.load %arg7[%c0_107, %c0_108] : memref<8x128xf32, #tpu.memory_space<vmem>>, vector<8x128xf32>
      tpu.vector_store %arg7[%c0_107, %c0_108], %506 {strides = array<i32>} : memref<8x128xf32, #tpu.memory_space<vmem>>, vector<8x128xf32>,
      %cst_109 = arith.constant 0.000000e+00 : f32
      %508 = vector.broadcast %cst_109 : f32 to vector<8x128xf32>
      %c0_110 = arith.constant 0 : index
      %c0_111 = arith.constant 0 : index
      %509 = vector.load %arg8[%c0_110, %c0_111] : memref<8x128xf32, #tpu.memory_space<vmem>>, vector<8x128xf32>
      tpu.vector_store %arg8[%c0_110, %c0_111], %508 {strides = array<i32>} : memref<8x128xf32, #tpu.memory_space<vmem>>, vector<8x128xf32>,
      %cst_112 = arith.constant 0.000000e+00 : f32
      %510 = vector.broadcast %cst_112 : f32 to vector<8x128xf32>
      %c0_113 = arith.constant 0 : index
      %c0_114 = arith.constant 0 : index
      %511 = vector.load %arg9[%c0_113, %c0_114] : memref<8x128xf32, #tpu.memory_space<vmem>>, vector<8x128xf32>
      tpu.vector_store %arg9[%c0_113, %c0_114], %510 {strides = array<i32>} : memref<8x128xf32, #tpu.memory_space<vmem>>, vector<8x128xf32>,
      %cst_115 = arith.constant 0.000000e+00 : f32
      %512 = vector.broadcast %cst_115 : f32 to vector<8x128xf32>
      %c0_116 = arith.constant 0 : index
      %c0_117 = arith.constant 0 : index
      %513 = vector.load %arg10[%c0_116, %c0_117] : memref<8x128xf32, #tpu.memory_space<vmem>>, vector<8x128xf32>
      tpu.vector_store %arg10[%c0_116, %c0_117], %512 {strides = array<i32>} : memref<8x128xf32, #tpu.memory_space<vmem>>, vector<8x128xf32>,
    } else {
    }
    %c0 = arith.constant 0 : index
    %c0_1 = arith.constant 0 : index
    %3 = vector.load %arg2[%c0, %c0_1] : memref<256x512xf32, #tpu.memory_space<vmem>>, vector<256x512xf32>
    %c0_2 = arith.constant 0 : index
    %c0_3 = arith.constant 0 : index
    %4 = vector.load %arg3[%c0_2, %c0_3] : memref<1x512xf32, #tpu.memory_space<vmem>>, vector<1x512xf32>
    %c0_4 = arith.constant 0 : index
    %c0_5 = arith.constant 0 : index
    %5 = vector.load %arg4[%c0_4, %c0_5] : memref<256x512xf32, #tpu.memory_space<vmem>>, vector<256x512xf32>
    %c0_6 = arith.constant 0 : index
    %c0_7 = arith.constant 0 : index
    %6 = vector.load %arg5[%c0_6, %c0_7] : memref<1x512xf32, #tpu.memory_space<vmem>>, vector<1x512xf32>
    %c0_8 = arith.constant 0 : index
    %c0_9 = arith.constant 0 : index
    %7 = vector.load %arg7[%c0_8, %c0_9] : memref<8x128xf32, #tpu.memory_space<vmem>>, vector<8x128xf32>
    %c0_10 = arith.constant 0 : index
    %c0_11 = arith.constant 0 : index
    %8 = vector.load %arg8[%c0_10, %c0_11] : memref<8x128xf32, #tpu.memory_space<vmem>>, vector<8x128xf32>
    %c0_12 = arith.constant 0 : index
    %c0_13 = arith.constant 0 : index
    %9 = vector.load %arg9[%c0_12, %c0_13] : memref<8x128xf32, #tpu.memory_space<vmem>>, vector<8x128xf32>
    %c0_14 = arith.constant 0 : index
    %c0_15 = arith.constant 0 : index
    %10 = vector.load %arg10[%c0_14, %c0_15] : memref<8x128xf32, #tpu.memory_space<vmem>>, vector<8x128xf32>
    %c0_i32_16 = arith.constant 0 : i32
    %11 = arith.index_cast %c0_i32_16 : i32 to index
    %c0_17 = arith.constant 0 : index
    %c0_18 = arith.constant 0 : index
    %12 = vector.load %arg1[%11, %c0_17, %c0_18] : memref<8x8x128xf32, #tpu.memory_space<vmem>>, vector<1x8x128xf32>
    %13 = vector.shape_cast %12 : vector<1x8x128xf32> to vector<8x128xf32>
    %14 = tpu.concatenate %13, %7 in 1 : vector<8x128xf32>, vector<8x128xf32> -> vector<8x256xf32>
    %cst = arith.constant dense<0.000000e+00> : vector<8x512xf32>
    %15 = tpu.matmul %14, %3, %cst {dimension_numbers = #tpu.dot_dimension_numbers<[1], [0], [0], [1], [0, 0, 1, 1], [], []>} : vector<8x256xf32>, vector<256x512xf32>, vector<8x512xf32> -> vector<8x512xf32>
    %16 = vector.broadcast %4 : vector<1x512xf32> to vector<8x512xf32>
    %17 = arith.addf %15, %16 : vector<8x512xf32>
    %18 = vector.extract_strided_slice %17 {offsets = [0, 0], sizes = [8, 128], strides = [1, 1]} : vector<8x512xf32> to vector<8x128xf32>
    %19 = arith.negf %18 : vector<8x128xf32>
    %20 = math.exp %19 : vector<8x128xf32>
    %cst_19 = arith.constant 1.000000e+00 : f32
    %21 = vector.broadcast %cst_19 : f32 to vector<8x128xf32>
    %22 = arith.addf %21, %20 : vector<8x128xf32>
    %23 = arith.divf %21, %22 : vector<8x128xf32>
    %24 = vector.extract_strided_slice %17 {offsets = [0, 128], sizes = [8, 128], strides = [1, 1]} : vector<8x512xf32> to vector<8x128xf32>
    %25 = arith.negf %24 : vector<8x128xf32>
    %26 = math.exp %25 : vector<8x128xf32>
    %cst_20 = arith.constant 1.000000e+00 : f32
    %27 = vector.broadcast %cst_20 : f32 to vector<8x128xf32>
    %28 = arith.addf %27, %26 : vector<8x128xf32>
    %29 = arith.divf %27, %28 : vector<8x128xf32>
    %30 = vector.extract_strided_slice %17 {offsets = [0, 256], sizes = [8, 128], strides = [1, 1]} : vector<8x512xf32> to vector<8x128xf32>
    %31 = math.tanh %30 : vector<8x128xf32>
    %32 = vector.extract_strided_slice %17 {offsets = [0, 384], sizes = [8, 128], strides = [1, 1]} : vector<8x512xf32> to vector<8x128xf32>
    %33 = arith.negf %32 : vector<8x128xf32>
    %34 = math.exp %33 : vector<8x128xf32>
    %cst_21 = arith.constant 1.000000e+00 : f32
    %35 = vector.broadcast %cst_21 : f32 to vector<8x128xf32>
    %36 = arith.addf %35, %34 : vector<8x128xf32>
    %37 = arith.divf %35, %36 : vector<8x128xf32>
    %38 = arith.mulf %29, %8 : vector<8x128xf32>
    %39 = arith.mulf %23, %31 : vector<8x128xf32>
    %40 = arith.addf %38, %39 : vector<8x128xf32>
    %41 = math.tanh %40 : vector<8x128xf32>
    %42 = arith.mulf %37, %41 : vector<8x128xf32>
    %43 = tpu.concatenate %42, %9 in 1 : vector<8x128xf32>, vector<8x128xf32> -> vector<8x256xf32>
    %cst_22 = arith.constant dense<0.000000e+00> : vector<8x512xf32>
    %44 = tpu.matmul %43, %5, %cst_22 {dimension_numbers = #tpu.dot_dimension_numbers<[1], [0], [0], [1], [0, 0, 1, 1], [], []>} : vector<8x256xf32>, vector<256x512xf32>, vector<8x512xf32> -> vector<8x512xf32>
    %45 = vector.broadcast %6 : vector<1x512xf32> to vector<8x512xf32>
    %46 = arith.addf %44, %45 : vector<8x512xf32>
    %47 = vector.extract_strided_slice %46 {offsets = [0, 0], sizes = [8, 128], strides = [1, 1]} : vector<8x512xf32> to vector<8x128xf32>
    %48 = arith.negf %47 : vector<8x128xf32>
    %49 = math.exp %48 : vector<8x128xf32>
    %cst_23 = arith.constant 1.000000e+00 : f32
    %50 = vector.broadcast %cst_23 : f32 to vector<8x128xf32>
    %51 = arith.addf %50, %49 : vector<8x128xf32>
    %52 = arith.divf %50, %51 : vector<8x128xf32>
    %53 = vector.extract_strided_slice %46 {offsets = [0, 128], sizes = [8, 128], strides = [1, 1]} : vector<8x512xf32> to vector<8x128xf32>
    %54 = arith.negf %53 : vector<8x128xf32>
    %55 = math.exp %54 : vector<8x128xf32>
    %cst_24 = arith.constant 1.000000e+00 : f32
    %56 = vector.broadcast %cst_24 : f32 to vector<8x128xf32>
    %57 = arith.addf %56, %55 : vector<8x128xf32>
    %58 = arith.divf %56, %57 : vector<8x128xf32>
    %59 = vector.extract_strided_slice %46 {offsets = [0, 256], sizes = [8, 128], strides = [1, 1]} : vector<8x512xf32> to vector<8x128xf32>
    %60 = math.tanh %59 : vector<8x128xf32>
    %61 = vector.extract_strided_slice %46 {offsets = [0, 384], sizes = [8, 128], strides = [1, 1]} : vector<8x512xf32> to vector<8x128xf32>
    %62 = arith.negf %61 : vector<8x128xf32>
    %63 = math.exp %62 : vector<8x128xf32>
    %cst_25 = arith.constant 1.000000e+00 : f32
    %64 = vector.broadcast %cst_25 : f32 to vector<8x128xf32>
    %65 = arith.addf %64, %63 : vector<8x128xf32>
    %66 = arith.divf %64, %65 : vector<8x128xf32>
    %67 = arith.mulf %58, %10 : vector<8x128xf32>
    %68 = arith.mulf %52, %60 : vector<8x128xf32>
    %69 = arith.addf %67, %68 : vector<8x128xf32>
    %70 = math.tanh %69 : vector<8x128xf32>
    %71 = arith.mulf %66, %70 : vector<8x128xf32>
    %c1_i32 = arith.constant 1 : i32
    %72 = arith.index_cast %c1_i32 : i32 to index
    %c0_26 = arith.constant 0 : index
    %c0_27 = arith.constant 0 : index
    %73 = vector.load %arg1[%72, %c0_26, %c0_27] : memref<8x8x128xf32, #tpu.memory_space<vmem>>, vector<1x8x128xf32>
    %74 = vector.shape_cast %73 : vector<1x8x128xf32> to vector<8x128xf32>
    %75 = tpu.concatenate %74, %42 in 1 : vector<8x128xf32>, vector<8x128xf32> -> vector<8x256xf32>
    %cst_28 = arith.constant dense<0.000000e+00> : vector<8x512xf32>
    %76 = tpu.matmul %75, %3, %cst_28 {dimension_numbers = #tpu.dot_dimension_numbers<[1], [0], [0], [1], [0, 0, 1, 1], [], []>} : vector<8x256xf32>, vector<256x512xf32>, vector<8x512xf32> -> vector<8x512xf32>
    %77 = vector.broadcast %4 : vector<1x512xf32> to vector<8x512xf32>
    %78 = arith.addf %76, %77 : vector<8x512xf32>
    %79 = vector.extract_strided_slice %78 {offsets = [0, 0], sizes = [8, 128], strides = [1, 1]} : vector<8x512xf32> to vector<8x128xf32>
    %80 = arith.negf %79 : vector<8x128xf32>
    %81 = math.exp %80 : vector<8x128xf32>
    %cst_29 = arith.constant 1.000000e+00 : f32
    %82 = vector.broadcast %cst_29 : f32 to vector<8x128xf32>
    %83 = arith.addf %82, %81 : vector<8x128xf32>
    %84 = arith.divf %82, %83 : vector<8x128xf32>
    %85 = vector.extract_strided_slice %78 {offsets = [0, 128], sizes = [8, 128], strides = [1, 1]} : vector<8x512xf32> to vector<8x128xf32>
    %86 = arith.negf %85 : vector<8x128xf32>
    %87 = math.exp %86 : vector<8x128xf32>
    %cst_30 = arith.constant 1.000000e+00 : f32
    %88 = vector.broadcast %cst_30 : f32 to vector<8x128xf32>
    %89 = arith.addf %88, %87 : vector<8x128xf32>
    %90 = arith.divf %88, %89 : vector<8x128xf32>
    %91 = vector.extract_strided_slice %78 {offsets = [0, 256], sizes = [8, 128], strides = [1, 1]} : vector<8x512xf32> to vector<8x128xf32>
    %92 = math.tanh %91 : vector<8x128xf32>
    %93 = vector.extract_strided_slice %78 {offsets = [0, 384], sizes = [8, 128], strides = [1, 1]} : vector<8x512xf32> to vector<8x128xf32>
    %94 = arith.negf %93 : vector<8x128xf32>
    %95 = math.exp %94 : vector<8x128xf32>
    %cst_31 = arith.constant 1.000000e+00 : f32
    %96 = vector.broadcast %cst_31 : f32 to vector<8x128xf32>
    %97 = arith.addf %96, %95 : vector<8x128xf32>
    %98 = arith.divf %96, %97 : vector<8x128xf32>
    %99 = arith.mulf %90, %40 : vector<8x128xf32>
    %100 = arith.mulf %84, %92 : vector<8x128xf32>
    %101 = arith.addf %99, %100 : vector<8x128xf32>
    %102 = math.tanh %101 : vector<8x128xf32>
    %103 = arith.mulf %98, %102 : vector<8x128xf32>
    %104 = tpu.concatenate %103, %71 in 1 : vector<8x128xf32>, vector<8x128xf32> -> vector<8x256xf32>
    %cst_32 = arith.constant dense<0.000000e+00> : vector<8x512xf32>
    %105 = tpu.matmul %104, %5, %cst_32 {dimension_numbers = #tpu.dot_dimension_numbers<[1], [0], [0], [1], [0, 0, 1, 1], [], []>} : vector<8x256xf32>, vector<256x512xf32>, vector<8x512xf32> -> vector<8x512xf32>
    %106 = vector.broadcast %6 : vector<1x512xf32> to vector<8x512xf32>
    %107 = arith.addf %105, %106 : vector<8x512xf32>
    %108 = vector.extract_strided_slice %107 {offsets = [0, 0], sizes = [8, 128], strides = [1, 1]} : vector<8x512xf32> to vector<8x128xf32>
    %109 = arith.negf %108 : vector<8x128xf32>
    %110 = math.exp %109 : vector<8x128xf32>
    %cst_33 = arith.constant 1.000000e+00 : f32
    %111 = vector.broadcast %cst_33 : f32 to vector<8x128xf32>
    %112 = arith.addf %111, %110 : vector<8x128xf32>
    %113 = arith.divf %111, %112 : vector<8x128xf32>
    %114 = vector.extract_strided_slice %107 {offsets = [0, 128], sizes = [8, 128], strides = [1, 1]} : vector<8x512xf32> to vector<8x128xf32>
    %115 = arith.negf %114 : vector<8x128xf32>
    %116 = math.exp %115 : vector<8x128xf32>
    %cst_34 = arith.constant 1.000000e+00 : f32
    %117 = vector.broadcast %cst_34 : f32 to vector<8x128xf32>
    %118 = arith.addf %117, %116 : vector<8x128xf32>
    %119 = arith.divf %117, %118 : vector<8x128xf32>
    %120 = vector.extract_strided_slice %107 {offsets = [0, 256], sizes = [8, 128], strides = [1, 1]} : vector<8x512xf32> to vector<8x128xf32>
    %121 = math.tanh %120 : vector<8x128xf32>
    %122 = vector.extract_strided_slice %107 {offsets = [0, 384], sizes = [8, 128], strides = [1, 1]} : vector<8x512xf32> to vector<8x128xf32>
    %123 = arith.negf %122 : vector<8x128xf32>
    %124 = math.exp %123 : vector<8x128xf32>
    %cst_35 = arith.constant 1.000000e+00 : f32
    %125 = vector.broadcast %cst_35 : f32 to vector<8x128xf32>
    %126 = arith.addf %125, %124 : vector<8x128xf32>
    %127 = arith.divf %125, %126 : vector<8x128xf32>
    %128 = arith.mulf %119, %69 : vector<8x128xf32>
    %129 = arith.mulf %113, %121 : vector<8x128xf32>
    %130 = arith.addf %128, %129 : vector<8x128xf32>
    %131 = math.tanh %130 : vector<8x128xf32>
    %132 = arith.mulf %127, %131 : vector<8x128xf32>
    %c2_i32 = arith.constant 2 : i32
    %133 = arith.index_cast %c2_i32 : i32 to index
    %c0_36 = arith.constant 0 : index
    %c0_37 = arith.constant 0 : index
    %134 = vector.load %arg1[%133, %c0_36, %c0_37] : memref<8x8x128xf32, #tpu.memory_space<vmem>>, vector<1x8x128xf32>
    %135 = vector.shape_cast %134 : vector<1x8x128xf32> to vector<8x128xf32>
    %136 = tpu.concatenate %135, %103 in 1 : vector<8x128xf32>, vector<8x128xf32> -> vector<8x256xf32>
    %cst_38 = arith.constant dense<0.000000e+00> : vector<8x512xf32>
    %137 = tpu.matmul %136, %3, %cst_38 {dimension_numbers = #tpu.dot_dimension_numbers<[1], [0], [0], [1], [0, 0, 1, 1], [], []>} : vector<8x256xf32>, vector<256x512xf32>, vector<8x512xf32> -> vector<8x512xf32>
    %138 = vector.broadcast %4 : vector<1x512xf32> to vector<8x512xf32>
    %139 = arith.addf %137, %138 : vector<8x512xf32>
    %140 = vector.extract_strided_slice %139 {offsets = [0, 0], sizes = [8, 128], strides = [1, 1]} : vector<8x512xf32> to vector<8x128xf32>
    %141 = arith.negf %140 : vector<8x128xf32>
    %142 = math.exp %141 : vector<8x128xf32>
    %cst_39 = arith.constant 1.000000e+00 : f32
    %143 = vector.broadcast %cst_39 : f32 to vector<8x128xf32>
    %144 = arith.addf %143, %142 : vector<8x128xf32>
    %145 = arith.divf %143, %144 : vector<8x128xf32>
    %146 = vector.extract_strided_slice %139 {offsets = [0, 128], sizes = [8, 128], strides = [1, 1]} : vector<8x512xf32> to vector<8x128xf32>
    %147 = arith.negf %146 : vector<8x128xf32>
    %148 = math.exp %147 : vector<8x128xf32>
    %cst_40 = arith.constant 1.000000e+00 : f32
    %149 = vector.broadcast %cst_40 : f32 to vector<8x128xf32>
    %150 = arith.addf %149, %148 : vector<8x128xf32>
    %151 = arith.divf %149, %150 : vector<8x128xf32>
    %152 = vector.extract_strided_slice %139 {offsets = [0, 256], sizes = [8, 128], strides = [1, 1]} : vector<8x512xf32> to vector<8x128xf32>
    %153 = math.tanh %152 : vector<8x128xf32>
    %154 = vector.extract_strided_slice %139 {offsets = [0, 384], sizes = [8, 128], strides = [1, 1]} : vector<8x512xf32> to vector<8x128xf32>
    %155 = arith.negf %154 : vector<8x128xf32>
    %156 = math.exp %155 : vector<8x128xf32>
    %cst_41 = arith.constant 1.000000e+00 : f32
    %157 = vector.broadcast %cst_41 : f32 to vector<8x128xf32>
    %158 = arith.addf %157, %156 : vector<8x128xf32>
    %159 = arith.divf %157, %158 : vector<8x128xf32>
    %160 = arith.mulf %151, %101 : vector<8x128xf32>
    %161 = arith.mulf %145, %153 : vector<8x128xf32>
    %162 = arith.addf %160, %161 : vector<8x128xf32>
    %163 = math.tanh %162 : vector<8x128xf32>
    %164 = arith.mulf %159, %163 : vector<8x128xf32>
    %165 = tpu.concatenate %164, %132 in 1 : vector<8x128xf32>, vector<8x128xf32> -> vector<8x256xf32>
    %cst_42 = arith.constant dense<0.000000e+00> : vector<8x512xf32>
    %166 = tpu.matmul %165, %5, %cst_42 {dimension_numbers = #tpu.dot_dimension_numbers<[1], [0], [0], [1], [0, 0, 1, 1], [], []>} : vector<8x256xf32>, vector<256x512xf32>, vector<8x512xf32> -> vector<8x512xf32>
    %167 = vector.broadcast %6 : vector<1x512xf32> to vector<8x512xf32>
    %168 = arith.addf %166, %167 : vector<8x512xf32>
    %169 = vector.extract_strided_slice %168 {offsets = [0, 0], sizes = [8, 128], strides = [1, 1]} : vector<8x512xf32> to vector<8x128xf32>
    %170 = arith.negf %169 : vector<8x128xf32>
    %171 = math.exp %170 : vector<8x128xf32>
    %cst_43 = arith.constant 1.000000e+00 : f32
    %172 = vector.broadcast %cst_43 : f32 to vector<8x128xf32>
    %173 = arith.addf %172, %171 : vector<8x128xf32>
    %174 = arith.divf %172, %173 : vector<8x128xf32>
    %175 = vector.extract_strided_slice %168 {offsets = [0, 128], sizes = [8, 128], strides = [1, 1]} : vector<8x512xf32> to vector<8x128xf32>
    %176 = arith.negf %175 : vector<8x128xf32>
    %177 = math.exp %176 : vector<8x128xf32>
    %cst_44 = arith.constant 1.000000e+00 : f32
    %178 = vector.broadcast %cst_44 : f32 to vector<8x128xf32>
    %179 = arith.addf %178, %177 : vector<8x128xf32>
    %180 = arith.divf %178, %179 : vector<8x128xf32>
    %181 = vector.extract_strided_slice %168 {offsets = [0, 256], sizes = [8, 128], strides = [1, 1]} : vector<8x512xf32> to vector<8x128xf32>
    %182 = math.tanh %181 : vector<8x128xf32>
    %183 = vector.extract_strided_slice %168 {offsets = [0, 384], sizes = [8, 128], strides = [1, 1]} : vector<8x512xf32> to vector<8x128xf32>
    %184 = arith.negf %183 : vector<8x128xf32>
    %185 = math.exp %184 : vector<8x128xf32>
    %cst_45 = arith.constant 1.000000e+00 : f32
    %186 = vector.broadcast %cst_45 : f32 to vector<8x128xf32>
    %187 = arith.addf %186, %185 : vector<8x128xf32>
    %188 = arith.divf %186, %187 : vector<8x128xf32>
    %189 = arith.mulf %180, %130 : vector<8x128xf32>
    %190 = arith.mulf %174, %182 : vector<8x128xf32>
    %191 = arith.addf %189, %190 : vector<8x128xf32>
    %192 = math.tanh %191 : vector<8x128xf32>
    %193 = arith.mulf %188, %192 : vector<8x128xf32>
    %c3_i32 = arith.constant 3 : i32
    %194 = arith.index_cast %c3_i32 : i32 to index
    %c0_46 = arith.constant 0 : index
    %c0_47 = arith.constant 0 : index
    %195 = vector.load %arg1[%194, %c0_46, %c0_47] : memref<8x8x128xf32, #tpu.memory_space<vmem>>, vector<1x8x128xf32>
    %196 = vector.shape_cast %195 : vector<1x8x128xf32> to vector<8x128xf32>
    %197 = tpu.concatenate %196, %164 in 1 : vector<8x128xf32>, vector<8x128xf32> -> vector<8x256xf32>
    %cst_48 = arith.constant dense<0.000000e+00> : vector<8x512xf32>
    %198 = tpu.matmul %197, %3, %cst_48 {dimension_numbers = #tpu.dot_dimension_numbers<[1], [0], [0], [1], [0, 0, 1, 1], [], []>} : vector<8x256xf32>, vector<256x512xf32>, vector<8x512xf32> -> vector<8x512xf32>
    %199 = vector.broadcast %4 : vector<1x512xf32> to vector<8x512xf32>
    %200 = arith.addf %198, %199 : vector<8x512xf32>
    %201 = vector.extract_strided_slice %200 {offsets = [0, 0], sizes = [8, 128], strides = [1, 1]} : vector<8x512xf32> to vector<8x128xf32>
    %202 = arith.negf %201 : vector<8x128xf32>
    %203 = math.exp %202 : vector<8x128xf32>
    %cst_49 = arith.constant 1.000000e+00 : f32
    %204 = vector.broadcast %cst_49 : f32 to vector<8x128xf32>
    %205 = arith.addf %204, %203 : vector<8x128xf32>
    %206 = arith.divf %204, %205 : vector<8x128xf32>
    %207 = vector.extract_strided_slice %200 {offsets = [0, 128], sizes = [8, 128], strides = [1, 1]} : vector<8x512xf32> to vector<8x128xf32>
    %208 = arith.negf %207 : vector<8x128xf32>
    %209 = math.exp %208 : vector<8x128xf32>
    %cst_50 = arith.constant 1.000000e+00 : f32
    %210 = vector.broadcast %cst_50 : f32 to vector<8x128xf32>
    %211 = arith.addf %210, %209 : vector<8x128xf32>
    %212 = arith.divf %210, %211 : vector<8x128xf32>
    %213 = vector.extract_strided_slice %200 {offsets = [0, 256], sizes = [8, 128], strides = [1, 1]} : vector<8x512xf32> to vector<8x128xf32>
    %214 = math.tanh %213 : vector<8x128xf32>
    %215 = vector.extract_strided_slice %200 {offsets = [0, 384], sizes = [8, 128], strides = [1, 1]} : vector<8x512xf32> to vector<8x128xf32>
    %216 = arith.negf %215 : vector<8x128xf32>
    %217 = math.exp %216 : vector<8x128xf32>
    %cst_51 = arith.constant 1.000000e+00 : f32
    %218 = vector.broadcast %cst_51 : f32 to vector<8x128xf32>
    %219 = arith.addf %218, %217 : vector<8x128xf32>
    %220 = arith.divf %218, %219 : vector<8x128xf32>
    %221 = arith.mulf %212, %162 : vector<8x128xf32>
    %222 = arith.mulf %206, %214 : vector<8x128xf32>
    %223 = arith.addf %221, %222 : vector<8x128xf32>
    %224 = math.tanh %223 : vector<8x128xf32>
    %225 = arith.mulf %220, %224 : vector<8x128xf32>
    %226 = tpu.concatenate %225, %193 in 1 : vector<8x128xf32>, vector<8x128xf32> -> vector<8x256xf32>
    %cst_52 = arith.constant dense<0.000000e+00> : vector<8x512xf32>
    %227 = tpu.matmul %226, %5, %cst_52 {dimension_numbers = #tpu.dot_dimension_numbers<[1], [0], [0], [1], [0, 0, 1, 1], [], []>} : vector<8x256xf32>, vector<256x512xf32>, vector<8x512xf32> -> vector<8x512xf32>
    %228 = vector.broadcast %6 : vector<1x512xf32> to vector<8x512xf32>
    %229 = arith.addf %227, %228 : vector<8x512xf32>
    %230 = vector.extract_strided_slice %229 {offsets = [0, 0], sizes = [8, 128], strides = [1, 1]} : vector<8x512xf32> to vector<8x128xf32>
    %231 = arith.negf %230 : vector<8x128xf32>
    %232 = math.exp %231 : vector<8x128xf32>
    %cst_53 = arith.constant 1.000000e+00 : f32
    %233 = vector.broadcast %cst_53 : f32 to vector<8x128xf32>
    %234 = arith.addf %233, %232 : vector<8x128xf32>
    %235 = arith.divf %233, %234 : vector<8x128xf32>
    %236 = vector.extract_strided_slice %229 {offsets = [0, 128], sizes = [8, 128], strides = [1, 1]} : vector<8x512xf32> to vector<8x128xf32>
    %237 = arith.negf %236 : vector<8x128xf32>
    %238 = math.exp %237 : vector<8x128xf32>
    %cst_54 = arith.constant 1.000000e+00 : f32
    %239 = vector.broadcast %cst_54 : f32 to vector<8x128xf32>
    %240 = arith.addf %239, %238 : vector<8x128xf32>
    %241 = arith.divf %239, %240 : vector<8x128xf32>
    %242 = vector.extract_strided_slice %229 {offsets = [0, 256], sizes = [8, 128], strides = [1, 1]} : vector<8x512xf32> to vector<8x128xf32>
    %243 = math.tanh %242 : vector<8x128xf32>
    %244 = vector.extract_strided_slice %229 {offsets = [0, 384], sizes = [8, 128], strides = [1, 1]} : vector<8x512xf32> to vector<8x128xf32>
    %245 = arith.negf %244 : vector<8x128xf32>
    %246 = math.exp %245 : vector<8x128xf32>
    %cst_55 = arith.constant 1.000000e+00 : f32
    %247 = vector.broadcast %cst_55 : f32 to vector<8x128xf32>
    %248 = arith.addf %247, %246 : vector<8x128xf32>
    %249 = arith.divf %247, %248 : vector<8x128xf32>
    %250 = arith.mulf %241, %191 : vector<8x128xf32>
    %251 = arith.mulf %235, %243 : vector<8x128xf32>
    %252 = arith.addf %250, %251 : vector<8x128xf32>
    %253 = math.tanh %252 : vector<8x128xf32>
    %254 = arith.mulf %249, %253 : vector<8x128xf32>
    %c4_i32 = arith.constant 4 : i32
    %255 = arith.index_cast %c4_i32 : i32 to index
    %c0_56 = arith.constant 0 : index
    %c0_57 = arith.constant 0 : index
    %256 = vector.load %arg1[%255, %c0_56, %c0_57] : memref<8x8x128xf32, #tpu.memory_space<vmem>>, vector<1x8x128xf32>
    %257 = vector.shape_cast %256 : vector<1x8x128xf32> to vector<8x128xf32>
    %258 = tpu.concatenate %257, %225 in 1 : vector<8x128xf32>, vector<8x128xf32> -> vector<8x256xf32>
    %cst_58 = arith.constant dense<0.000000e+00> : vector<8x512xf32>
    %259 = tpu.matmul %258, %3, %cst_58 {dimension_numbers = #tpu.dot_dimension_numbers<[1], [0], [0], [1], [0, 0, 1, 1], [], []>} : vector<8x256xf32>, vector<256x512xf32>, vector<8x512xf32> -> vector<8x512xf32>
    %260 = vector.broadcast %4 : vector<1x512xf32> to vector<8x512xf32>
    %261 = arith.addf %259, %260 : vector<8x512xf32>
    %262 = vector.extract_strided_slice %261 {offsets = [0, 0], sizes = [8, 128], strides = [1, 1]} : vector<8x512xf32> to vector<8x128xf32>
    %263 = arith.negf %262 : vector<8x128xf32>
    %264 = math.exp %263 : vector<8x128xf32>
    %cst_59 = arith.constant 1.000000e+00 : f32
    %265 = vector.broadcast %cst_59 : f32 to vector<8x128xf32>
    %266 = arith.addf %265, %264 : vector<8x128xf32>
    %267 = arith.divf %265, %266 : vector<8x128xf32>
    %268 = vector.extract_strided_slice %261 {offsets = [0, 128], sizes = [8, 128], strides = [1, 1]} : vector<8x512xf32> to vector<8x128xf32>
    %269 = arith.negf %268 : vector<8x128xf32>
    %270 = math.exp %269 : vector<8x128xf32>
    %cst_60 = arith.constant 1.000000e+00 : f32
    %271 = vector.broadcast %cst_60 : f32 to vector<8x128xf32>
    %272 = arith.addf %271, %270 : vector<8x128xf32>
    %273 = arith.divf %271, %272 : vector<8x128xf32>
    %274 = vector.extract_strided_slice %261 {offsets = [0, 256], sizes = [8, 128], strides = [1, 1]} : vector<8x512xf32> to vector<8x128xf32>
    %275 = math.tanh %274 : vector<8x128xf32>
    %276 = vector.extract_strided_slice %261 {offsets = [0, 384], sizes = [8, 128], strides = [1, 1]} : vector<8x512xf32> to vector<8x128xf32>
    %277 = arith.negf %276 : vector<8x128xf32>
    %278 = math.exp %277 : vector<8x128xf32>
    %cst_61 = arith.constant 1.000000e+00 : f32
    %279 = vector.broadcast %cst_61 : f32 to vector<8x128xf32>
    %280 = arith.addf %279, %278 : vector<8x128xf32>
    %281 = arith.divf %279, %280 : vector<8x128xf32>
    %282 = arith.mulf %273, %223 : vector<8x128xf32>
    %283 = arith.mulf %267, %275 : vector<8x128xf32>
    %284 = arith.addf %282, %283 : vector<8x128xf32>
    %285 = math.tanh %284 : vector<8x128xf32>
    %286 = arith.mulf %281, %285 : vector<8x128xf32>
    %287 = tpu.concatenate %286, %254 in 1 : vector<8x128xf32>, vector<8x128xf32> -> vector<8x256xf32>
    %cst_62 = arith.constant dense<0.000000e+00> : vector<8x512xf32>
    %288 = tpu.matmul %287, %5, %cst_62 {dimension_numbers = #tpu.dot_dimension_numbers<[1], [0], [0], [1], [0, 0, 1, 1], [], []>} : vector<8x256xf32>, vector<256x512xf32>, vector<8x512xf32> -> vector<8x512xf32>
    %289 = vector.broadcast %6 : vector<1x512xf32> to vector<8x512xf32>
    %290 = arith.addf %288, %289 : vector<8x512xf32>
    %291 = vector.extract_strided_slice %290 {offsets = [0, 0], sizes = [8, 128], strides = [1, 1]} : vector<8x512xf32> to vector<8x128xf32>
    %292 = arith.negf %291 : vector<8x128xf32>
    %293 = math.exp %292 : vector<8x128xf32>
    %cst_63 = arith.constant 1.000000e+00 : f32
    %294 = vector.broadcast %cst_63 : f32 to vector<8x128xf32>
    %295 = arith.addf %294, %293 : vector<8x128xf32>
    %296 = arith.divf %294, %295 : vector<8x128xf32>
    %297 = vector.extract_strided_slice %290 {offsets = [0, 128], sizes = [8, 128], strides = [1, 1]} : vector<8x512xf32> to vector<8x128xf32>
    %298 = arith.negf %297 : vector<8x128xf32>
    %299 = math.exp %298 : vector<8x128xf32>
    %cst_64 = arith.constant 1.000000e+00 : f32
    %300 = vector.broadcast %cst_64 : f32 to vector<8x128xf32>
    %301 = arith.addf %300, %299 : vector<8x128xf32>
    %302 = arith.divf %300, %301 : vector<8x128xf32>
    %303 = vector.extract_strided_slice %290 {offsets = [0, 256], sizes = [8, 128], strides = [1, 1]} : vector<8x512xf32> to vector<8x128xf32>
    %304 = math.tanh %303 : vector<8x128xf32>
    %305 = vector.extract_strided_slice %290 {offsets = [0, 384], sizes = [8, 128], strides = [1, 1]} : vector<8x512xf32> to vector<8x128xf32>
    %306 = arith.negf %305 : vector<8x128xf32>
    %307 = math.exp %306 : vector<8x128xf32>
    %cst_65 = arith.constant 1.000000e+00 : f32
    %308 = vector.broadcast %cst_65 : f32 to vector<8x128xf32>
    %309 = arith.addf %308, %307 : vector<8x128xf32>
    %310 = arith.divf %308, %309 : vector<8x128xf32>
    %311 = arith.mulf %302, %252 : vector<8x128xf32>
    %312 = arith.mulf %296, %304 : vector<8x128xf32>
    %313 = arith.addf %311, %312 : vector<8x128xf32>
    %314 = math.tanh %313 : vector<8x128xf32>
    %315 = arith.mulf %310, %314 : vector<8x128xf32>
    %c5_i32 = arith.constant 5 : i32
    %316 = arith.index_cast %c5_i32 : i32 to index
    %c0_66 = arith.constant 0 : index
    %c0_67 = arith.constant 0 : index
    %317 = vector.load %arg1[%316, %c0_66, %c0_67] : memref<8x8x128xf32, #tpu.memory_space<vmem>>, vector<1x8x128xf32>
    %318 = vector.shape_cast %317 : vector<1x8x128xf32> to vector<8x128xf32>
    %319 = tpu.concatenate %318, %286 in 1 : vector<8x128xf32>, vector<8x128xf32> -> vector<8x256xf32>
    %cst_68 = arith.constant dense<0.000000e+00> : vector<8x512xf32>
    %320 = tpu.matmul %319, %3, %cst_68 {dimension_numbers = #tpu.dot_dimension_numbers<[1], [0], [0], [1], [0, 0, 1, 1], [], []>} : vector<8x256xf32>, vector<256x512xf32>, vector<8x512xf32> -> vector<8x512xf32>
    %321 = vector.broadcast %4 : vector<1x512xf32> to vector<8x512xf32>
    %322 = arith.addf %320, %321 : vector<8x512xf32>
    %323 = vector.extract_strided_slice %322 {offsets = [0, 0], sizes = [8, 128], strides = [1, 1]} : vector<8x512xf32> to vector<8x128xf32>
    %324 = arith.negf %323 : vector<8x128xf32>
    %325 = math.exp %324 : vector<8x128xf32>
    %cst_69 = arith.constant 1.000000e+00 : f32
    %326 = vector.broadcast %cst_69 : f32 to vector<8x128xf32>
    %327 = arith.addf %326, %325 : vector<8x128xf32>
    %328 = arith.divf %326, %327 : vector<8x128xf32>
    %329 = vector.extract_strided_slice %322 {offsets = [0, 128], sizes = [8, 128], strides = [1, 1]} : vector<8x512xf32> to vector<8x128xf32>
    %330 = arith.negf %329 : vector<8x128xf32>
    %331 = math.exp %330 : vector<8x128xf32>
    %cst_70 = arith.constant 1.000000e+00 : f32
    %332 = vector.broadcast %cst_70 : f32 to vector<8x128xf32>
    %333 = arith.addf %332, %331 : vector<8x128xf32>
    %334 = arith.divf %332, %333 : vector<8x128xf32>
    %335 = vector.extract_strided_slice %322 {offsets = [0, 256], sizes = [8, 128], strides = [1, 1]} : vector<8x512xf32> to vector<8x128xf32>
    %336 = math.tanh %335 : vector<8x128xf32>
    %337 = vector.extract_strided_slice %322 {offsets = [0, 384], sizes = [8, 128], strides = [1, 1]} : vector<8x512xf32> to vector<8x128xf32>
    %338 = arith.negf %337 : vector<8x128xf32>
    %339 = math.exp %338 : vector<8x128xf32>
    %cst_71 = arith.constant 1.000000e+00 : f32
    %340 = vector.broadcast %cst_71 : f32 to vector<8x128xf32>
    %341 = arith.addf %340, %339 : vector<8x128xf32>
    %342 = arith.divf %340, %341 : vector<8x128xf32>
    %343 = arith.mulf %334, %284 : vector<8x128xf32>
    %344 = arith.mulf %328, %336 : vector<8x128xf32>
    %345 = arith.addf %343, %344 : vector<8x128xf32>
    %346 = math.tanh %345 : vector<8x128xf32>
    %347 = arith.mulf %342, %346 : vector<8x128xf32>
    %348 = tpu.concatenate %347, %315 in 1 : vector<8x128xf32>, vector<8x128xf32> -> vector<8x256xf32>
    %cst_72 = arith.constant dense<0.000000e+00> : vector<8x512xf32>
    %349 = tpu.matmul %348, %5, %cst_72 {dimension_numbers = #tpu.dot_dimension_numbers<[1], [0], [0], [1], [0, 0, 1, 1], [], []>} : vector<8x256xf32>, vector<256x512xf32>, vector<8x512xf32> -> vector<8x512xf32>
    %350 = vector.broadcast %6 : vector<1x512xf32> to vector<8x512xf32>
    %351 = arith.addf %349, %350 : vector<8x512xf32>
    %352 = vector.extract_strided_slice %351 {offsets = [0, 0], sizes = [8, 128], strides = [1, 1]} : vector<8x512xf32> to vector<8x128xf32>
    %353 = arith.negf %352 : vector<8x128xf32>
    %354 = math.exp %353 : vector<8x128xf32>
    %cst_73 = arith.constant 1.000000e+00 : f32
    %355 = vector.broadcast %cst_73 : f32 to vector<8x128xf32>
    %356 = arith.addf %355, %354 : vector<8x128xf32>
    %357 = arith.divf %355, %356 : vector<8x128xf32>
    %358 = vector.extract_strided_slice %351 {offsets = [0, 128], sizes = [8, 128], strides = [1, 1]} : vector<8x512xf32> to vector<8x128xf32>
    %359 = arith.negf %358 : vector<8x128xf32>
    %360 = math.exp %359 : vector<8x128xf32>
    %cst_74 = arith.constant 1.000000e+00 : f32
    %361 = vector.broadcast %cst_74 : f32 to vector<8x128xf32>
    %362 = arith.addf %361, %360 : vector<8x128xf32>
    %363 = arith.divf %361, %362 : vector<8x128xf32>
    %364 = vector.extract_strided_slice %351 {offsets = [0, 256], sizes = [8, 128], strides = [1, 1]} : vector<8x512xf32> to vector<8x128xf32>
    %365 = math.tanh %364 : vector<8x128xf32>
    %366 = vector.extract_strided_slice %351 {offsets = [0, 384], sizes = [8, 128], strides = [1, 1]} : vector<8x512xf32> to vector<8x128xf32>
    %367 = arith.negf %366 : vector<8x128xf32>
    %368 = math.exp %367 : vector<8x128xf32>
    %cst_75 = arith.constant 1.000000e+00 : f32
    %369 = vector.broadcast %cst_75 : f32 to vector<8x128xf32>
    %370 = arith.addf %369, %368 : vector<8x128xf32>
    %371 = arith.divf %369, %370 : vector<8x128xf32>
    %372 = arith.mulf %363, %313 : vector<8x128xf32>
    %373 = arith.mulf %357, %365 : vector<8x128xf32>
    %374 = arith.addf %372, %373 : vector<8x128xf32>
    %375 = math.tanh %374 : vector<8x128xf32>
    %376 = arith.mulf %371, %375 : vector<8x128xf32>
    %c6_i32 = arith.constant 6 : i32
    %377 = arith.index_cast %c6_i32 : i32 to index
    %c0_76 = arith.constant 0 : index
    %c0_77 = arith.constant 0 : index
    %378 = vector.load %arg1[%377, %c0_76, %c0_77] : memref<8x8x128xf32, #tpu.memory_space<vmem>>, vector<1x8x128xf32>
    %379 = vector.shape_cast %378 : vector<1x8x128xf32> to vector<8x128xf32>
    %380 = tpu.concatenate %379, %347 in 1 : vector<8x128xf32>, vector<8x128xf32> -> vector<8x256xf32>
    %cst_78 = arith.constant dense<0.000000e+00> : vector<8x512xf32>
    %381 = tpu.matmul %380, %3, %cst_78 {dimension_numbers = #tpu.dot_dimension_numbers<[1], [0], [0], [1], [0, 0, 1, 1], [], []>} : vector<8x256xf32>, vector<256x512xf32>, vector<8x512xf32> -> vector<8x512xf32>
    %382 = vector.broadcast %4 : vector<1x512xf32> to vector<8x512xf32>
    %383 = arith.addf %381, %382 : vector<8x512xf32>
    %384 = vector.extract_strided_slice %383 {offsets = [0, 0], sizes = [8, 128], strides = [1, 1]} : vector<8x512xf32> to vector<8x128xf32>
    %385 = arith.negf %384 : vector<8x128xf32>
    %386 = math.exp %385 : vector<8x128xf32>
    %cst_79 = arith.constant 1.000000e+00 : f32
    %387 = vector.broadcast %cst_79 : f32 to vector<8x128xf32>
    %388 = arith.addf %387, %386 : vector<8x128xf32>
    %389 = arith.divf %387, %388 : vector<8x128xf32>
    %390 = vector.extract_strided_slice %383 {offsets = [0, 128], sizes = [8, 128], strides = [1, 1]} : vector<8x512xf32> to vector<8x128xf32>
    %391 = arith.negf %390 : vector<8x128xf32>
    %392 = math.exp %391 : vector<8x128xf32>
    %cst_80 = arith.constant 1.000000e+00 : f32
    %393 = vector.broadcast %cst_80 : f32 to vector<8x128xf32>
    %394 = arith.addf %393, %392 : vector<8x128xf32>
    %395 = arith.divf %393, %394 : vector<8x128xf32>
    %396 = vector.extract_strided_slice %383 {offsets = [0, 256], sizes = [8, 128], strides = [1, 1]} : vector<8x512xf32> to vector<8x128xf32>
    %397 = math.tanh %396 : vector<8x128xf32>
    %398 = vector.extract_strided_slice %383 {offsets = [0, 384], sizes = [8, 128], strides = [1, 1]} : vector<8x512xf32> to vector<8x128xf32>
    %399 = arith.negf %398 : vector<8x128xf32>
    %400 = math.exp %399 : vector<8x128xf32>
    %cst_81 = arith.constant 1.000000e+00 : f32
    %401 = vector.broadcast %cst_81 : f32 to vector<8x128xf32>
    %402 = arith.addf %401, %400 : vector<8x128xf32>
    %403 = arith.divf %401, %402 : vector<8x128xf32>
    %404 = arith.mulf %395, %345 : vector<8x128xf32>
    %405 = arith.mulf %389, %397 : vector<8x128xf32>
    %406 = arith.addf %404, %405 : vector<8x128xf32>
    %407 = math.tanh %406 : vector<8x128xf32>
    %408 = arith.mulf %403, %407 : vector<8x128xf32>
    %409 = tpu.concatenate %408, %376 in 1 : vector<8x128xf32>, vector<8x128xf32> -> vector<8x256xf32>
    %cst_82 = arith.constant dense<0.000000e+00> : vector<8x512xf32>
    %410 = tpu.matmul %409, %5, %cst_82 {dimension_numbers = #tpu.dot_dimension_numbers<[1], [0], [0], [1], [0, 0, 1, 1], [], []>} : vector<8x256xf32>, vector<256x512xf32>, vector<8x512xf32> -> vector<8x512xf32>
    %411 = vector.broadcast %6 : vector<1x512xf32> to vector<8x512xf32>
    %412 = arith.addf %410, %411 : vector<8x512xf32>
    %413 = vector.extract_strided_slice %412 {offsets = [0, 0], sizes = [8, 128], strides = [1, 1]} : vector<8x512xf32> to vector<8x128xf32>
    %414 = arith.negf %413 : vector<8x128xf32>
    %415 = math.exp %414 : vector<8x128xf32>
    %cst_83 = arith.constant 1.000000e+00 : f32
    %416 = vector.broadcast %cst_83 : f32 to vector<8x128xf32>
    %417 = arith.addf %416, %415 : vector<8x128xf32>
    %418 = arith.divf %416, %417 : vector<8x128xf32>
    %419 = vector.extract_strided_slice %412 {offsets = [0, 128], sizes = [8, 128], strides = [1, 1]} : vector<8x512xf32> to vector<8x128xf32>
    %420 = arith.negf %419 : vector<8x128xf32>
    %421 = math.exp %420 : vector<8x128xf32>
    %cst_84 = arith.constant 1.000000e+00 : f32
    %422 = vector.broadcast %cst_84 : f32 to vector<8x128xf32>
    %423 = arith.addf %422, %421 : vector<8x128xf32>
    %424 = arith.divf %422, %423 : vector<8x128xf32>
    %425 = vector.extract_strided_slice %412 {offsets = [0, 256], sizes = [8, 128], strides = [1, 1]} : vector<8x512xf32> to vector<8x128xf32>
    %426 = math.tanh %425 : vector<8x128xf32>
    %427 = vector.extract_strided_slice %412 {offsets = [0, 384], sizes = [8, 128], strides = [1, 1]} : vector<8x512xf32> to vector<8x128xf32>
    %428 = arith.negf %427 : vector<8x128xf32>
    %429 = math.exp %428 : vector<8x128xf32>
    %cst_85 = arith.constant 1.000000e+00 : f32
    %430 = vector.broadcast %cst_85 : f32 to vector<8x128xf32>
    %431 = arith.addf %430, %429 : vector<8x128xf32>
    %432 = arith.divf %430, %431 : vector<8x128xf32>
    %433 = arith.mulf %424, %374 : vector<8x128xf32>
    %434 = arith.mulf %418, %426 : vector<8x128xf32>
    %435 = arith.addf %433, %434 : vector<8x128xf32>
    %436 = math.tanh %435 : vector<8x128xf32>
    %437 = arith.mulf %432, %436 : vector<8x128xf32>
    %c7_i32 = arith.constant 7 : i32
    %438 = arith.index_cast %c7_i32 : i32 to index
    %c0_86 = arith.constant 0 : index
    %c0_87 = arith.constant 0 : index
    %439 = vector.load %arg1[%438, %c0_86, %c0_87] : memref<8x8x128xf32, #tpu.memory_space<vmem>>, vector<1x8x128xf32>
    %440 = vector.shape_cast %439 : vector<1x8x128xf32> to vector<8x128xf32>
    %441 = tpu.concatenate %440, %408 in 1 : vector<8x128xf32>, vector<8x128xf32> -> vector<8x256xf32>
    %cst_88 = arith.constant dense<0.000000e+00> : vector<8x512xf32>
    %442 = tpu.matmul %441, %3, %cst_88 {dimension_numbers = #tpu.dot_dimension_numbers<[1], [0], [0], [1], [0, 0, 1, 1], [], []>} : vector<8x256xf32>, vector<256x512xf32>, vector<8x512xf32> -> vector<8x512xf32>
    %443 = vector.broadcast %4 : vector<1x512xf32> to vector<8x512xf32>
    %444 = arith.addf %442, %443 : vector<8x512xf32>
    %445 = vector.extract_strided_slice %444 {offsets = [0, 0], sizes = [8, 128], strides = [1, 1]} : vector<8x512xf32> to vector<8x128xf32>
    %446 = arith.negf %445 : vector<8x128xf32>
    %447 = math.exp %446 : vector<8x128xf32>
    %cst_89 = arith.constant 1.000000e+00 : f32
    %448 = vector.broadcast %cst_89 : f32 to vector<8x128xf32>
    %449 = arith.addf %448, %447 : vector<8x128xf32>
    %450 = arith.divf %448, %449 : vector<8x128xf32>
    %451 = vector.extract_strided_slice %444 {offsets = [0, 128], sizes = [8, 128], strides = [1, 1]} : vector<8x512xf32> to vector<8x128xf32>
    %452 = arith.negf %451 : vector<8x128xf32>
    %453 = math.exp %452 : vector<8x128xf32>
    %cst_90 = arith.constant 1.000000e+00 : f32
    %454 = vector.broadcast %cst_90 : f32 to vector<8x128xf32>
    %455 = arith.addf %454, %453 : vector<8x128xf32>
    %456 = arith.divf %454, %455 : vector<8x128xf32>
    %457 = vector.extract_strided_slice %444 {offsets = [0, 256], sizes = [8, 128], strides = [1, 1]} : vector<8x512xf32> to vector<8x128xf32>
    %458 = math.tanh %457 : vector<8x128xf32>
    %459 = vector.extract_strided_slice %444 {offsets = [0, 384], sizes = [8, 128], strides = [1, 1]} : vector<8x512xf32> to vector<8x128xf32>
    %460 = arith.negf %459 : vector<8x128xf32>
    %461 = math.exp %460 : vector<8x128xf32>
    %cst_91 = arith.constant 1.000000e+00 : f32
    %462 = vector.broadcast %cst_91 : f32 to vector<8x128xf32>
    %463 = arith.addf %462, %461 : vector<8x128xf32>
    %464 = arith.divf %462, %463 : vector<8x128xf32>
    %465 = arith.mulf %456, %406 : vector<8x128xf32>
    %466 = arith.mulf %450, %458 : vector<8x128xf32>
    %467 = arith.addf %465, %466 : vector<8x128xf32>
    %468 = math.tanh %467 : vector<8x128xf32>
    %469 = arith.mulf %464, %468 : vector<8x128xf32>
    %470 = tpu.concatenate %469, %437 in 1 : vector<8x128xf32>, vector<8x128xf32> -> vector<8x256xf32>
    %cst_92 = arith.constant dense<0.000000e+00> : vector<8x512xf32>
    %471 = tpu.matmul %470, %5, %cst_92 {dimension_numbers = #tpu.dot_dimension_numbers<[1], [0], [0], [1], [0, 0, 1, 1], [], []>} : vector<8x256xf32>, vector<256x512xf32>, vector<8x512xf32> -> vector<8x512xf32>
    %472 = vector.broadcast %6 : vector<1x512xf32> to vector<8x512xf32>
    %473 = arith.addf %471, %472 : vector<8x512xf32>
    %474 = vector.extract_strided_slice %473 {offsets = [0, 0], sizes = [8, 128], strides = [1, 1]} : vector<8x512xf32> to vector<8x128xf32>
    %475 = arith.negf %474 : vector<8x128xf32>
    %476 = math.exp %475 : vector<8x128xf32>
    %cst_93 = arith.constant 1.000000e+00 : f32
    %477 = vector.broadcast %cst_93 : f32 to vector<8x128xf32>
    %478 = arith.addf %477, %476 : vector<8x128xf32>
    %479 = arith.divf %477, %478 : vector<8x128xf32>
    %480 = vector.extract_strided_slice %473 {offsets = [0, 128], sizes = [8, 128], strides = [1, 1]} : vector<8x512xf32> to vector<8x128xf32>
    %481 = arith.negf %480 : vector<8x128xf32>
    %482 = math.exp %481 : vector<8x128xf32>
    %cst_94 = arith.constant 1.000000e+00 : f32
    %483 = vector.broadcast %cst_94 : f32 to vector<8x128xf32>
    %484 = arith.addf %483, %482 : vector<8x128xf32>
    %485 = arith.divf %483, %484 : vector<8x128xf32>
    %486 = vector.extract_strided_slice %473 {offsets = [0, 256], sizes = [8, 128], strides = [1, 1]} : vector<8x512xf32> to vector<8x128xf32>
    %487 = math.tanh %486 : vector<8x128xf32>
    %488 = vector.extract_strided_slice %473 {offsets = [0, 384], sizes = [8, 128], strides = [1, 1]} : vector<8x512xf32> to vector<8x128xf32>
    %489 = arith.negf %488 : vector<8x128xf32>
    %490 = math.exp %489 : vector<8x128xf32>
    %cst_95 = arith.constant 1.000000e+00 : f32
    %491 = vector.broadcast %cst_95 : f32 to vector<8x128xf32>
    %492 = arith.addf %491, %490 : vector<8x128xf32>
    %493 = arith.divf %491, %492 : vector<8x128xf32>
    %494 = arith.mulf %485, %435 : vector<8x128xf32>
    %495 = arith.mulf %479, %487 : vector<8x128xf32>
    %496 = arith.addf %494, %495 : vector<8x128xf32>
    %497 = math.tanh %496 : vector<8x128xf32>
    %498 = arith.mulf %493, %497 : vector<8x128xf32>
    %c8_i32 = arith.constant 8 : i32
    %c0_96 = arith.constant 0 : index
    %c0_97 = arith.constant 0 : index
    %499 = vector.load %arg7[%c0_96, %c0_97] : memref<8x128xf32, #tpu.memory_space<vmem>>, vector<8x128xf32>
    tpu.vector_store %arg7[%c0_96, %c0_97], %469 {strides = array<i32>} : memref<8x128xf32, #tpu.memory_space<vmem>>, vector<8x128xf32>,
    %c0_98 = arith.constant 0 : index
    %c0_99 = arith.constant 0 : index
    %500 = vector.load %arg8[%c0_98, %c0_99] : memref<8x128xf32, #tpu.memory_space<vmem>>, vector<8x128xf32>
    tpu.vector_store %arg8[%c0_98, %c0_99], %467 {strides = array<i32>} : memref<8x128xf32, #tpu.memory_space<vmem>>, vector<8x128xf32>,
    %c0_100 = arith.constant 0 : index
    %c0_101 = arith.constant 0 : index
    %501 = vector.load %arg9[%c0_100, %c0_101] : memref<8x128xf32, #tpu.memory_space<vmem>>, vector<8x128xf32>
    tpu.vector_store %arg9[%c0_100, %c0_101], %498 {strides = array<i32>} : memref<8x128xf32, #tpu.memory_space<vmem>>, vector<8x128xf32>,
    %c0_102 = arith.constant 0 : index
    %c0_103 = arith.constant 0 : index
    %502 = vector.load %arg10[%c0_102, %c0_103] : memref<8x128xf32, #tpu.memory_space<vmem>>, vector<8x128xf32>
    tpu.vector_store %arg10[%c0_102, %c0_103], %496 {strides = array<i32>} : memref<8x128xf32, #tpu.memory_space<vmem>>, vector<8x128xf32>,
    %c0_i32_104 = arith.constant 0 : i32
    %503 = arith.cmpi eq, %arg0, %c0_i32_104 : i32
    %504 = arith.extui %503 : i1 to i32
    %c0_i32_105 = arith.constant 0 : i32
    %505 = arith.cmpi ne, %504, %c0_i32_105 : i32
    scf.if %505 {
      %c0_106 = arith.constant 0 : index
      %c0_107 = arith.constant 0 : index
      %506 = vector.load %arg6[%c0_106, %c0_107] : memref<8x128xf32, #tpu.memory_space<vmem>>, vector<8x128xf32>
      tpu.vector_store %arg6[%c0_106, %c0_107], %498 {strides = array<i32>} : memref<8x128xf32, #tpu.memory_space<vmem>>, vector<8x128xf32>,
    } else {
    }
    return
  }
  func.func @transform_0(%arg0: i32) -> (i32, i32, i32) {
    %c0_i32 = arith.constant 0 : i32
    %c0_i32_0 = arith.constant 0 : i32
    %c0_i32_1 = arith.constant 0 : i32
    return %arg0, %c0_i32, %c0_i32_0 : i32, i32, i32
  }
  func.func @transform_1(%arg0: i32) -> (i32, i32) {
    %c0_i32 = arith.constant 0 : i32
    %c0_i32_0 = arith.constant 0 : i32
    %c0_i32_1 = arith.constant 0 : i32
    return %c0_i32, %c0_i32_0 : i32, i32
  }
  func.func @transform_2(%arg0: i32) -> (i32, i32) {
    %c0_i32 = arith.constant 0 : i32
    %c0_i32_0 = arith.constant 0 : i32
    %c0_i32_1 = arith.constant 0 : i32
    return %c0_i32, %c0_i32_0 : i32, i32
  }
  func.func @transform_3(%arg0: i32) -> (i32, i32) {
    %c0_i32 = arith.constant 0 : i32
    %c0_i32_0 = arith.constant 0 : i32
    %c0_i32_1 = arith.constant 0 : i32
    return %c0_i32, %c0_i32_0 : i32, i32
  }
  func.func @transform_4(%arg0: i32) -> (i32, i32) {
    %c0_i32 = arith.constant 0 : i32
    %c0_i32_0 = arith.constant 0 : i32
    %c0_i32_1 = arith.constant 0 : i32
    return %c0_i32, %c0_i32_0 : i32, i32
  }
  func.func @transform_5(%arg0: i32) -> (i32, i32) {
    %c0_i32 = arith.constant 0 : i32
    %c0_i32_0 = arith.constant 0 : i32
    %c0_i32_1 = arith.constant 0 : i32
    return %c0_i32, %c0_i32_0 : i32, i32
  }
}

</mosaic_0001>

<llo_original>
// kernel: tpu_custom_call.1
$region0: #{tpu_custom_call.1}
  #allocation0 [shape = 'u32[]', space=smem, size = 0x4, offset = 0x4, fixed_abs, tag = 'smem constant byte address 0x4 - core index']
  #allocation1 [shape = 'u32[144,128]{1,0:T(1,128)}', space=vmem, size = 0x12000, scoped, tag = 'internal scratch']
  #allocation2 [shape = 'f32[8,128]{1,0:T(8,128)}', space=vmem, size = 0x1000, scoped, tag = 'scratch operand']
  #allocation3 [shape = 'f32[8,128]{1,0:T(8,128)}', space=vmem, size = 0x1000, scoped, tag = 'scratch operand']
  #allocation4 [shape = 'f32[8,128]{1,0:T(8,128)}', space=vmem, size = 0x1000, scoped, tag = 'scratch operand']
  #allocation5 [shape = 'f32[8,128]{1,0:T(8,128)}', space=vmem, size = 0x1000, scoped, tag = 'scratch operand']
  %s0 = inlined_call_operand.hbm [shape: f32[8,8,128], index: 0, kind: input, shape index: {}]
  %s1 = inlined_call_operand.hbm [shape: f32[256,512], index: 1, kind: input, shape index: {}]
  %s2 = inlined_call_operand.hbm [shape: f32[1,512], index: 2, kind: input, shape index: {}]
  %s3 = inlined_call_operand.hbm [shape: f32[256,512], index: 3, kind: input, shape index: {}]
  %s4 = inlined_call_operand.vmem [shape: f32[1,512], index: 4, kind: input, shape index: {}]
  %s5 = inlined_call_operand.hbm [shape: f32[8,128], index: 5, kind: output, shape index: {}]
  %s6 = sld [smem:[#allocation0]]
  $region54: #{tpu_custom_call.1} parent=0
    _
  %s8 = ssub.s32 1, %s6
  %s9 = scalar_select 0, %s8, %s6
  $region1: #{tpu_custom_call.1} parent=0
    #allocation6 [shape = 'u8[32768]{0}', space=vmem, size = 0x8000, scoped, tag = 'input window, operand 0, single buffered']
    #allocation7 [shape = 's32[1]{0}', space=sflag, size = 0x4, scoped, tag = 'scoped memory for tpu_custom_call.1']
    #allocation8 [shape = 's32[1]{0}', space=sflag, size = 0x4, scoped, tag = 'scoped memory for tpu_custom_call.1']
    #allocation9 [shape = 'u8[524288]{0}', space=vmem, size = 0x80000, scoped, tag = 'input window, operand 1, single buffered']
    #allocation10 [shape = 's32[1]{0}', space=sflag, size = 0x4, scoped, tag = 'scoped memory for tpu_custom_call.1']
    #allocation11 [shape = 'u8[2048]{0}', space=vmem, size = 0x800, scoped, tag = 'input window, operand 2, single buffered']
    #allocation12 [shape = 'u8[524288]{0}', space=vmem, size = 0x80000, scoped, tag = 'input window, operand 3, single buffered']
    #allocation13 [shape = 's32[1]{0}', space=sflag, size = 0x4, scoped, tag = 'scoped memory for tpu_custom_call.1']
    #allocation14 [shape = 'u8[4096]{0}', space=vmem, size = 0x1000, scoped, tag = 'output window, operand 0, single buffered']
    %10 = vsyncpa [#allocation7], 0
    %11 = vsyncpa [#allocation10], 0
    %12 = vsyncpa [#allocation13], 0
    %13 = vsyncpa [#allocation8], 0
    // Predicated region
    $region2: #{tpu_custom_call.1} parent=1 // pred_check
      _
    $region3: #{tpu_custom_call.1} parent=1 // pred_check_branch
      %15 = sbr.rel (0) target = $region5
    $region4: #{tpu_custom_call.1} parent=1 // pred_region
      %s17 = ssub.s32 1024, 1024
      %18 = vsyncadd [#allocation7], %s17
      %s19 = sshll.u32 [#allocation6], 4
      %s20 = int_to_ptr.vmem [resolvable:$true] %s19
      %25 = dma.hbm_to_vmem [thread:$0]  %s0, 1024, %s20, [#allocation7], 128, 128, 8
    $region5: #{tpu_custom_call.1} parent=1 // pred_fallthru
      _
    // Predicated region
    $region6: #{tpu_custom_call.1} parent=1 // pred_check
      _
    $region7: #{tpu_custom_call.1} parent=1 // pred_check_branch
      %27 = sbr.rel (0) target = $region9
    $region8: #{tpu_custom_call.1} parent=1 // pred_region
      %s29 = ssub.s32 16384, 16384
      %30 = vsyncadd [#allocation10], %s29
      %s31 = sshll.u32 [#allocation9], 4
      %s32 = int_to_ptr.vmem [resolvable:$true] %s31
      %37 = dma.hbm_to_vmem [thread:$0]  %s1, 16384, %s32, [#allocation10], 512, 512, 32
    $region9: #{tpu_custom_call.1} parent=1 // pred_fallthru
      _
    // Predicated region
    $region10: #{tpu_custom_call.1} parent=1 // pred_check
      _
    $region11: #{tpu_custom_call.1} parent=1 // pred_check_branch
      %39 = sbr.rel (0) target = $region13
    $region12: #{tpu_custom_call.1} parent=1 // pred_region
      %s41 = ssub.s32 64, 64
      %42 = vsyncadd [#allocation10], %s41
      %s44 = sshll.u32 [#allocation11], 4
      %s45 = int_to_ptr.vmem [resolvable:$true] %s44
      %47 = dma.hbm_to_vmem [thread:$0]  %s2, 64, %s45, [#allocation10]
    $region13: #{tpu_custom_call.1} parent=1 // pred_fallthru
      _
    // Predicated region
    $region14: #{tpu_custom_call.1} parent=1 // pred_check
      _
    $region15: #{tpu_custom_call.1} parent=1 // pred_check_branch
      %49 = sbr.rel (0) target = $region17
    $region16: #{tpu_custom_call.1} parent=1 // pred_region
      %s51 = ssub.s32 16384, 16384
      %52 = vsyncadd [#allocation13], %s51
      %s53 = sshll.u32 [#allocation12], 4
      %s54 = int_to_ptr.vmem [resolvable:$true] %s53
      %59 = dma.hbm_to_vmem [thread:$0]  %s3, 16384, %s54, [#allocation13], 512, 512, 32
    $region17: #{tpu_custom_call.1} parent=1 // pred_fallthru
      _
    // Predicated region
    $region18: #{tpu_custom_call.1} parent=1 // pred_check
      _
    $region19: #{tpu_custom_call.1} parent=1 // pred_check_branch
      %61 = sbr.rel (0) target = $region21
    $region20: #{tpu_custom_call.1} parent=1 // pred_region
      _
    $region21: #{tpu_custom_call.1} parent=1 // pred_fallthru
      _
    // Predicated region
    $region22: #{tpu_custom_call.1} parent=1 // pred_check
      _
    $region23: #{tpu_custom_call.1} parent=1 // pred_check_branch
      %63 = sbr.rel (0) target = $region25
    $region24: #{tpu_custom_call.1} parent=1 // pred_region
      %64 = dma.done [#allocation7], 1024
    $region25: #{tpu_custom_call.1} parent=1 // pred_fallthru
      _
    // Predicated region
    $region26: #{tpu_custom_call.1} parent=1 // pred_check
      _
    $region27: #{tpu_custom_call.1} parent=1 // pred_check_branch
      %66 = sbr.rel (0) target = $region29
    $region28: #{tpu_custom_call.1} parent=1 // pred_region
      %67 = dma.done [#allocation10], 16384
    $region29: #{tpu_custom_call.1} parent=1 // pred_fallthru
      _
    // Predicated region
    $region30: #{tpu_custom_call.1} parent=1 // pred_check
      _
    $region31: #{tpu_custom_call.1} parent=1 // pred_check_branch
      %69 = sbr.rel (0) target = $region33
    $region32: #{tpu_custom_call.1} parent=1 // pred_region
      %70 = dma.done [#allocation10], 64
    $region33: #{tpu_custom_call.1} parent=1 // pred_fallthru
      _
    // Predicated region
    $region34: #{tpu_custom_call.1} parent=1 // pred_check
      _
    $region35: #{tpu_custom_call.1} parent=1 // pred_check_branch
      %72 = sbr.rel (0) target = $region37
    $region36: #{tpu_custom_call.1} parent=1 // pred_region
      %73 = dma.done [#allocation13], 16384
    $region37: #{tpu_custom_call.1} parent=1 // pred_fallthru
      _
    %p74 = scmp.eq.s32.totalorder 0, 0
    // Predicated region
    $region38: #{tpu_custom_call.1} parent=1 // pred_check
      %p75 = pneg %p74
    $region39: #{tpu_custom_call.1} parent=1 // pred_check_branch
      %77 = sbr.rel (%p75) target = $region41
    $region40: #{tpu_custom_call.1} parent=1 // pred_region
      %78 = vst [vmem:[#allocation2] sm:$0xff] 0.0
      %79 = vst [vmem:[#allocation3] sm:$0xff] 0.0
      %80 = vst [vmem:[#allocation4] sm:$0xff] 0.0
      %81 = vst [vmem:[#allocation5] sm:$0xff] 0.0
    $region41: #{tpu_custom_call.1} parent=1 // pred_fallthru
      _
    %v82 = vld [vmem:[#allocation9] sm:$0xff]
    %v83 = vld [vmem:[#allocation9 + $0x8] sm:$0xff]
    %v84 = vld [vmem:[#allocation9 + $0x10] sm:$0xff]
    %v85 = vld [vmem:[#allocation9 + $0x18] sm:$0xff]
    %v86 = vld [vmem:[#allocation9 + $0x20] sm:$0xff]
    %v87 = vld [vmem:[#allocation9 + $0x28] sm:$0xff]
    %v88 = vld [vmem:[#allocation9 + $0x30] sm:$0xff]
    %v89 = vld [vmem:[#allocation9 + $0x38] sm:$0xff]
    %v90 = vld [vmem:[#allocation9 + $0x40] sm:$0xff]
    %v91 = vld [vmem:[#allocation9 + $0x48] sm:$0xff]
    %v92 = vld [vmem:[#allocation9 + $0x50] sm:$0xff]
    %v93 = vld [vmem:[#allocation9 + $0x58] sm:$0xff]
    %v94 = vld [vmem:[#allocation9 + $0x60] sm:$0xff]
    %v95 = vld [vmem:[#allocation9 + $0x68] sm:$0xff]
    %v96 = vld [vmem:[#allocation9 + $0x70] sm:$0xff]
    %v97 = vld [vmem:[#allocation9 + $0x78] sm:$0xff]
    %v98 = vld [vmem:[#allocation9 + $0x80] sm:$0xff]
    %v99 = vld [vmem:[#allocation9 + $0x88] sm:$0xff]
    %v100 = vld [vmem:[#allocation9 + $0x90] sm:$0xff]
    %v101 = vld [vmem:[#allocation9 + $0x98] sm:$0xff]
    %v102 = vld [vmem:[#allocation9 + $0xa0] sm:$0xff]
    %v103 = vld [vmem:[#allocation9 + $0xa8] sm:$0xff]
    %v104 = vld [vmem:[#allocation9 + $0xb0] sm:$0xff]
    %v105 = vld [vmem:[#allocation9 + $0xb8] sm:$0xff]
    %v106 = vld [vmem:[#allocation9 + $0xc0] sm:$0xff]
    %v107 = vld [vmem:[#allocation9 + $0xc8] sm:$0xff]
    %v108 = vld [vmem:[#allocation9 + $0xd0] sm:$0xff]
    %v109 = vld [vmem:[#allocation9 + $0xd8] sm:$0xff]
    %v110 = vld [vmem:[#allocation9 + $0xe0] sm:$0xff]
    %v111 = vld [vmem:[#allocation9 + $0xe8] sm:$0xff]
    %v112 = vld [vmem:[#allocation9 + $0xf0] sm:$0xff]
    %v113 = vld [vmem:[#allocation9 + $0xf8] sm:$0xff]
    %v114 = vld [vmem:[#allocation9 + $0x100] sm:$0xff]
    %v115 = vld [vmem:[#allocation9 + $0x108] sm:$0xff]
    %v116 = vld [vmem:[#allocation9 + $0x110] sm:$0xff]
    %v117 = vld [vmem:[#allocation9 + $0x118] sm:$0xff]
    %v118 = vld [vmem:[#allocation9 + $0x120] sm:$0xff]
    %v119 = vld [vmem:[#allocation9 + $0x128] sm:$0xff]
    %v120 = vld [vmem:[#allocation9 + $0x130] sm:$0xff]
    %v121 = vld [vmem:[#allocation9 + $0x138] sm:$0xff]
    %v122 = vld [vmem:[#allocation9 + $0x140] sm:$0xff]
    %v123 = vld [vmem:[#allocation9 + $0x148] sm:$0xff]
    %v124 = vld [vmem:[#allocation9 + $0x150] sm:$0xff]
    %v125 = vld [vmem:[#allocation9 + $0x158] sm:$0xff]
    %v126 = vld [vmem:[#allocation9 + $0x160] sm:$0xff]
    %v127 = vld [vmem:[#allocation9 + $0x168] sm:$0xff]
    %v128 = vld [vmem:[#allocation9 + $0x170] sm:$0xff]
    %v129 = vld [vmem:[#allocation9 + $0x178] sm:$0xff]
    %v130 = vld [vmem:[#allocation9 + $0x180] sm:$0xff]
    %v131 = vld [vmem:[#allocation9 + $0x188] sm:$0xff]
    %v132 = vld [vmem:[#allocation9 + $0x190] sm:$0xff]
    %v133 = vld [vmem:[#allocation9 + $0x198] sm:$0xff]
    %v134 = vld [vmem:[#allocation9 + $0x1a0] sm:$0xff]
    %v135 = vld [vmem:[#allocation9 + $0x1a8] sm:$0xff]
    %v136 = vld [vmem:[#allocation9 + $0x1b0] sm:$0xff]
    %v137 = vld [vmem:[#allocation9 + $0x1b8] sm:$0xff]
    %v138 = vld [vmem:[#allocation9 + $0x1c0] sm:$0xff]
    %v139 = vld [vmem:[#allocation9 + $0x1c8] sm:$0xff]
    %v140 = vld [vmem:[#allocation9 + $0x1d0] sm:$0xff]
    %v141 = vld [vmem:[#allocation9 + $0x1d8] sm:$0xff]
    %v142 = vld [vmem:[#allocation9 + $0x1e0] sm:$0xff]
    %v143 = vld [vmem:[#allocation9 + $0x1e8] sm:$0xff]
    %v144 = vld [vmem:[#allocation9 + $0x1f0] sm:$0xff]
    %v145 = vld [vmem:[#allocation9 + $0x1f8] sm:$0xff]
    %v146 = vld [vmem:[#allocation9 + $0x200] sm:$0xff]
    %v147 = vld [vmem:[#allocation9 + $0x208] sm:$0xff]
    %v148 = vld [vmem:[#allocation9 + $0x210] sm:$0xff]
    %v149 = vld [vmem:[#allocation9 + $0x218] sm:$0xff]
    %v150 = vld [vmem:[#allocation9 + $0x220] sm:$0xff]
    %v151 = vld [vmem:[#allocation9 + $0x228] sm:$0xff]
    %v152 = vld [vmem:[#allocation9 + $0x230] sm:$0xff]
    %v153 = vld [vmem:[#allocation9 + $0x238] sm:$0xff]
    %v154 = vld [vmem:[#allocation9 + $0x240] sm:$0xff]
    %v155 = vld [vmem:[#allocation9 + $0x248] sm:$0xff]
    %v156 = vld [vmem:[#allocation9 + $0x250] sm:$0xff]
    %v157 = vld [vmem:[#allocation9 + $0x258] sm:$0xff]
    %v158 = vld [vmem:[#allocation9 + $0x260] sm:$0xff]
    %v159 = vld [vmem:[#allocation9 + $0x268] sm:$0xff]
    %v160 = vld [vmem:[#allocation9 + $0x270] sm:$0xff]
    %v161 = vld [vmem:[#allocation9 + $0x278] sm:$0xff]
    %v162 = vld [vmem:[#allocation9 + $0x280] sm:$0xff]
    %v163 = vld [vmem:[#allocation9 + $0x288] sm:$0xff]
    %v164 = vld [vmem:[#allocation9 + $0x290] sm:$0xff]
    %v165 = vld [vmem:[#allocation9 + $0x298] sm:$0xff]
    %v166 = vld [vmem:[#allocation9 + $0x2a0] sm:$0xff]
    %v167 = vld [vmem:[#allocation9 + $0x2a8] sm:$0xff]
    %v168 = vld [vmem:[#allocation9 + $0x2b0] sm:$0xff]
    %v169 = vld [vmem:[#allocation9 + $0x2b8] sm:$0xff]
    %v170 = vld [vmem:[#allocation9 + $0x2c0] sm:$0xff]
    %v171 = vld [vmem:[#allocation9 + $0x2c8] sm:$0xff]
    %v172 = vld [vmem:[#allocation9 + $0x2d0] sm:$0xff]
    %v173 = vld [vmem:[#allocation9 + $0x2d8] sm:$0xff]
    %v174 = vld [vmem:[#allocation9 + $0x2e0] sm:$0xff]
    %v175 = vld [vmem:[#allocation9 + $0x2e8] sm:$0xff]
    %v176 = vld [vmem:[#allocation9 + $0x2f0] sm:$0xff]
    %v177 = vld [vmem:[#allocation9 + $0x2f8] sm:$0xff]
    %v178 = vld [vmem:[#allocation9 + $0x300] sm:$0xff]
    %v179 = vld [vmem:[#allocation9 + $0x308] sm:$0xff]
    %v180 = vld [vmem:[#allocation9 + $0x310] sm:$0xff]
    %v181 = vld [vmem:[#allocation9 + $0x318] sm:$0xff]
    %v182 = vld [vmem:[#allocation9 + $0x320] sm:$0xff]
    %v183 = vld [vmem:[#allocation9 + $0x328] sm:$0xff]
    %v184 = vld [vmem:[#allocation9 + $0x330] sm:$0xff]
    %v185 = vld [vmem:[#allocation9 + $0x338] sm:$0xff]
    %v186 = vld [vmem:[#allocation9 + $0x340] sm:$0xff]
    %v187 = vld [vmem:[#allocation9 + $0x348] sm:$0xff]
    %v188 = vld [vmem:[#allocation9 + $0x350] sm:$0xff]
    %v189 = vld [vmem:[#allocation9 + $0x358] sm:$0xff]
    %v190 = vld [vmem:[#allocation9 + $0x360] sm:$0xff]
    %v191 = vld [vmem:[#allocation9 + $0x368] sm:$0xff]
    %v192 = vld [vmem:[#allocation9 + $0x370] sm:$0xff]
    %v193 = vld [vmem:[#allocation9 + $0x378] sm:$0xff]
    %v194 = vld [vmem:[#allocation9 + $0x380] sm:$0xff]
    %v195 = vld [vmem:[#allocation9 + $0x388] sm:$0xff]
    %v196 = vld [vmem:[#allocation9 + $0x390] sm:$0xff]
    %v197 = vld [vmem:[#allocation9 + $0x398] sm:$0xff]
    %v198 = vld [vmem:[#allocation9 + $0x3a0] sm:$0xff]
    %v199 = vld [vmem:[#allocation9 + $0x3a8] sm:$0xff]
    %v200 = vld [vmem:[#allocation9 + $0x3b0] sm:$0xff]
    %v201 = vld [vmem:[#allocation9 + $0x3b8] sm:$0xff]
    %v202 = vld [vmem:[#allocation9 + $0x3c0] sm:$0xff]
    %v203 = vld [vmem:[#allocation9 + $0x3c8] sm:$0xff]
    %v204 = vld [vmem:[#allocation9 + $0x3d0] sm:$0xff]
    %v205 = vld [vmem:[#allocation9 + $0x3d8] sm:$0xff]
    %v206 = vld [vmem:[#allocation9 + $0x3e0] sm:$0xff]
    %v207 = vld [vmem:[#allocation9 + $0x3e8] sm:$0xff]
    %v208 = vld [vmem:[#allocation9 + $0x3f0] sm:$0xff]
    %v209 = vld [vmem:[#allocation9 + $0x3f8] sm:$0xff]
    %v210 = vld [vmem:[#allocation11] sm:$0xf]
    %v211 = vld [vmem:[#allocation12] sm:$0xff]
    %v212 = vld [vmem:[#allocation12 + $0x8] sm:$0xff]
    %v213 = vld [vmem:[#allocation12 + $0x10] sm:$0xff]
    %v214 = vld [vmem:[#allocation12 + $0x18] sm:$0xff]
    %v215 = vld [vmem:[#allocation12 + $0x20] sm:$0xff]
    %v216 = vld [vmem:[#allocation12 + $0x28] sm:$0xff]
    %v217 = vld [vmem:[#allocation12 + $0x30] sm:$0xff]
    %v218 = vld [vmem:[#allocation12 + $0x38] sm:$0xff]
    %v219 = vld [vmem:[#allocation12 + $0x40] sm:$0xff]
    %v220 = vld [vmem:[#allocation12 + $0x48] sm:$0xff]
    %v221 = vld [vmem:[#allocation12 + $0x50] sm:$0xff]
    %v222 = vld [vmem:[#allocation12 + $0x58] sm:$0xff]
    %v223 = vld [vmem:[#allocation12 + $0x60] sm:$0xff]
    %v224 = vld [vmem:[#allocation12 + $0x68] sm:$0xff]
    %v225 = vld [vmem:[#allocation12 + $0x70] sm:$0xff]
    %v226 = vld [vmem:[#allocation12 + $0x78] sm:$0xff]
    %v227 = vld [vmem:[#allocation12 + $0x80] sm:$0xff]
    %v228 = vld [vmem:[#allocation12 + $0x88] sm:$0xff]
    %v229 = vld [vmem:[#allocation12 + $0x90] sm:$0xff]
    %v230 = vld [vmem:[#allocation12 + $0x98] sm:$0xff]
    %v231 = vld [vmem:[#allocation12 + $0xa0] sm:$0xff]
    %v232 = vld [vmem:[#allocation12 + $0xa8] sm:$0xff]
    %v233 = vld [vmem:[#allocation12 + $0xb0] sm:$0xff]
    %v234 = vld [vmem:[#allocation12 + $0xb8] sm:$0xff]
    %v235 = vld [vmem:[#allocation12 + $0xc0] sm:$0xff]
    %v236 = vld [vmem:[#allocation12 + $0xc8] sm:$0xff]
    %v237 = vld [vmem:[#allocation12 + $0xd0] sm:$0xff]
    %v238 = vld [vmem:[#allocation12 + $0xd8] sm:$0xff]
    %v239 = vld [vmem:[#allocation12 + $0xe0] sm:$0xff]
    %v240 = vld [vmem:[#allocation12 + $0xe8] sm:$0xff]
    %v241 = vld [vmem:[#allocation12 + $0xf0] sm:$0xff]
    %v242 = vld [vmem:[#allocation12 + $0xf8] sm:$0xff]
    %v243 = vld [vmem:[#allocation12 + $0x100] sm:$0xff]
    %v244 = vld [vmem:[#allocation12 + $0x108] sm:$0xff]
    %v245 = vld [vmem:[#allocation12 + $0x110] sm:$0xff]
    %v246 = vld [vmem:[#allocation12 + $0x118] sm:$0xff]
    %v247 = vld [vmem:[#allocation12 + $0x120] sm:$0xff]
    %v248 = vld [vmem:[#allocation12 + $0x128] sm:$0xff]
    %v249 = vld [vmem:[#allocation12 + $0x130] sm:$0xff]
    %v250 = vld [vmem:[#allocation12 + $0x138] sm:$0xff]
    %v251 = vld [vmem:[#allocation12 + $0x140] sm:$0xff]
    %v252 = vld [vmem:[#allocation12 + $0x148] sm:$0xff]
    %v253 = vld [vmem:[#allocation12 + $0x150] sm:$0xff]
    %v254 = vld [vmem:[#allocation12 + $0x158] sm:$0xff]
    %v255 = vld [vmem:[#allocation12 + $0x160] sm:$0xff]
    %v256 = vld [vmem:[#allocation12 + $0x168] sm:$0xff]
    %v257 = vld [vmem:[#allocation12 + $0x170] sm:$0xff]
    %v258 = vld [vmem:[#allocation12 + $0x178] sm:$0xff]
    %v259 = vld [vmem:[#allocation12 + $0x180] sm:$0xff]
    %v260 = vld [vmem:[#allocation12 + $0x188] sm:$0xff]
    %v261 = vld [vmem:[#allocation12 + $0x190] sm:$0xff]
    %v262 = vld [vmem:[#allocation12 + $0x198] sm:$0xff]
    %v263 = vld [vmem:[#allocation12 + $0x1a0] sm:$0xff]
    %v264 = vld [vmem:[#allocation12 + $0x1a8] sm:$0xff]
    %v265 = vld [vmem:[#allocation12 + $0x1b0] sm:$0xff]
    %v266 = vld [vmem:[#allocation12 + $0x1b8] sm:$0xff]
    %v267 = vld [vmem:[#allocation12 + $0x1c0] sm:$0xff]
    %v268 = vld [vmem:[#allocation12 + $0x1c8] sm:$0xff]
    %v269 = vld [vmem:[#allocation12 + $0x1d0] sm:$0xff]
    %v270 = vld [vmem:[#allocation12 + $0x1d8] sm:$0xff]
    %v271 = vld [vmem:[#allocation12 + $0x1e0] sm:$0xff]
    %v272 = vld [vmem:[#allocation12 + $0x1e8] sm:$0xff]
    %v273 = vld [vmem:[#allocation12 + $0x1f0] sm:$0xff]
    %v274 = vld [vmem:[#allocation12 + $0x1f8] sm:$0xff]
    %v275 = vld [vmem:[#allocation12 + $0x200] sm:$0xff]
    %v276 = vld [vmem:[#allocation12 + $0x208] sm:$0xff]
    %v277 = vld [vmem:[#allocation12 + $0x210] sm:$0xff]
    %v278 = vld [vmem:[#allocation12 + $0x218] sm:$0xff]
    %v279 = vld [vmem:[#allocation12 + $0x220] sm:$0xff]
    %v280 = vld [vmem:[#allocation12 + $0x228] sm:$0xff]
    %v281 = vld [vmem:[#allocation12 + $0x230] sm:$0xff]
    %v282 = vld [vmem:[#allocation12 + $0x238] sm:$0xff]
    %v283 = vld [vmem:[#allocation12 + $0x240] sm:$0xff]
    %v284 = vld [vmem:[#allocation12 + $0x248] sm:$0xff]
    %v285 = vld [vmem:[#allocation12 + $0x250] sm:$0xff]
    %v286 = vld [vmem:[#allocation12 + $0x258] sm:$0xff]
    %v287 = vld [vmem:[#allocation12 + $0x260] sm:$0xff]
    %v288 = vld [vmem:[#allocation12 + $0x268] sm:$0xff]
    %v289 = vld [vmem:[#allocation12 + $0x270] sm:$0xff]
    %v290 = vld [vmem:[#allocation12 + $0x278] sm:$0xff]
    %v291 = vld [vmem:[#allocation12 + $0x280] sm:$0xff]
    %v292 = vld [vmem:[#allocation12 + $0x288] sm:$0xff]
    %v293 = vld [vmem:[#allocation12 + $0x290] sm:$0xff]
    %v294 = vld [vmem:[#allocation12 + $0x298] sm:$0xff]
    %v295 = vld [vmem:[#allocation12 + $0x2a0] sm:$0xff]
    %v296 = vld [vmem:[#allocation12 + $0x2a8] sm:$0xff]
    %v297 = vld [vmem:[#allocation12 + $0x2b0] sm:$0xff]
    %v298 = vld [vmem:[#allocation12 + $0x2b8] sm:$0xff]
    %v299 = vld [vmem:[#allocation12 + $0x2c0] sm:$0xff]
    %v300 = vld [vmem:[#allocation12 + $0x2c8] sm:$0xff]
    %v301 = vld [vmem:[#allocation12 + $0x2d0] sm:$0xff]
    %v302 = vld [vmem:[#allocation12 + $0x2d8] sm:$0xff]
    %v303 = vld [vmem:[#allocation12 + $0x2e0] sm:$0xff]
    %v304 = vld [vmem:[#allocation12 + $0x2e8] sm:$0xff]
    %v305 = vld [vmem:[#allocation12 + $0x2f0] sm:$0xff]
    %v306 = vld [vmem:[#allocation12 + $0x2f8] sm:$0xff]
    %v307 = vld [vmem:[#allocation12 + $0x300] sm:$0xff]
    %v308 = vld [vmem:[#allocation12 + $0x308] sm:$0xff]
    %v309 = vld [vmem:[#allocation12 + $0x310] sm:$0xff]
    %v310 = vld [vmem:[#allocation12 + $0x318] sm:$0xff]
    %v311 = vld [vmem:[#allocation12 + $0x320] sm:$0xff]
    %v312 = vld [vmem:[#allocation12 + $0x328] sm:$0xff]
    %v313 = vld [vmem:[#allocation12 + $0x330] sm:$0xff]
    %v314 = vld [vmem:[#allocation12 + $0x338] sm:$0xff]
    %v315 = vld [vmem:[#allocation12 + $0x340] sm:$0xff]
    %v316 = vld [vmem:[#allocation12 + $0x348] sm:$0xff]
    %v317 = vld [vmem:[#allocation12 + $0x350] sm:$0xff]
    %v318 = vld [vmem:[#allocation12 + $0x358] sm:$0xff]
    %v319 = vld [vmem:[#allocation12 + $0x360] sm:$0xff]
    %v320 = vld [vmem:[#allocation12 + $0x368] sm:$0xff]
    %v321 = vld [vmem:[#allocation12 + $0x370] sm:$0xff]
    %v322 = vld [vmem:[#allocation12 + $0x378] sm:$0xff]
    %v323 = vld [vmem:[#allocation12 + $0x380] sm:$0xff]
    %v324 = vld [vmem:[#allocation12 + $0x388] sm:$0xff]
    %v325 = vld [vmem:[#allocation12 + $0x390] sm:$0xff]
    %v326 = vld [vmem:[#allocation12 + $0x398] sm:$0xff]
    %v327 = vld [vmem:[#allocation12 + $0x3a0] sm:$0xff]
    %v328 = vld [vmem:[#allocation12 + $0x3a8] sm:$0xff]
    %v329 = vld [vmem:[#allocation12 + $0x3b0] sm:$0xff]
    %v330 = vld [vmem:[#allocation12 + $0x3b8] sm:$0xff]
    %v331 = vld [vmem:[#allocation12 + $0x3c0] sm:$0xff]
    %v332 = vld [vmem:[#allocation12 + $0x3c8] sm:$0xff]
    %v333 = vld [vmem:[#allocation12 + $0x3d0] sm:$0xff]
    %v334 = vld [vmem:[#allocation12 + $0x3d8] sm:$0xff]
    %v335 = vld [vmem:[#allocation12 + $0x3e0] sm:$0xff]
    %v336 = vld [vmem:[#allocation12 + $0x3e8] sm:$0xff]
    %v337 = vld [vmem:[#allocation12 + $0x3f0] sm:$0xff]
    %v338 = vld [vmem:[#allocation12 + $0x3f8] sm:$0xff]
    %v339 = vld [vmem:[%s4] sm:$0xf]
    %v340 = vld [vmem:[#allocation2] sm:$0xff]
    %v341 = vld [vmem:[#allocation3] sm:$0xff]
    %v342 = vld [vmem:[#allocation4] sm:$0xff]
    %v343 = vld [vmem:[#allocation5] sm:$0xff]
    %v344 = vld [vmem:[#allocation6] sm:$0xff]
    %v346 = vlaneseq
    %v347 = vshrl.u32 %v346, 7
    %v348 = vsub.s32 0, %v347
    %v349 = vrot.slane %v210, %v348
    %v350 = vlaneseq
    %v351 = vshrl.u32 %v350, 7
    %v352 = vsub.s32 1, %v351
    %v353 = vrot.slane %v210, %v352
    %v354 = vlaneseq
    %v355 = vshrl.u32 %v354, 7
    %v356 = vsub.s32 2, %v355
    %v357 = vrot.slane %v210, %v356
    %v358 = vlaneseq
    %v359 = vshrl.u32 %v358, 7
    %v360 = vsub.s32 3, %v359
    %v361 = vrot.slane %v210, %v360
    %366 = vmatprep.subr.mxu0 %v143
    %367 = vmatpush1.msra.mxu0 %v142
    %368 = vmatprep.subr.mxu0 %v139
    %369 = vmatpush1.msra.mxu0 %v138
    %370 = vmatprep.subr.mxu0 %v135
    %371 = vmatpush1.msra.mxu0 %v134
    %372 = vmatprep.subr.mxu0 %v131
    %373 = vmatpush1.msra.mxu0 %v130
    %374 = vmatprep.subr.mxu0 %v127
    %375 = vmatpush1.msra.mxu0 %v126
    %376 = vmatprep.subr.mxu0 %v123
    %377 = vmatpush1.msra.mxu0 %v122
    %378 = vmatprep.subr.mxu0 %v119
    %379 = vmatpush1.msra.mxu0 %v118
    %380 = vmatprep.subr.mxu0 %v115
    %381 = vmatpush1.msra.mxu0 %v114
    %382 = vmatprep.subr.mxu0 %v111
    %383 = vmatpush1.msra.mxu0 %v110
    %384 = vmatprep.subr.mxu0 %v107
    %385 = vmatpush1.msra.mxu0 %v106
    %386 = vmatprep.subr.mxu0 %v103
    %387 = vmatpush1.msra.mxu0 %v102
    %388 = vmatprep.subr.mxu0 %v99
    %389 = vmatpush1.msra.mxu0 %v98
    %390 = vmatprep.subr.mxu0 %v95
    %391 = vmatpush1.msra.mxu0 %v94
    %392 = vmatprep.subr.mxu0 %v91
    %393 = vmatpush1.msra.mxu0 %v90
    %394 = vmatprep.subr.mxu0 %v87
    %395 = vmatpush1.msra.mxu0 %v86
    %396 = vmatprep.subr.mxu0 %v83
    %397 = vmatpush1.msra.mxu0 %v82
    %398 = vmatprep.subr.mxu0 %v207
    %399 = vmatpush2.msra.mxu0 %v206
    %400 = vmatprep.subr.mxu0 %v203
    %401 = vmatpush2.msra.mxu0 %v202
    %402 = vmatprep.subr.mxu0 %v199
    %403 = vmatpush2.msra.mxu0 %v198
    %404 = vmatprep.subr.mxu0 %v195
    %405 = vmatpush2.msra.mxu0 %v194
    %406 = vmatprep.subr.mxu0 %v191
    %407 = vmatpush2.msra.mxu0 %v190
    %408 = vmatprep.subr.mxu0 %v187
    %409 = vmatpush2.msra.mxu0 %v186
    %410 = vmatprep.subr.mxu0 %v183
    %411 = vmatpush2.msra.mxu0 %v182
    %412 = vmatprep.subr.mxu0 %v179
    %413 = vmatpush2.msra.mxu0 %v178
    %414 = vmatprep.subr.mxu0 %v175
    %415 = vmatpush2.msra.mxu0 %v174
    %416 = vmatprep.subr.mxu0 %v171
    %417 = vmatpush2.msra.mxu0 %v170
    %418 = vmatprep.subr.mxu0 %v167
    %419 = vmatpush2.msra.mxu0 %v166
    %420 = vmatprep.subr.mxu0 %v163
    %421 = vmatpush2.msra.mxu0 %v162
    %422 = vmatprep.subr.mxu0 %v159
    %423 = vmatpush2.msra.mxu0 %v158
    %424 = vmatprep.subr.mxu0 %v155
    %425 = vmatpush2.msra.mxu0 %v154
    %426 = vmatprep.subr.mxu0 %v151
    %427 = vmatpush2.msra.mxu0 %v150
    %428 = vmatprep.subr.mxu0 %v147
    %429 = vmatpush2.msra.mxu0 %v146
    %430 = vmatprep.mubr.f32.mxu0 %v340
    %431 = vmatmul.mubr.f32.gmra.mxu0 %v344
    %v432 = vpop.f32.mrf.mxu0
    %v433 = vadd.f32 %v349, %v432
    %v434 = vpop.f32.mrf.mxu0
    %v435 = vadd.f32 %v353, %v434
    %436 = vdwg.mxu0
    %437 = vmatprep.subr.mxu0 %v145
    %438 = vmatpush1.msra.mxu0 %v144
    %439 = vmatprep.subr.mxu0 %v141
    %440 = vmatpush1.msra.mxu0 %v140
    %441 = vmatprep.subr.mxu0 %v137
    %442 = vmatpush1.msra.mxu0 %v136
    %443 = vmatprep.subr.mxu0 %v133
    %444 = vmatpush1.msra.mxu0 %v132
    %445 = vmatprep.subr.mxu0 %v129
    %446 = vmatpush1.msra.mxu0 %v128
    %447 = vmatprep.subr.mxu0 %v125
    %448 = vmatpush1.msra.mxu0 %v124
    %449 = vmatprep.subr.mxu0 %v121
    %450 = vmatpush1.msra.mxu0 %v120
    %451 = vmatprep.subr.mxu0 %v117
    %452 = vmatpush1.msra.mxu0 %v116
    %453 = vmatprep.subr.mxu0 %v113
    %454 = vmatpush1.msra.mxu0 %v112
    %455 = vmatprep.subr.mxu0 %v109
    %456 = vmatpush1.msra.mxu0 %v108
    %457 = vmatprep.subr.mxu0 %v105
    %458 = vmatpush1.msra.mxu0 %v104
    %459 = vmatprep.subr.mxu0 %v101
    %460 = vmatpush1.msra.mxu0 %v100
    %461 = vmatprep.subr.mxu0 %v97
    %462 = vmatpush1.msra.mxu0 %v96
    %463 = vmatprep.subr.mxu0 %v93
    %464 = vmatpush1.msra.mxu0 %v92
    %465 = vmatprep.subr.mxu0 %v89
    %466 = vmatpush1.msra.mxu0 %v88
    %467 = vmatprep.subr.mxu0 %v85
    %468 = vmatpush1.msra.mxu0 %v84
    %469 = vmatprep.subr.mxu0 %v209
    %470 = vmatpush2.msra.mxu0 %v208
    %471 = vmatprep.subr.mxu0 %v205
    %472 = vmatpush2.msra.mxu0 %v204
    %473 = vmatprep.subr.mxu0 %v201
    %474 = vmatpush2.msra.mxu0 %v200
    %475 = vmatprep.subr.mxu0 %v197
    %476 = vmatpush2.msra.mxu0 %v196
    %477 = vmatprep.subr.mxu0 %v193
    %478 = vmatpush2.msra.mxu0 %v192
    %479 = vmatprep.subr.mxu0 %v189
    %480 = vmatpush2.msra.mxu0 %v188
    %481 = vmatprep.subr.mxu0 %v185
    %482 = vmatpush2.msra.mxu0 %v184
    %483 = vmatprep.subr.mxu0 %v181
    %484 = vmatpush2.msra.mxu0 %v180
    %485 = vmatprep.subr.mxu0 %v177
    %486 = vmatpush2.msra.mxu0 %v176
    %487 = vmatprep.subr.mxu0 %v173
    %488 = vmatpush2.msra.mxu0 %v172
    %489 = vmatprep.subr.mxu0 %v169
    %490 = vmatpush2.msra.mxu0 %v168
    %491 = vmatprep.subr.mxu0 %v165
    %492 = vmatpush2.msra.mxu0 %v164
    %493 = vmatprep.subr.mxu0 %v161
    %494 = vmatpush2.msra.mxu0 %v160
    %495 = vmatprep.subr.mxu0 %v157
    %496 = vmatpush2.msra.mxu0 %v156
    %497 = vmatprep.subr.mxu0 %v153
    %498 = vmatpush2.msra.mxu0 %v152
    %499 = vmatprep.subr.mxu0 %v149
    %500 = vmatpush2.msra.mxu0 %v148
    %501 = vmatprep.mubr.f32.mxu0 %v340
    %502 = vmatmul.mubr.f32.gmra.mxu0 %v344
    %v503 = vpop.f32.mrf.mxu0
    %v504 = vadd.f32 %v357, %v503
    %v505 = vpop.f32.mrf.mxu0
    %v506 = vadd.f32 %v361, %v505
    %507 = vdwg.mxu0
    %v508 = vxor.u32 %v433, 2147483648
    %v509 = vmul.f32 %v508, 1.442695
    %v510 = vpow.pop %v509
    %v511 = vadd.f32 %v510, 1.0
    %v512 = vrcp.pop %v511
    %v513 = vmul.f32 1.0, %v512
    %v514 = vxor.u32 %v435, 2147483648
    %v515 = vmul.f32 %v514, 1.442695
    %v516 = vpow.pop %v515
    %v517 = vadd.f32 %v516, 1.0
    %v518 = vrcp.pop %v517
    %v519 = vmul.f32 1.0, %v518
    %v520 = vtanh.pop %v504
    %v521 = vxor.u32 %v506, 2147483648
    %v522 = vmul.f32 %v521, 1.442695
    %v523 = vpow.pop %v522
    %v524 = vadd.f32 %v523, 1.0
    %v525 = vrcp.pop %v524
    %v526 = vmul.f32 1.0, %v525
    %v527 = vmul.f32 %v519, %v341
    %v528 = vmul.f32 %v513, %v520
    %v529 = vadd.f32 %v527, %v528
    %v530 = vtanh.pop %v529
    %v531 = vmul.f32 %v526, %v530
    %v533 = vlaneseq
    %v534 = vshrl.u32 %v533, 7
    %v535 = vsub.s32 0, %v534
    %v536 = vrot.slane %v339, %v535
    %v537 = vlaneseq
    %v538 = vshrl.u32 %v537, 7
    %v539 = vsub.s32 1, %v538
    %v540 = vrot.slane %v339, %v539
    %v541 = vlaneseq
    %v542 = vshrl.u32 %v541, 7
    %v543 = vsub.s32 2, %v542
    %v544 = vrot.slane %v339, %v543
    %v545 = vlaneseq
    %v546 = vshrl.u32 %v545, 7
    %v547 = vsub.s32 3, %v546
    %v548 = vrot.slane %v339, %v547
    %553 = vmatprep.subr.mxu0 %v272
    %554 = vmatpush1.msra.mxu0 %v271
    %555 = vmatprep.subr.mxu0 %v268
    %556 = vmatpush1.msra.mxu0 %v267
    %557 = vmatprep.subr.mxu0 %v264
    %558 = vmatpush1.msra.mxu0 %v263
    %559 = vmatprep.subr.mxu0 %v260
    %560 = vmatpush1.msra.mxu0 %v259
    %561 = vmatprep.subr.mxu0 %v256
    %562 = vmatpush1.msra.mxu0 %v255
    %563 = vmatprep.subr.mxu0 %v252
    %564 = vmatpush1.msra.mxu0 %v251
    %565 = vmatprep.subr.mxu0 %v248
    %566 = vmatpush1.msra.mxu0 %v247
    %567 = vmatprep.subr.mxu0 %v244
    %568 = vmatpush1.msra.mxu0 %v243
    %569 = vmatprep.subr.mxu0 %v240
    %570 = vmatpush1.msra.mxu0 %v239
    %571 = vmatprep.subr.mxu0 %v236
    %572 = vmatpush1.msra.mxu0 %v235
    %573 = vmatprep.subr.mxu0 %v232
    %574 = vmatpush1.msra.mxu0 %v231
    %575 = vmatprep.subr.mxu0 %v228
    %576 = vmatpush1.msra.mxu0 %v227
    %577 = vmatprep.subr.mxu0 %v224
    %578 = vmatpush1.msra.mxu0 %v223
    %579 = vmatprep.subr.mxu0 %v220
    %580 = vmatpush1.msra.mxu0 %v219
    %581 = vmatprep.subr.mxu0 %v216
    %582 = vmatpush1.msra.mxu0 %v215
    %583 = vmatprep.subr.mxu0 %v212
    %584 = vmatpush1.msra.mxu0 %v211
    %585 = vmatprep.subr.mxu0 %v336
    %586 = vmatpush2.msra.mxu0 %v335
    %587 = vmatprep.subr.mxu0 %v332
    %588 = vmatpush2.msra.mxu0 %v331
    %589 = vmatprep.subr.mxu0 %v328
    %590 = vmatpush2.msra.mxu0 %v327
    %591 = vmatprep.subr.mxu0 %v324
    %592 = vmatpush2.msra.mxu0 %v323
    %593 = vmatprep.subr.mxu0 %v320
    %594 = vmatpush2.msra.mxu0 %v319
    %595 = vmatprep.subr.mxu0 %v316
    %596 = vmatpush2.msra.mxu0 %v315
    %597 = vmatprep.subr.mxu0 %v312
    %598 = vmatpush2.msra.mxu0 %v311
    %599 = vmatprep.subr.mxu0 %v308
    %600 = vmatpush2.msra.mxu0 %v307
    %601 = vmatprep.subr.mxu0 %v304
    %602 = vmatpush2.msra.mxu0 %v303
    %603 = vmatprep.subr.mxu0 %v300
    %604 = vmatpush2.msra.mxu0 %v299
    %605 = vmatprep.subr.mxu0 %v296
    %606 = vmatpush2.msra.mxu0 %v295
    %607 = vmatprep.subr.mxu0 %v292
    %608 = vmatpush2.msra.mxu0 %v291
    %609 = vmatprep.subr.mxu0 %v288
    %610 = vmatpush2.msra.mxu0 %v287
    %611 = vmatprep.subr.mxu0 %v284
    %612 = vmatpush2.msra.mxu0 %v283
    %613 = vmatprep.subr.mxu0 %v280
    %614 = vmatpush2.msra.mxu0 %v279
    %615 = vmatprep.subr.mxu0 %v276
    %616 = vmatpush2.msra.mxu0 %v275
    %617 = vmatprep.mubr.f32.mxu0 %v342
    %618 = vmatmul.mubr.f32.gmra.mxu0 %v531
    %v619 = vpop.f32.mrf.mxu0
    %v620 = vadd.f32 %v536, %v619
    %v621 = vpop.f32.mrf.mxu0
    %v622 = vadd.f32 %v540, %v621
    %623 = vdwg.mxu0
    %624 = vmatprep.subr.mxu0 %v274
    %625 = vmatpush1.msra.mxu0 %v273
    %626 = vmatprep.subr.mxu0 %v270
    %627 = vmatpush1.msra.mxu0 %v269
    %628 = vmatprep.subr.mxu0 %v266
    %629 = vmatpush1.msra.mxu0 %v265
    %630 = vmatprep.subr.mxu0 %v262
    %631 = vmatpush1.msra.mxu0 %v261
    %632 = vmatprep.subr.mxu0 %v258
    %633 = vmatpush1.msra.mxu0 %v257
    %634 = vmatprep.subr.mxu0 %v254
    %635 = vmatpush1.msra.mxu0 %v253
    %636 = vmatprep.subr.mxu0 %v250
    %637 = vmatpush1.msra.mxu0 %v249
    %638 = vmatprep.subr.mxu0 %v246
    %639 = vmatpush1.msra.mxu0 %v245
    %640 = vmatprep.subr.mxu0 %v242
    %641 = vmatpush1.msra.mxu0 %v241
    %642 = vmatprep.subr.mxu0 %v238
    %643 = vmatpush1.msra.mxu0 %v237
    %644 = vmatprep.subr.mxu0 %v234
    %645 = vmatpush1.msra.mxu0 %v233
    %646 = vmatprep.subr.mxu0 %v230
    %647 = vmatpush1.msra.mxu0 %v229
    %648 = vmatprep.subr.mxu0 %v226
    %649 = vmatpush1.msra.mxu0 %v225
    %650 = vmatprep.subr.mxu0 %v222
    %651 = vmatpush1.msra.mxu0 %v221
    %652 = vmatprep.subr.mxu0 %v218
    %653 = vmatpush1.msra.mxu0 %v217
    %654 = vmatprep.subr.mxu0 %v214
    %655 = vmatpush1.msra.mxu0 %v213
    %656 = vmatprep.subr.mxu0 %v338
    %657 = vmatpush2.msra.mxu0 %v337
    %658 = vmatprep.subr.mxu0 %v334
    %659 = vmatpush2.msra.mxu0 %v333
    %660 = vmatprep.subr.mxu0 %v330
    %661 = vmatpush2.msra.mxu0 %v329
    %662 = vmatprep.subr.mxu0 %v326
    %663 = vmatpush2.msra.mxu0 %v325
    %664 = vmatprep.subr.mxu0 %v322
    %665 = vmatpush2.msra.mxu0 %v321
    %666 = vmatprep.subr.mxu0 %v318
    %667 = vmatpush2.msra.mxu0 %v317
    %668 = vmatprep.subr.mxu0 %v314
    %669 = vmatpush2.msra.mxu0 %v313
    %670 = vmatprep.subr.mxu0 %v310
    %671 = vmatpush2.msra.mxu0 %v309
    %672 = vmatprep.subr.mxu0 %v306
    %673 = vmatpush2.msra.mxu0 %v305
    %674 = vmatprep.subr.mxu0 %v302
    %675 = vmatpush2.msra.mxu0 %v301
    %676 = vmatprep.subr.mxu0 %v298
    %677 = vmatpush2.msra.mxu0 %v297
    %678 = vmatprep.subr.mxu0 %v294
    %679 = vmatpush2.msra.mxu0 %v293
    %680 = vmatprep.subr.mxu0 %v290
    %681 = vmatpush2.msra.mxu0 %v289
    %682 = vmatprep.subr.mxu0 %v286
    %683 = vmatpush2.msra.mxu0 %v285
    %684 = vmatprep.subr.mxu0 %v282
    %685 = vmatpush2.msra.mxu0 %v281
    %686 = vmatprep.subr.mxu0 %v278
    %687 = vmatpush2.msra.mxu0 %v277
    %688 = vmatprep.mubr.f32.mxu0 %v342
    %689 = vmatmul.mubr.f32.gmra.mxu0 %v531
    %v690 = vpop.f32.mrf.mxu0
    %v691 = vadd.f32 %v544, %v690
    %v692 = vpop.f32.mrf.mxu0
    %v693 = vadd.f32 %v548, %v692
    %694 = vdwg.mxu0
    %v695 = vxor.u32 %v620, 2147483648
    %v696 = vmul.f32 %v695, 1.442695
    %v697 = vpow.pop %v696
    %v698 = vadd.f32 %v697, 1.0
    %v699 = vrcp.pop %v698
    %v700 = vmul.f32 1.0, %v699
    %v701 = vxor.u32 %v622, 2147483648
    %v702 = vmul.f32 %v701, 1.442695
    %v703 = vpow.pop %v702
    %v704 = vadd.f32 %v703, 1.0
    %v705 = vrcp.pop %v704
    %v706 = vmul.f32 1.0, %v705
    %v707 = vtanh.pop %v691
    %v708 = vxor.u32 %v693, 2147483648
    %v709 = vmul.f32 %v708, 1.442695
    %v710 = vpow.pop %v709
    %v711 = vadd.f32 %v710, 1.0
    %v712 = vrcp.pop %v711
    %v713 = vmul.f32 1.0, %v712
    %v714 = vmul.f32 %v706, %v343
    %v715 = vmul.f32 %v700, %v707
    %v716 = vadd.f32 %v714, %v715
    %v717 = vtanh.pop %v716
    %v718 = vmul.f32 %v713, %v717
    %s719 = scalar_lea.vmem [#allocation6], 8
    %v720 = vld [vmem:[%s719] sm:$0xff]
    %721 = vmatprep.subr.mxu0 %v143
    %722 = vmatpush1.msra.mxu0 %v142
    %723 = vmatprep.subr.mxu0 %v139
    %724 = vmatpush1.msra.mxu0 %v138
    %725 = vmatprep.subr.mxu0 %v135
    %726 = vmatpush1.msra.mxu0 %v134
    %727 = vmatprep.subr.mxu0 %v131
    %728 = vmatpush1.msra.mxu0 %v130
    %729 = vmatprep.subr.mxu0 %v127
    %730 = vmatpush1.msra.mxu0 %v126
    %731 = vmatprep.subr.mxu0 %v123
    %732 = vmatpush1.msra.mxu0 %v122
    %733 = vmatprep.subr.mxu0 %v119
    %734 = vmatpush1.msra.mxu0 %v118
    %735 = vmatprep.subr.mxu0 %v115
    %736 = vmatpush1.msra.mxu0 %v114
    %737 = vmatprep.subr.mxu0 %v111
    %738 = vmatpush1.msra.mxu0 %v110
    %739 = vmatprep.subr.mxu0 %v107
    %740 = vmatpush1.msra.mxu0 %v106
    %741 = vmatprep.subr.mxu0 %v103
    %742 = vmatpush1.msra.mxu0 %v102
    %743 = vmatprep.subr.mxu0 %v99
    %744 = vmatpush1.msra.mxu0 %v98
    %745 = vmatprep.subr.mxu0 %v95
    %746 = vmatpush1.msra.mxu0 %v94
    %747 = vmatprep.subr.mxu0 %v91
    %748 = vmatpush1.msra.mxu0 %v90
    %749 = vmatprep.subr.mxu0 %v87
    %750 = vmatpush1.msra.mxu0 %v86
    %751 = vmatprep.subr.mxu0 %v83
    %752 = vmatpush1.msra.mxu0 %v82
    %753 = vmatprep.subr.mxu0 %v207
    %754 = vmatpush2.msra.mxu0 %v206
    %755 = vmatprep.subr.mxu0 %v203
    %756 = vmatpush2.msra.mxu0 %v202
    %757 = vmatprep.subr.mxu0 %v199
    %758 = vmatpush2.msra.mxu0 %v198
    %759 = vmatprep.subr.mxu0 %v195
    %760 = vmatpush2.msra.mxu0 %v194
    %761 = vmatprep.subr.mxu0 %v191
    %762 = vmatpush2.msra.mxu0 %v190
    %763 = vmatprep.subr.mxu0 %v187
    %764 = vmatpush2.msra.mxu0 %v186
    %765 = vmatprep.subr.mxu0 %v183
    %766 = vmatpush2.msra.mxu0 %v182
    %767 = vmatprep.subr.mxu0 %v179
    %768 = vmatpush2.msra.mxu0 %v178
    %769 = vmatprep.subr.mxu0 %v175
    %770 = vmatpush2.msra.mxu0 %v174
    %771 = vmatprep.subr.mxu0 %v171
    %772 = vmatpush2.msra.mxu0 %v170
    %773 = vmatprep.subr.mxu0 %v167
    %774 = vmatpush2.msra.mxu0 %v166
    %775 = vmatprep.subr.mxu0 %v163
    %776 = vmatpush2.msra.mxu0 %v162
    %777 = vmatprep.subr.mxu0 %v159
    %778 = vmatpush2.msra.mxu0 %v158
    %779 = vmatprep.subr.mxu0 %v155
    %780 = vmatpush2.msra.mxu0 %v154
    %781 = vmatprep.subr.mxu0 %v151
    %782 = vmatpush2.msra.mxu0 %v150
    %783 = vmatprep.subr.mxu0 %v147
    %784 = vmatpush2.msra.mxu0 %v146
    %785 = vmatprep.mubr.f32.mxu0 %v531
    %786 = vmatmul.mubr.f32.gmra.mxu0 %v720
    %v787 = vpop.f32.mrf.mxu0
    %v788 = vadd.f32 %v349, %v787
    %v789 = vpop.f32.mrf.mxu0
    %v790 = vadd.f32 %v353, %v789
    %791 = vdwg.mxu0
    %792 = vmatprep.subr.mxu0 %v145
    %793 = vmatpush1.msra.mxu0 %v144
    %794 = vmatprep.subr.mxu0 %v141
    %795 = vmatpush1.msra.mxu0 %v140
    %796 = vmatprep.subr.mxu0 %v137
    %797 = vmatpush1.msra.mxu0 %v136
    %798 = vmatprep.subr.mxu0 %v133
    %799 = vmatpush1.msra.mxu0 %v132
    %800 = vmatprep.subr.mxu0 %v129
    %801 = vmatpush1.msra.mxu0 %v128
    %802 = vmatprep.subr.mxu0 %v125
    %803 = vmatpush1.msra.mxu0 %v124
    %804 = vmatprep.subr.mxu0 %v121
    %805 = vmatpush1.msra.mxu0 %v120
    %806 = vmatprep.subr.mxu0 %v117
    %807 = vmatpush1.msra.mxu0 %v116
    %808 = vmatprep.subr.mxu0 %v113
    %809 = vmatpush1.msra.mxu0 %v112
    %810 = vmatprep.subr.mxu0 %v109
    %811 = vmatpush1.msra.mxu0 %v108
    %812 = vmatprep.subr.mxu0 %v105
    %813 = vmatpush1.msra.mxu0 %v104
    %814 = vmatprep.subr.mxu0 %v101
    %815 = vmatpush1.msra.mxu0 %v100
    %816 = vmatprep.subr.mxu0 %v97
    %817 = vmatpush1.msra.mxu0 %v96
    %818 = vmatprep.subr.mxu0 %v93
    %819 = vmatpush1.msra.mxu0 %v92
    %820 = vmatprep.subr.mxu0 %v89
    %821 = vmatpush1.msra.mxu0 %v88
    %822 = vmatprep.subr.mxu0 %v85
    %823 = vmatpush1.msra.mxu0 %v84
    %824 = vmatprep.subr.mxu0 %v209
    %825 = vmatpush2.msra.mxu0 %v208
    %826 = vmatprep.subr.mxu0 %v205
    %827 = vmatpush2.msra.mxu0 %v204
    %828 = vmatprep.subr.mxu0 %v201
    %829 = vmatpush2.msra.mxu0 %v200
    %830 = vmatprep.subr.mxu0 %v197
    %831 = vmatpush2.msra.mxu0 %v196
    %832 = vmatprep.subr.mxu0 %v193
    %833 = vmatpush2.msra.mxu0 %v192
    %834 = vmatprep.subr.mxu0 %v189
    %835 = vmatpush2.msra.mxu0 %v188
    %836 = vmatprep.subr.mxu0 %v185
    %837 = vmatpush2.msra.mxu0 %v184
    %838 = vmatprep.subr.mxu0 %v181
    %839 = vmatpush2.msra.mxu0 %v180
    %840 = vmatprep.subr.mxu0 %v177
    %841 = vmatpush2.msra.mxu0 %v176
    %842 = vmatprep.subr.mxu0 %v173
    %843 = vmatpush2.msra.mxu0 %v172
    %844 = vmatprep.subr.mxu0 %v169
    %845 = vmatpush2.msra.mxu0 %v168
    %846 = vmatprep.subr.mxu0 %v165
    %847 = vmatpush2.msra.mxu0 %v164
    %848 = vmatprep.subr.mxu0 %v161
    %849 = vmatpush2.msra.mxu0 %v160
    %850 = vmatprep.subr.mxu0 %v157
    %851 = vmatpush2.msra.mxu0 %v156
    %852 = vmatprep.subr.mxu0 %v153
    %853 = vmatpush2.msra.mxu0 %v152
    %854 = vmatprep.subr.mxu0 %v149
    %855 = vmatpush2.msra.mxu0 %v148
    %856 = vmatprep.mubr.f32.mxu0 %v531
    %857 = vmatmul.mubr.f32.gmra.mxu0 %v720
    %v858 = vpop.f32.mrf.mxu0
    %v859 = vadd.f32 %v357, %v858
    %v860 = vpop.f32.mrf.mxu0
    %v861 = vadd.f32 %v361, %v860
    %862 = vdwg.mxu0
    %v863 = vxor.u32 %v788, 2147483648
    %v864 = vmul.f32 %v863, 1.442695
    %v865 = vpow.pop %v864
    %v866 = vadd.f32 %v865, 1.0
    %v867 = vrcp.pop %v866
    %v868 = vmul.f32 1.0, %v867
    %v869 = vxor.u32 %v790, 2147483648
    %v870 = vmul.f32 %v869, 1.442695
    %v871 = vpow.pop %v870
    %v872 = vadd.f32 %v871, 1.0
    %v873 = vrcp.pop %v872
    %v874 = vmul.f32 1.0, %v873
    %v875 = vtanh.pop %v859
    %v876 = vxor.u32 %v861, 2147483648
    %v877 = vmul.f32 %v876, 1.442695
    %v878 = vpow.pop %v877
    %v879 = vadd.f32 %v878, 1.0
    %v880 = vrcp.pop %v879
    %v881 = vmul.f32 1.0, %v880
    %v882 = vmul.f32 %v874, %v529
    %v883 = vmul.f32 %v868, %v875
    %v884 = vadd.f32 %v882, %v883
    %v885 = vtanh.pop %v884
    %v886 = vmul.f32 %v881, %v885
    %887 = vmatprep.subr.mxu0 %v272
    %888 = vmatpush1.msra.mxu0 %v271
    %889 = vmatprep.subr.mxu0 %v268
    %890 = vmatpush1.msra.mxu0 %v267
    %891 = vmatprep.subr.mxu0 %v264
    %892 = vmatpush1.msra.mxu0 %v263
    %893 = vmatprep.subr.mxu0 %v260
    %894 = vmatpush1.msra.mxu0 %v259
    %895 = vmatprep.subr.mxu0 %v256
    %896 = vmatpush1.msra.mxu0 %v255
    %897 = vmatprep.subr.mxu0 %v252
    %898 = vmatpush1.msra.mxu0 %v251
    %899 = vmatprep.subr.mxu0 %v248
    %900 = vmatpush1.msra.mxu0 %v247
    %901 = vmatprep.subr.mxu0 %v244
    %902 = vmatpush1.msra.mxu0 %v243
    %903 = vmatprep.subr.mxu0 %v240
    %904 = vmatpush1.msra.mxu0 %v239
    %905 = vmatprep.subr.mxu0 %v236
    %906 = vmatpush1.msra.mxu0 %v235
    %907 = vmatprep.subr.mxu0 %v232
    %908 = vmatpush1.msra.mxu0 %v231
    %909 = vmatprep.subr.mxu0 %v228
    %910 = vmatpush1.msra.mxu0 %v227
    %911 = vmatprep.subr.mxu0 %v224
    %912 = vmatpush1.msra.mxu0 %v223
    %913 = vmatprep.subr.mxu0 %v220
    %914 = vmatpush1.msra.mxu0 %v219
    %915 = vmatprep.subr.mxu0 %v216
    %916 = vmatpush1.msra.mxu0 %v215
    %917 = vmatprep.subr.mxu0 %v212
    %918 = vmatpush1.msra.mxu0 %v211
    %919 = vmatprep.subr.mxu0 %v336
    %920 = vmatpush2.msra.mxu0 %v335
    %921 = vmatprep.subr.mxu0 %v332
    %922 = vmatpush2.msra.mxu0 %v331
    %923 = vmatprep.subr.mxu0 %v328
    %924 = vmatpush2.msra.mxu0 %v327
    %925 = vmatprep.subr.mxu0 %v324
    %926 = vmatpush2.msra.mxu0 %v323
    %927 = vmatprep.subr.mxu0 %v320
    %928 = vmatpush2.msra.mxu0 %v319
    %929 = vmatprep.subr.mxu0 %v316
    %930 = vmatpush2.msra.mxu0 %v315
    %931 = vmatprep.subr.mxu0 %v312
    %932 = vmatpush2.msra.mxu0 %v311
    %933 = vmatprep.subr.mxu0 %v308
    %934 = vmatpush2.msra.mxu0 %v307
    %935 = vmatprep.subr.mxu0 %v304
    %936 = vmatpush2.msra.mxu0 %v303
    %937 = vmatprep.subr.mxu0 %v300
    %938 = vmatpush2.msra.mxu0 %v299
    %939 = vmatprep.subr.mxu0 %v296
    %940 = vmatpush2.msra.mxu0 %v295
    %941 = vmatprep.subr.mxu0 %v292
    %942 = vmatpush2.msra.mxu0 %v291
    %943 = vmatprep.subr.mxu0 %v288
    %944 = vmatpush2.msra.mxu0 %v287
    %945 = vmatprep.subr.mxu0 %v284
    %946 = vmatpush2.msra.mxu0 %v283
    %947 = vmatprep.subr.mxu0 %v280
    %948 = vmatpush2.msra.mxu0 %v279
    %949 = vmatprep.subr.mxu0 %v276
    %950 = vmatpush2.msra.mxu0 %v275
    %951 = vmatprep.mubr.f32.mxu0 %v718
    %952 = vmatmul.mubr.f32.gmra.mxu0 %v886
    %v953 = vpop.f32.mrf.mxu0
    %v954 = vadd.f32 %v536, %v953
    %v955 = vpop.f32.mrf.mxu0
    %v956 = vadd.f32 %v540, %v955
    %957 = vdwg.mxu0
    %958 = vmatprep.subr.mxu0 %v274
    %959 = vmatpush1.msra.mxu0 %v273
    %960 = vmatprep.subr.mxu0 %v270
    %961 = vmatpush1.msra.mxu0 %v269
    %962 = vmatprep.subr.mxu0 %v266
    %963 = vmatpush1.msra.mxu0 %v265
    %964 = vmatprep.subr.mxu0 %v262
    %965 = vmatpush1.msra.mxu0 %v261
    %966 = vmatprep.subr.mxu0 %v258
    %967 = vmatpush1.msra.mxu0 %v257
    %968 = vmatprep.subr.mxu0 %v254
    %969 = vmatpush1.msra.mxu0 %v253
    %970 = vmatprep.subr.mxu0 %v250
    %971 = vmatpush1.msra.mxu0 %v249
    %972 = vmatprep.subr.mxu0 %v246
    %973 = vmatpush1.msra.mxu0 %v245
    %974 = vmatprep.subr.mxu0 %v242
    %975 = vmatpush1.msra.mxu0 %v241
    %976 = vmatprep.subr.mxu0 %v238
    %977 = vmatpush1.msra.mxu0 %v237
    %978 = vmatprep.subr.mxu0 %v234
    %979 = vmatpush1.msra.mxu0 %v233
    %980 = vmatprep.subr.mxu0 %v230
    %981 = vmatpush1.msra.mxu0 %v229
    %982 = vmatprep.subr.mxu0 %v226
    %983 = vmatpush1.msra.mxu0 %v225
    %984 = vmatprep.subr.mxu0 %v222
    %985 = vmatpush1.msra.mxu0 %v221
    %986 = vmatprep.subr.mxu0 %v218
    %987 = vmatpush1.msra.mxu0 %v217
    %988 = vmatprep.subr.mxu0 %v214
    %989 = vmatpush1.msra.mxu0 %v213
    %990 = vmatprep.subr.mxu0 %v338
    %991 = vmatpush2.msra.mxu0 %v337
    %992 = vmatprep.subr.mxu0 %v334
    %993 = vmatpush2.msra.mxu0 %v333
    %994 = vmatprep.subr.mxu0 %v330
    %995 = vmatpush2.msra.mxu0 %v329
    %996 = vmatprep.subr.mxu0 %v326
    %997 = vmatpush2.msra.mxu0 %v325
    %998 = vmatprep.subr.mxu0 %v322
    %999 = vmatpush2.msra.mxu0 %v321
    %1000 = vmatprep.subr.mxu0 %v318
    %1001 = vmatpush2.msra.mxu0 %v317
    %1002 = vmatprep.subr.mxu0 %v314
    %1003 = vmatpush2.msra.mxu0 %v313
    %1004 = vmatprep.subr.mxu0 %v310
    %1005 = vmatpush2.msra.mxu0 %v309
    %1006 = vmatprep.subr.mxu0 %v306
    %1007 = vmatpush2.msra.mxu0 %v305
    %1008 = vmatprep.subr.mxu0 %v302
    %1009 = vmatpush2.msra.mxu0 %v301
    %1010 = vmatprep.subr.mxu0 %v298
    %1011 = vmatpush2.msra.mxu0 %v297
    %1012 = vmatprep.subr.mxu0 %v294
    %1013 = vmatpush2.msra.mxu0 %v293
    %1014 = vmatprep.subr.mxu0 %v290
    %1015 = vmatpush2.msra.mxu0 %v289
    %1016 = vmatprep.subr.mxu0 %v286
    %1017 = vmatpush2.msra.mxu0 %v285
    %1018 = vmatprep.subr.mxu0 %v282
    %1019 = vmatpush2.msra.mxu0 %v281
    %1020 = vmatprep.subr.mxu0 %v278
    %1021 = vmatpush2.msra.mxu0 %v277
    %1022 = vmatprep.mubr.f32.mxu0 %v718
    %1023 = vmatmul.mubr.f32.gmra.mxu0 %v886
    %v1024 = vpop.f32.mrf.mxu0
    %v1025 = vadd.f32 %v544, %v1024
    %v1026 = vpop.f32.mrf.mxu0
    %v1027 = vadd.f32 %v548, %v1026
    %1028 = vdwg.mxu0
    %v1029 = vxor.u32 %v954, 2147483648
    %v1030 = vmul.f32 %v1029, 1.442695
    %v1031 = vpow.pop %v1030
    %v1032 = vadd.f32 %v1031, 1.0
    %v1033 = vrcp.pop %v1032
    %v1034 = vmul.f32 1.0, %v1033
    %v1035 = vxor.u32 %v956, 2147483648
    %v1036 = vmul.f32 %v1035, 1.442695
    %v1037 = vpow.pop %v1036
    %v1038 = vadd.f32 %v1037, 1.0
    %v1039 = vrcp.pop %v1038
    %v1040 = vmul.f32 1.0, %v1039
    %v1041 = vtanh.pop %v1025
    %v1042 = vxor.u32 %v1027, 2147483648
    %v1043 = vmul.f32 %v1042, 1.442695
    %v1044 = vpow.pop %v1043
    %v1045 = vadd.f32 %v1044, 1.0
    %v1046 = vrcp.pop %v1045
    %v1047 = vmul.f32 1.0, %v1046
    %v1048 = vmul.f32 %v1040, %v716
    %v1049 = vmul.f32 %v1034, %v1041
    %v1050 = vadd.f32 %v1048, %v1049
    %v1051 = vtanh.pop %v1050
    %v1052 = vmul.f32 %v1047, %v1051
    %s1053 = scalar_lea.vmem [#allocation6], 16
    %v1054 = vld [vmem:[%s1053] sm:$0xff]
    %1055 = vmatprep.subr.mxu0 %v143
    %1056 = vmatpush1.msra.mxu0 %v142
    %1057 = vmatprep.subr.mxu0 %v139
    %1058 = vmatpush1.msra.mxu0 %v138
    %1059 = vmatprep.subr.mxu0 %v135
    %1060 = vmatpush1.msra.mxu0 %v134
    %1061 = vmatprep.subr.mxu0 %v131
    %1062 = vmatpush1.msra.mxu0 %v130
    %1063 = vmatprep.subr.mxu0 %v127
    %1064 = vmatpush1.msra.mxu0 %v126
    %1065 = vmatprep.subr.mxu0 %v123
    %1066 = vmatpush1.msra.mxu0 %v122
    %1067 = vmatprep.subr.mxu0 %v119
    %1068 = vmatpush1.msra.mxu0 %v118
    %1069 = vmatprep.subr.mxu0 %v115
    %1070 = vmatpush1.msra.mxu0 %v114
    %1071 = vmatprep.subr.mxu0 %v111
    %1072 = vmatpush1.msra.mxu0 %v110
    %1073 = vmatprep.subr.mxu0 %v107
    %1074 = vmatpush1.msra.mxu0 %v106
    %1075 = vmatprep.subr.mxu0 %v103
    %1076 = vmatpush1.msra.mxu0 %v102
    %1077 = vmatprep.subr.mxu0 %v99
    %1078 = vmatpush1.msra.mxu0 %v98
    %1079 = vmatprep.subr.mxu0 %v95
    %1080 = vmatpush1.msra.mxu0 %v94
    %1081 = vmatprep.subr.mxu0 %v91
    %1082 = vmatpush1.msra.mxu0 %v90
    %1083 = vmatprep.subr.mxu0 %v87
    %1084 = vmatpush1.msra.mxu0 %v86
    %1085 = vmatprep.subr.mxu0 %v83
    %1086 = vmatpush1.msra.mxu0 %v82
    %1087 = vmatprep.subr.mxu0 %v207
    %1088 = vmatpush2.msra.mxu0 %v206
    %1089 = vmatprep.subr.mxu0 %v203
    %1090 = vmatpush2.msra.mxu0 %v202
    %1091 = vmatprep.subr.mxu0 %v199
    %1092 = vmatpush2.msra.mxu0 %v198
    %1093 = vmatprep.subr.mxu0 %v195
    %1094 = vmatpush2.msra.mxu0 %v194
    %1095 = vmatprep.subr.mxu0 %v191
    %1096 = vmatpush2.msra.mxu0 %v190
    %1097 = vmatprep.subr.mxu0 %v187
    %1098 = vmatpush2.msra.mxu0 %v186
    %1099 = vmatprep.subr.mxu0 %v183
    %1100 = vmatpush2.msra.mxu0 %v182
    %1101 = vmatprep.subr.mxu0 %v179
    %1102 = vmatpush2.msra.mxu0 %v178
    %1103 = vmatprep.subr.mxu0 %v175
    %1104 = vmatpush2.msra.mxu0 %v174
    %1105 = vmatprep.subr.mxu0 %v171
    %1106 = vmatpush2.msra.mxu0 %v170
    %1107 = vmatprep.subr.mxu0 %v167
    %1108 = vmatpush2.msra.mxu0 %v166
    %1109 = vmatprep.subr.mxu0 %v163
    %1110 = vmatpush2.msra.mxu0 %v162
    %1111 = vmatprep.subr.mxu0 %v159
    %1112 = vmatpush2.msra.mxu0 %v158
    %1113 = vmatprep.subr.mxu0 %v155
    %1114 = vmatpush2.msra.mxu0 %v154
    %1115 = vmatprep.subr.mxu0 %v151
    %1116 = vmatpush2.msra.mxu0 %v150
    %1117 = vmatprep.subr.mxu0 %v147
    %1118 = vmatpush2.msra.mxu0 %v146
    %1119 = vmatprep.mubr.f32.mxu0 %v886
    %1120 = vmatmul.mubr.f32.gmra.mxu0 %v1054
    %v1121 = vpop.f32.mrf.mxu0
    %v1122 = vadd.f32 %v349, %v1121
    %v1123 = vpop.f32.mrf.mxu0
    %v1124 = vadd.f32 %v353, %v1123
    %1125 = vdwg.mxu0
    %1126 = vmatprep.subr.mxu0 %v145
    %1127 = vmatpush1.msra.mxu0 %v144
    %1128 = vmatprep.subr.mxu0 %v141
    %1129 = vmatpush1.msra.mxu0 %v140
    %1130 = vmatprep.subr.mxu0 %v137
    %1131 = vmatpush1.msra.mxu0 %v136
    %1132 = vmatprep.subr.mxu0 %v133
    %1133 = vmatpush1.msra.mxu0 %v132
    %1134 = vmatprep.subr.mxu0 %v129
    %1135 = vmatpush1.msra.mxu0 %v128
    %1136 = vmatprep.subr.mxu0 %v125
    %1137 = vmatpush1.msra.mxu0 %v124
    %1138 = vmatprep.subr.mxu0 %v121
    %1139 = vmatpush1.msra.mxu0 %v120
    %1140 = vmatprep.subr.mxu0 %v117
    %1141 = vmatpush1.msra.mxu0 %v116
    %1142 = vmatprep.subr.mxu0 %v113
    %1143 = vmatpush1.msra.mxu0 %v112
    %1144 = vmatprep.subr.mxu0 %v109
    %1145 = vmatpush1.msra.mxu0 %v108
    %1146 = vmatprep.subr.mxu0 %v105
    %1147 = vmatpush1.msra.mxu0 %v104
    %1148 = vmatprep.subr.mxu0 %v101
    %1149 = vmatpush1.msra.mxu0 %v100
    %1150 = vmatprep.subr.mxu0 %v97
    %1151 = vmatpush1.msra.mxu0 %v96
    %1152 = vmatprep.subr.mxu0 %v93
    %1153 = vmatpush1.msra.mxu0 %v92
    %1154 = vmatprep.subr.mxu0 %v89
    %1155 = vmatpush1.msra.mxu0 %v88
    %1156 = vmatprep.subr.mxu0 %v85
    %1157 = vmatpush1.msra.mxu0 %v84
    %1158 = vmatprep.subr.mxu0 %v209
    %1159 = vmatpush2.msra.mxu0 %v208
    %1160 = vmatprep.subr.mxu0 %v205
    %1161 = vmatpush2.msra.mxu0 %v204
    %1162 = vmatprep.subr.mxu0 %v201
    %1163 = vmatpush2.msra.mxu0 %v200
    %1164 = vmatprep.subr.mxu0 %v197
    %1165 = vmatpush2.msra.mxu0 %v196
    %1166 = vmatprep.subr.mxu0 %v193
    %1167 = vmatpush2.msra.mxu0 %v192
    %1168 = vmatprep.subr.mxu0 %v189
    %1169 = vmatpush2.msra.mxu0 %v188
    %1170 = vmatprep.subr.mxu0 %v185
    %1171 = vmatpush2.msra.mxu0 %v184
    %1172 = vmatprep.subr.mxu0 %v181
    %1173 = vmatpush2.msra.mxu0 %v180
    %1174 = vmatprep.subr.mxu0 %v177
    %1175 = vmatpush2.msra.mxu0 %v176
    %1176 = vmatprep.subr.mxu0 %v173
    %1177 = vmatpush2.msra.mxu0 %v172
    %1178 = vmatprep.subr.mxu0 %v169
    %1179 = vmatpush2.msra.mxu0 %v168
    %1180 = vmatprep.subr.mxu0 %v165
    %1181 = vmatpush2.msra.mxu0 %v164
    %1182 = vmatprep.subr.mxu0 %v161
    %1183 = vmatpush2.msra.mxu0 %v160
    %1184 = vmatprep.subr.mxu0 %v157
    %1185 = vmatpush2.msra.mxu0 %v156
    %1186 = vmatprep.subr.mxu0 %v153
    %1187 = vmatpush2.msra.mxu0 %v152
    %1188 = vmatprep.subr.mxu0 %v149
    %1189 = vmatpush2.msra.mxu0 %v148
    %1190 = vmatprep.mubr.f32.mxu0 %v886
    %1191 = vmatmul.mubr.f32.gmra.mxu0 %v1054
    %v1192 = vpop.f32.mrf.mxu0
    %v1193 = vadd.f32 %v357, %v1192
    %v1194 = vpop.f32.mrf.mxu0
    %v1195 = vadd.f32 %v361, %v1194
    %1196 = vdwg.mxu0
    %v1197 = vxor.u32 %v1122, 2147483648
    %v1198 = vmul.f32 %v1197, 1.442695
    %v1199 = vpow.pop %v1198
    %v1200 = vadd.f32 %v1199, 1.0
    %v1201 = vrcp.pop %v1200
    %v1202 = vmul.f32 1.0, %v1201
    %v1203 = vxor.u32 %v1124, 2147483648
    %v1204 = vmul.f32 %v1203, 1.442695
    %v1205 = vpow.pop %v1204
    %v1206 = vadd.f32 %v1205, 1.0
    %v1207 = vrcp.pop %v1206
    %v1208 = vmul.f32 1.0, %v1207
    %v1209 = vtanh.pop %v1193
    %v1210 = vxor.u32 %v1195, 2147483648
    %v1211 = vmul.f32 %v1210, 1.442695
    %v1212 = vpow.pop %v1211
    %v1213 = vadd.f32 %v1212, 1.0
    %v1214 = vrcp.pop %v1213
    %v1215 = vmul.f32 1.0, %v1214
    %v1216 = vmul.f32 %v1208, %v884
    %v1217 = vmul.f32 %v1202, %v1209
    %v1218 = vadd.f32 %v1216, %v1217
    %v1219 = vtanh.pop %v1218
    %v1220 = vmul.f32 %v1215, %v1219
    %1221 = vmatprep.subr.mxu0 %v272
    %1222 = vmatpush1.msra.mxu0 %v271
    %1223 = vmatprep.subr.mxu0 %v268
    %1224 = vmatpush1.msra.mxu0 %v267
    %1225 = vmatprep.subr.mxu0 %v264
    %1226 = vmatpush1.msra.mxu0 %v263
    %1227 = vmatprep.subr.mxu0 %v260
    %1228 = vmatpush1.msra.mxu0 %v259
    %1229 = vmatprep.subr.mxu0 %v256
    %1230 = vmatpush1.msra.mxu0 %v255
    %1231 = vmatprep.subr.mxu0 %v252
    %1232 = vmatpush1.msra.mxu0 %v251
    %1233 = vmatprep.subr.mxu0 %v248
    %1234 = vmatpush1.msra.mxu0 %v247
    %1235 = vmatprep.subr.mxu0 %v244
    %1236 = vmatpush1.msra.mxu0 %v243
    %1237 = vmatprep.subr.mxu0 %v240
    %1238 = vmatpush1.msra.mxu0 %v239
    %1239 = vmatprep.subr.mxu0 %v236
    %1240 = vmatpush1.msra.mxu0 %v235
    %1241 = vmatprep.subr.mxu0 %v232
    %1242 = vmatpush1.msra.mxu0 %v231
    %1243 = vmatprep.subr.mxu0 %v228
    %1244 = vmatpush1.msra.mxu0 %v227
    %1245 = vmatprep.subr.mxu0 %v224
    %1246 = vmatpush1.msra.mxu0 %v223
    %1247 = vmatprep.subr.mxu0 %v220
    %1248 = vmatpush1.msra.mxu0 %v219
    %1249 = vmatprep.subr.mxu0 %v216
    %1250 = vmatpush1.msra.mxu0 %v215
    %1251 = vmatprep.subr.mxu0 %v212
    %1252 = vmatpush1.msra.mxu0 %v211
    %1253 = vmatprep.subr.mxu0 %v336
    %1254 = vmatpush2.msra.mxu0 %v335
    %1255 = vmatprep.subr.mxu0 %v332
    %1256 = vmatpush2.msra.mxu0 %v331
    %1257 = vmatprep.subr.mxu0 %v328
    %1258 = vmatpush2.msra.mxu0 %v327
    %1259 = vmatprep.subr.mxu0 %v324
    %1260 = vmatpush2.msra.mxu0 %v323
    %1261 = vmatprep.subr.mxu0 %v320
    %1262 = vmatpush2.msra.mxu0 %v319
    %1263 = vmatprep.subr.mxu0 %v316
    %1264 = vmatpush2.msra.mxu0 %v315
    %1265 = vmatprep.subr.mxu0 %v312
    %1266 = vmatpush2.msra.mxu0 %v311
    %1267 = vmatprep.subr.mxu0 %v308
    %1268 = vmatpush2.msra.mxu0 %v307
    %1269 = vmatprep.subr.mxu0 %v304
    %1270 = vmatpush2.msra.mxu0 %v303
    %1271 = vmatprep.subr.mxu0 %v300
    %1272 = vmatpush2.msra.mxu0 %v299
    %1273 = vmatprep.subr.mxu0 %v296
    %1274 = vmatpush2.msra.mxu0 %v295
    %1275 = vmatprep.subr.mxu0 %v292
    %1276 = vmatpush2.msra.mxu0 %v291
    %1277 = vmatprep.subr.mxu0 %v288
    %1278 = vmatpush2.msra.mxu0 %v287
    %1279 = vmatprep.subr.mxu0 %v284
    %1280 = vmatpush2.msra.mxu0 %v283
    %1281 = vmatprep.subr.mxu0 %v280
    %1282 = vmatpush2.msra.mxu0 %v279
    %1283 = vmatprep.subr.mxu0 %v276
    %1284 = vmatpush2.msra.mxu0 %v275
    %1285 = vmatprep.mubr.f32.mxu0 %v1052
    %1286 = vmatmul.mubr.f32.gmra.mxu0 %v1220
    %v1287 = vpop.f32.mrf.mxu0
    %v1288 = vadd.f32 %v536, %v1287
    %v1289 = vpop.f32.mrf.mxu0
    %v1290 = vadd.f32 %v540, %v1289
    %1291 = vdwg.mxu0
    %1292 = vmatprep.subr.mxu0 %v274
    %1293 = vmatpush1.msra.mxu0 %v273
    %1294 = vmatprep.subr.mxu0 %v270
    %1295 = vmatpush1.msra.mxu0 %v269
    %1296 = vmatprep.subr.mxu0 %v266
    %1297 = vmatpush1.msra.mxu0 %v265
    %1298 = vmatprep.subr.mxu0 %v262
    %1299 = vmatpush1.msra.mxu0 %v261
    %1300 = vmatprep.subr.mxu0 %v258
    %1301 = vmatpush1.msra.mxu0 %v257
    %1302 = vmatprep.subr.mxu0 %v254
    %1303 = vmatpush1.msra.mxu0 %v253
    %1304 = vmatprep.subr.mxu0 %v250
    %1305 = vmatpush1.msra.mxu0 %v249
    %1306 = vmatprep.subr.mxu0 %v246
    %1307 = vmatpush1.msra.mxu0 %v245
    %1308 = vmatprep.subr.mxu0 %v242
    %1309 = vmatpush1.msra.mxu0 %v241
    %1310 = vmatprep.subr.mxu0 %v238
    %1311 = vmatpush1.msra.mxu0 %v237
    %1312 = vmatprep.subr.mxu0 %v234
    %1313 = vmatpush1.msra.mxu0 %v233
    %1314 = vmatprep.subr.mxu0 %v230
    %1315 = vmatpush1.msra.mxu0 %v229
    %1316 = vmatprep.subr.mxu0 %v226
    %1317 = vmatpush1.msra.mxu0 %v225
    %1318 = vmatprep.subr.mxu0 %v222
    %1319 = vmatpush1.msra.mxu0 %v221
    %1320 = vmatprep.subr.mxu0 %v218
    %1321 = vmatpush1.msra.mxu0 %v217
    %1322 = vmatprep.subr.mxu0 %v214
    %1323 = vmatpush1.msra.mxu0 %v213
    %1324 = vmatprep.subr.mxu0 %v338
    %1325 = vmatpush2.msra.mxu0 %v337
    %1326 = vmatprep.subr.mxu0 %v334
    %1327 = vmatpush2.msra.mxu0 %v333
    %1328 = vmatprep.subr.mxu0 %v330
    %1329 = vmatpush2.msra.mxu0 %v329
    %1330 = vmatprep.subr.mxu0 %v326
    %1331 = vmatpush2.msra.mxu0 %v325
    %1332 = vmatprep.subr.mxu0 %v322
    %1333 = vmatpush2.msra.mxu0 %v321
    %1334 = vmatprep.subr.mxu0 %v318
    %1335 = vmatpush2.msra.mxu0 %v317
    %1336 = vmatprep.subr.mxu0 %v314
    %1337 = vmatpush2.msra.mxu0 %v313
    %1338 = vmatprep.subr.mxu0 %v310
    %1339 = vmatpush2.msra.mxu0 %v309
    %1340 = vmatprep.subr.mxu0 %v306
    %1341 = vmatpush2.msra.mxu0 %v305
    %1342 = vmatprep.subr.mxu0 %v302
    %1343 = vmatpush2.msra.mxu0 %v301
    %1344 = vmatprep.subr.mxu0 %v298
    %1345 = vmatpush2.msra.mxu0 %v297
    %1346 = vmatprep.subr.mxu0 %v294
    %1347 = vmatpush2.msra.mxu0 %v293
    %1348 = vmatprep.subr.mxu0 %v290
    %1349 = vmatpush2.msra.mxu0 %v289
    %1350 = vmatprep.subr.mxu0 %v286
    %1351 = vmatpush2.msra.mxu0 %v285
    %1352 = vmatprep.subr.mxu0 %v282
    %1353 = vmatpush2.msra.mxu0 %v281
    %1354 = vmatprep.subr.mxu0 %v278
    %1355 = vmatpush2.msra.mxu0 %v277
    %1356 = vmatprep.mubr.f32.mxu0 %v1052
    %1357 = vmatmul.mubr.f32.gmra.mxu0 %v1220
    %v1358 = vpop.f32.mrf.mxu0
    %v1359 = vadd.f32 %v544, %v1358
    %v1360 = vpop.f32.mrf.mxu0
    %v1361 = vadd.f32 %v548, %v1360
    %1362 = vdwg.mxu0
    %v1363 = vxor.u32 %v1288, 2147483648
    %v1364 = vmul.f32 %v1363, 1.442695
    %v1365 = vpow.pop %v1364
    %v1366 = vadd.f32 %v1365, 1.0
    %v1367 = vrcp.pop %v1366
    %v1368 = vmul.f32 1.0, %v1367
    %v1369 = vxor.u32 %v1290, 2147483648
    %v1370 = vmul.f32 %v1369, 1.442695
    %v1371 = vpow.pop %v1370
    %v1372 = vadd.f32 %v1371, 1.0
    %v1373 = vrcp.pop %v1372
    %v1374 = vmul.f32 1.0, %v1373
    %v1375 = vtanh.pop %v1359
    %v1376 = vxor.u32 %v1361, 2147483648
    %v1377 = vmul.f32 %v1376, 1.442695
    %v1378 = vpow.pop %v1377
    %v1379 = vadd.f32 %v1378, 1.0
    %v1380 = vrcp.pop %v1379
    %v1381 = vmul.f32 1.0, %v1380
    %v1382 = vmul.f32 %v1374, %v1050
    %v1383 = vmul.f32 %v1368, %v1375
    %v1384 = vadd.f32 %v1382, %v1383
    %v1385 = vtanh.pop %v1384
    %v1386 = vmul.f32 %v1381, %v1385
    %s1387 = scalar_lea.vmem [#allocation6], 24
    %v1388 = vld [vmem:[%s1387] sm:$0xff]
    %1389 = vmatprep.subr.mxu0 %v143
    %1390 = vmatpush1.msra.mxu0 %v142
    %1391 = vmatprep.subr.mxu0 %v139
    %1392 = vmatpush1.msra.mxu0 %v138
    %1393 = vmatprep.subr.mxu0 %v135
    %1394 = vmatpush1.msra.mxu0 %v134
    %1395 = vmatprep.subr.mxu0 %v131
    %1396 = vmatpush1.msra.mxu0 %v130
    %1397 = vmatprep.subr.mxu0 %v127
    %1398 = vmatpush1.msra.mxu0 %v126
    %1399 = vmatprep.subr.mxu0 %v123
    %1400 = vmatpush1.msra.mxu0 %v122
    %1401 = vmatprep.subr.mxu0 %v119
    %1402 = vmatpush1.msra.mxu0 %v118
    %1403 = vmatprep.subr.mxu0 %v115
    %1404 = vmatpush1.msra.mxu0 %v114
    %1405 = vmatprep.subr.mxu0 %v111
    %1406 = vmatpush1.msra.mxu0 %v110
    %1407 = vmatprep.subr.mxu0 %v107
    %1408 = vmatpush1.msra.mxu0 %v106
    %1409 = vmatprep.subr.mxu0 %v103
    %1410 = vmatpush1.msra.mxu0 %v102
    %1411 = vmatprep.subr.mxu0 %v99
    %1412 = vmatpush1.msra.mxu0 %v98
    %1413 = vmatprep.subr.mxu0 %v95
    %1414 = vmatpush1.msra.mxu0 %v94
    %1415 = vmatprep.subr.mxu0 %v91
    %1416 = vmatpush1.msra.mxu0 %v90
    %1417 = vmatprep.subr.mxu0 %v87
    %1418 = vmatpush1.msra.mxu0 %v86
    %1419 = vmatprep.subr.mxu0 %v83
    %1420 = vmatpush1.msra.mxu0 %v82
    %1421 = vmatprep.subr.mxu0 %v207
    %1422 = vmatpush2.msra.mxu0 %v206
    %1423 = vmatprep.subr.mxu0 %v203
    %1424 = vmatpush2.msra.mxu0 %v202
    %1425 = vmatprep.subr.mxu0 %v199
    %1426 = vmatpush2.msra.mxu0 %v198
    %1427 = vmatprep.subr.mxu0 %v195
    %1428 = vmatpush2.msra.mxu0 %v194
    %1429 = vmatprep.subr.mxu0 %v191
    %1430 = vmatpush2.msra.mxu0 %v190
    %1431 = vmatprep.subr.mxu0 %v187
    %1432 = vmatpush2.msra.mxu0 %v186
    %1433 = vmatprep.subr.mxu0 %v183
    %1434 = vmatpush2.msra.mxu0 %v182
    %1435 = vmatprep.subr.mxu0 %v179
    %1436 = vmatpush2.msra.mxu0 %v178
    %1437 = vmatprep.subr.mxu0 %v175
    %1438 = vmatpush2.msra.mxu0 %v174
    %1439 = vmatprep.subr.mxu0 %v171
    %1440 = vmatpush2.msra.mxu0 %v170
    %1441 = vmatprep.subr.mxu0 %v167
    %1442 = vmatpush2.msra.mxu0 %v166
    %1443 = vmatprep.subr.mxu0 %v163
    %1444 = vmatpush2.msra.mxu0 %v162
    %1445 = vmatprep.subr.mxu0 %v159
    %1446 = vmatpush2.msra.mxu0 %v158
    %1447 = vmatprep.subr.mxu0 %v155
    %1448 = vmatpush2.msra.mxu0 %v154
    %1449 = vmatprep.subr.mxu0 %v151
    %1450 = vmatpush2.msra.mxu0 %v150
    %1451 = vmatprep.subr.mxu0 %v147
    %1452 = vmatpush2.msra.mxu0 %v146
    %1453 = vmatprep.mubr.f32.mxu0 %v1220
    %1454 = vmatmul.mubr.f32.gmra.mxu0 %v1388
    %v1455 = vpop.f32.mrf.mxu0
    %v1456 = vadd.f32 %v349, %v1455
    %v1457 = vpop.f32.mrf.mxu0
    %v1458 = vadd.f32 %v353, %v1457
    %1459 = vdwg.mxu0
    %1460 = vmatprep.subr.mxu0 %v145
    %1461 = vmatpush1.msra.mxu0 %v144
    %1462 = vmatprep.subr.mxu0 %v141
    %1463 = vmatpush1.msra.mxu0 %v140
    %1464 = vmatprep.subr.mxu0 %v137
    %1465 = vmatpush1.msra.mxu0 %v136
    %1466 = vmatprep.subr.mxu0 %v133
    %1467 = vmatpush1.msra.mxu0 %v132
    %1468 = vmatprep.subr.mxu0 %v129
    %1469 = vmatpush1.msra.mxu0 %v128
    %1470 = vmatprep.subr.mxu0 %v125
    %1471 = vmatpush1.msra.mxu0 %v124
    %1472 = vmatprep.subr.mxu0 %v121
    %1473 = vmatpush1.msra.mxu0 %v120
    %1474 = vmatprep.subr.mxu0 %v117
    %1475 = vmatpush1.msra.mxu0 %v116
    %1476 = vmatprep.subr.mxu0 %v113
    %1477 = vmatpush1.msra.mxu0 %v112
    %1478 = vmatprep.subr.mxu0 %v109
    %1479 = vmatpush1.msra.mxu0 %v108
    %1480 = vmatprep.subr.mxu0 %v105
    %1481 = vmatpush1.msra.mxu0 %v104
    %1482 = vmatprep.subr.mxu0 %v101
    %1483 = vmatpush1.msra.mxu0 %v100
    %1484 = vmatprep.subr.mxu0 %v97
    %1485 = vmatpush1.msra.mxu0 %v96
    %1486 = vmatprep.subr.mxu0 %v93
    %1487 = vmatpush1.msra.mxu0 %v92
    %1488 = vmatprep.subr.mxu0 %v89
    %1489 = vmatpush1.msra.mxu0 %v88
    %1490 = vmatprep.subr.mxu0 %v85
    %1491 = vmatpush1.msra.mxu0 %v84
    %1492 = vmatprep.subr.mxu0 %v209
    %1493 = vmatpush2.msra.mxu0 %v208
    %1494 = vmatprep.subr.mxu0 %v205
    %1495 = vmatpush2.msra.mxu0 %v204
    %1496 = vmatprep.subr.mxu0 %v201
    %1497 = vmatpush2.msra.mxu0 %v200
    %1498 = vmatprep.subr.mxu0 %v197
    %1499 = vmatpush2.msra.mxu0 %v196
    %1500 = vmatprep.subr.mxu0 %v193
    %1501 = vmatpush2.msra.mxu0 %v192
    %1502 = vmatprep.subr.mxu0 %v189
    %1503 = vmatpush2.msra.mxu0 %v188
    %1504 = vmatprep.subr.mxu0 %v185
    %1505 = vmatpush2.msra.mxu0 %v184
    %1506 = vmatprep.subr.mxu0 %v181
    %1507 = vmatpush2.msra.mxu0 %v180
    %1508 = vmatprep.subr.mxu0 %v177
    %1509 = vmatpush2.msra.mxu0 %v176
    %1510 = vmatprep.subr.mxu0 %v173
    %1511 = vmatpush2.msra.mxu0 %v172
    %1512 = vmatprep.subr.mxu0 %v169
    %1513 = vmatpush2.msra.mxu0 %v168
    %1514 = vmatprep.subr.mxu0 %v165
    %1515 = vmatpush2.msra.mxu0 %v164
    %1516 = vmatprep.subr.mxu0 %v161
    %1517 = vmatpush2.msra.mxu0 %v160
    %1518 = vmatprep.subr.mxu0 %v157
    %1519 = vmatpush2.msra.mxu0 %v156
    %1520 = vmatprep.subr.mxu0 %v153
    %1521 = vmatpush2.msra.mxu0 %v152
    %1522 = vmatprep.subr.mxu0 %v149
    %1523 = vmatpush2.msra.mxu0 %v148
    %1524 = vmatprep.mubr.f32.mxu0 %v1220
    %1525 = vmatmul.mubr.f32.gmra.mxu0 %v1388
    %v1526 = vpop.f32.mrf.mxu0
    %v1527 = vadd.f32 %v357, %v1526
    %v1528 = vpop.f32.mrf.mxu0
    %v1529 = vadd.f32 %v361, %v1528
    %1530 = vdwg.mxu0
    %v1531 = vxor.u32 %v1456, 2147483648
    %v1532 = vmul.f32 %v1531, 1.442695
    %v1533 = vpow.pop %v1532
    %v1534 = vadd.f32 %v1533, 1.0
    %v1535 = vrcp.pop %v1534
    %v1536 = vmul.f32 1.0, %v1535
    %v1537 = vxor.u32 %v1458, 2147483648
    %v1538 = vmul.f32 %v1537, 1.442695
    %v1539 = vpow.pop %v1538
    %v1540 = vadd.f32 %v1539, 1.0
    %v1541 = vrcp.pop %v1540
    %v1542 = vmul.f32 1.0, %v1541
    %v1543 = vtanh.pop %v1527
    %v1544 = vxor.u32 %v1529, 2147483648
    %v1545 = vmul.f32 %v1544, 1.442695
    %v1546 = vpow.pop %v1545
    %v1547 = vadd.f32 %v1546, 1.0
    %v1548 = vrcp.pop %v1547
    %v1549 = vmul.f32 1.0, %v1548
    %v1550 = vmul.f32 %v1542, %v1218
    %v1551 = vmul.f32 %v1536, %v1543
    %v1552 = vadd.f32 %v1550, %v1551
    %v1553 = vtanh.pop %v1552
    %v1554 = vmul.f32 %v1549, %v1553
    %1555 = vmatprep.subr.mxu0 %v272
    %1556 = vmatpush1.msra.mxu0 %v271
    %1557 = vmatprep.subr.mxu0 %v268
    %1558 = vmatpush1.msra.mxu0 %v267
    %1559 = vmatprep.subr.mxu0 %v264
    %1560 = vmatpush1.msra.mxu0 %v263
    %1561 = vmatprep.subr.mxu0 %v260
    %1562 = vmatpush1.msra.mxu0 %v259
    %1563 = vmatprep.subr.mxu0 %v256
    %1564 = vmatpush1.msra.mxu0 %v255
    %1565 = vmatprep.subr.mxu0 %v252
    %1566 = vmatpush1.msra.mxu0 %v251
    %1567 = vmatprep.subr.mxu0 %v248
    %1568 = vmatpush1.msra.mxu0 %v247
    %1569 = vmatprep.subr.mxu0 %v244
    %1570 = vmatpush1.msra.mxu0 %v243
    %1571 = vmatprep.subr.mxu0 %v240
    %1572 = vmatpush1.msra.mxu0 %v239
    %1573 = vmatprep.subr.mxu0 %v236
    %1574 = vmatpush1.msra.mxu0 %v235
    %1575 = vmatprep.subr.mxu0 %v232
    %1576 = vmatpush1.msra.mxu0 %v231
    %1577 = vmatprep.subr.mxu0 %v228
    %1578 = vmatpush1.msra.mxu0 %v227
    %1579 = vmatprep.subr.mxu0 %v224
    %1580 = vmatpush1.msra.mxu0 %v223
    %1581 = vmatprep.subr.mxu0 %v220
    %1582 = vmatpush1.msra.mxu0 %v219
    %1583 = vmatprep.subr.mxu0 %v216
    %1584 = vmatpush1.msra.mxu0 %v215
    %1585 = vmatprep.subr.mxu0 %v212
    %1586 = vmatpush1.msra.mxu0 %v211
    %1587 = vmatprep.subr.mxu0 %v336
    %1588 = vmatpush2.msra.mxu0 %v335
    %1589 = vmatprep.subr.mxu0 %v332
    %1590 = vmatpush2.msra.mxu0 %v331
    %1591 = vmatprep.subr.mxu0 %v328
    %1592 = vmatpush2.msra.mxu0 %v327
    %1593 = vmatprep.subr.mxu0 %v324
    %1594 = vmatpush2.msra.mxu0 %v323
    %1595 = vmatprep.subr.mxu0 %v320
    %1596 = vmatpush2.msra.mxu0 %v319
    %1597 = vmatprep.subr.mxu0 %v316
    %1598 = vmatpush2.msra.mxu0 %v315
    %1599 = vmatprep.subr.mxu0 %v312
    %1600 = vmatpush2.msra.mxu0 %v311
    %1601 = vmatprep.subr.mxu0 %v308
    %1602 = vmatpush2.msra.mxu0 %v307
    %1603 = vmatprep.subr.mxu0 %v304
    %1604 = vmatpush2.msra.mxu0 %v303
    %1605 = vmatprep.subr.mxu0 %v300
    %1606 = vmatpush2.msra.mxu0 %v299
    %1607 = vmatprep.subr.mxu0 %v296
    %1608 = vmatpush2.msra.mxu0 %v295
    %1609 = vmatprep.subr.mxu0 %v292
    %1610 = vmatpush2.msra.mxu0 %v291
    %1611 = vmatprep.subr.mxu0 %v288
    %1612 = vmatpush2.msra.mxu0 %v287
    %1613 = vmatprep.subr.mxu0 %v284
    %1614 = vmatpush2.msra.mxu0 %v283
    %1615 = vmatprep.subr.mxu0 %v280
    %1616 = vmatpush2.msra.mxu0 %v279
    %1617 = vmatprep.subr.mxu0 %v276
    %1618 = vmatpush2.msra.mxu0 %v275
    %1619 = vmatprep.mubr.f32.mxu0 %v1386
    %1620 = vmatmul.mubr.f32.gmra.mxu0 %v1554
    %v1621 = vpop.f32.mrf.mxu0
    %v1622 = vadd.f32 %v536, %v1621
    %v1623 = vpop.f32.mrf.mxu0
    %v1624 = vadd.f32 %v540, %v1623
    %1625 = vdwg.mxu0
    %1626 = vmatprep.subr.mxu0 %v274
    %1627 = vmatpush1.msra.mxu0 %v273
    %1628 = vmatprep.subr.mxu0 %v270
    %1629 = vmatpush1.msra.mxu0 %v269
    %1630 = vmatprep.subr.mxu0 %v266
    %1631 = vmatpush1.msra.mxu0 %v265
    %1632 = vmatprep.subr.mxu0 %v262
    %1633 = vmatpush1.msra.mxu0 %v261
    %1634 = vmatprep.subr.mxu0 %v258
    %1635 = vmatpush1.msra.mxu0 %v257
    %1636 = vmatprep.subr.mxu0 %v254
    %1637 = vmatpush1.msra.mxu0 %v253
    %1638 = vmatprep.subr.mxu0 %v250
    %1639 = vmatpush1.msra.mxu0 %v249
    %1640 = vmatprep.subr.mxu0 %v246
    %1641 = vmatpush1.msra.mxu0 %v245
    %1642 = vmatprep.subr.mxu0 %v242
    %1643 = vmatpush1.msra.mxu0 %v241
    %1644 = vmatprep.subr.mxu0 %v238
    %1645 = vmatpush1.msra.mxu0 %v237
    %1646 = vmatprep.subr.mxu0 %v234
    %1647 = vmatpush1.msra.mxu0 %v233
    %1648 = vmatprep.subr.mxu0 %v230
    %1649 = vmatpush1.msra.mxu0 %v229
    %1650 = vmatprep.subr.mxu0 %v226
    %1651 = vmatpush1.msra.mxu0 %v225
    %1652 = vmatprep.subr.mxu0 %v222
    %1653 = vmatpush1.msra.mxu0 %v221
    %1654 = vmatprep.subr.mxu0 %v218
    %1655 = vmatpush1.msra.mxu0 %v217
    %1656 = vmatprep.subr.mxu0 %v214
    %1657 = vmatpush1.msra.mxu0 %v213
    %1658 = vmatprep.subr.mxu0 %v338
    %1659 = vmatpush2.msra.mxu0 %v337
    %1660 = vmatprep.subr.mxu0 %v334
    %1661 = vmatpush2.msra.mxu0 %v333
    %1662 = vmatprep.subr.mxu0 %v330
    %1663 = vmatpush2.msra.mxu0 %v329
    %1664 = vmatprep.subr.mxu0 %v326
    %1665 = vmatpush2.msra.mxu0 %v325
    %1666 = vmatprep.subr.mxu0 %v322
    %1667 = vmatpush2.msra.mxu0 %v321
    %1668 = vmatprep.subr.mxu0 %v318
    %1669 = vmatpush2.msra.mxu0 %v317
    %1670 = vmatprep.subr.mxu0 %v314
    %1671 = vmatpush2.msra.mxu0 %v313
    %1672 = vmatprep.subr.mxu0 %v310
    %1673 = vmatpush2.msra.mxu0 %v309
    %1674 = vmatprep.subr.mxu0 %v306
    %1675 = vmatpush2.msra.mxu0 %v305
    %1676 = vmatprep.subr.mxu0 %v302
    %1677 = vmatpush2.msra.mxu0 %v301
    %1678 = vmatprep.subr.mxu0 %v298
    %1679 = vmatpush2.msra.mxu0 %v297
    %1680 = vmatprep.subr.mxu0 %v294
    %1681 = vmatpush2.msra.mxu0 %v293
    %1682 = vmatprep.subr.mxu0 %v290
    %1683 = vmatpush2.msra.mxu0 %v289
    %1684 = vmatprep.subr.mxu0 %v286
    %1685 = vmatpush2.msra.mxu0 %v285
    %1686 = vmatprep.subr.mxu0 %v282
    %1687 = vmatpush2.msra.mxu0 %v281
    %1688 = vmatprep.subr.mxu0 %v278
    %1689 = vmatpush2.msra.mxu0 %v277
    %1690 = vmatprep.mubr.f32.mxu0 %v1386
    %1691 = vmatmul.mubr.f32.gmra.mxu0 %v1554
    %v1692 = vpop.f32.mrf.mxu0
    %v1693 = vadd.f32 %v544, %v1692
    %v1694 = vpop.f32.mrf.mxu0
    %v1695 = vadd.f32 %v548, %v1694
    %1696 = vdwg.mxu0
    %v1697 = vxor.u32 %v1622, 2147483648
    %v1698 = vmul.f32 %v1697, 1.442695
    %v1699 = vpow.pop %v1698
    %v1700 = vadd.f32 %v1699, 1.0
    %v1701 = vrcp.pop %v1700
    %v1702 = vmul.f32 1.0, %v1701
    %v1703 = vxor.u32 %v1624, 2147483648
    %v1704 = vmul.f32 %v1703, 1.442695
    %v1705 = vpow.pop %v1704
    %v1706 = vadd.f32 %v1705, 1.0
    %v1707 = vrcp.pop %v1706
    %v1708 = vmul.f32 1.0, %v1707
    %v1709 = vtanh.pop %v1693
    %v1710 = vxor.u32 %v1695, 2147483648
    %v1711 = vmul.f32 %v1710, 1.442695
    %v1712 = vpow.pop %v1711
    %v1713 = vadd.f32 %v1712, 1.0
    %v1714 = vrcp.pop %v1713
    %v1715 = vmul.f32 1.0, %v1714
    %v1716 = vmul.f32 %v1708, %v1384
    %v1717 = vmul.f32 %v1702, %v1709
    %v1718 = vadd.f32 %v1716, %v1717
    %v1719 = vtanh.pop %v1718
    %v1720 = vmul.f32 %v1715, %v1719
    %s1721 = scalar_lea.vmem [#allocation6], 32
    %v1722 = vld [vmem:[%s1721] sm:$0xff]
    %1723 = vmatprep.subr.mxu0 %v143
    %1724 = vmatpush1.msra.mxu0 %v142
    %1725 = vmatprep.subr.mxu0 %v139
    %1726 = vmatpush1.msra.mxu0 %v138
    %1727 = vmatprep.subr.mxu0 %v135
    %1728 = vmatpush1.msra.mxu0 %v134
    %1729 = vmatprep.subr.mxu0 %v131
    %1730 = vmatpush1.msra.mxu0 %v130
    %1731 = vmatprep.subr.mxu0 %v127
    %1732 = vmatpush1.msra.mxu0 %v126
    %1733 = vmatprep.subr.mxu0 %v123
    %1734 = vmatpush1.msra.mxu0 %v122
    %1735 = vmatprep.subr.mxu0 %v119
    %1736 = vmatpush1.msra.mxu0 %v118
    %1737 = vmatprep.subr.mxu0 %v115
    %1738 = vmatpush1.msra.mxu0 %v114
    %1739 = vmatprep.subr.mxu0 %v111
    %1740 = vmatpush1.msra.mxu0 %v110
    %1741 = vmatprep.subr.mxu0 %v107
    %1742 = vmatpush1.msra.mxu0 %v106
    %1743 = vmatprep.subr.mxu0 %v103
    %1744 = vmatpush1.msra.mxu0 %v102
    %1745 = vmatprep.subr.mxu0 %v99
    %1746 = vmatpush1.msra.mxu0 %v98
    %1747 = vmatprep.subr.mxu0 %v95
    %1748 = vmatpush1.msra.mxu0 %v94
    %1749 = vmatprep.subr.mxu0 %v91
    %1750 = vmatpush1.msra.mxu0 %v90
    %1751 = vmatprep.subr.mxu0 %v87
    %1752 = vmatpush1.msra.mxu0 %v86
    %1753 = vmatprep.subr.mxu0 %v83
    %1754 = vmatpush1.msra.mxu0 %v82
    %1755 = vmatprep.subr.mxu0 %v207
    %1756 = vmatpush2.msra.mxu0 %v206
    %1757 = vmatprep.subr.mxu0 %v203
    %1758 = vmatpush2.msra.mxu0 %v202
    %1759 = vmatprep.subr.mxu0 %v199
    %1760 = vmatpush2.msra.mxu0 %v198
    %1761 = vmatprep.subr.mxu0 %v195
    %1762 = vmatpush2.msra.mxu0 %v194
    %1763 = vmatprep.subr.mxu0 %v191
    %1764 = vmatpush2.msra.mxu0 %v190
    %1765 = vmatprep.subr.mxu0 %v187
    %1766 = vmatpush2.msra.mxu0 %v186
    %1767 = vmatprep.subr.mxu0 %v183
    %1768 = vmatpush2.msra.mxu0 %v182
    %1769 = vmatprep.subr.mxu0 %v179
    %1770 = vmatpush2.msra.mxu0 %v178
    %1771 = vmatprep.subr.mxu0 %v175
    %1772 = vmatpush2.msra.mxu0 %v174
    %1773 = vmatprep.subr.mxu0 %v171
    %1774 = vmatpush2.msra.mxu0 %v170
    %1775 = vmatprep.subr.mxu0 %v167
    %1776 = vmatpush2.msra.mxu0 %v166
    %1777 = vmatprep.subr.mxu0 %v163
    %1778 = vmatpush2.msra.mxu0 %v162
    %1779 = vmatprep.subr.mxu0 %v159
    %1780 = vmatpush2.msra.mxu0 %v158
    %1781 = vmatprep.subr.mxu0 %v155
    %1782 = vmatpush2.msra.mxu0 %v154
    %1783 = vmatprep.subr.mxu0 %v151
    %1784 = vmatpush2.msra.mxu0 %v150
    %1785 = vmatprep.subr.mxu0 %v147
    %1786 = vmatpush2.msra.mxu0 %v146
    %1787 = vmatprep.mubr.f32.mxu0 %v1554
    %1788 = vmatmul.mubr.f32.gmra.mxu0 %v1722
    %v1789 = vpop.f32.mrf.mxu0
    %v1790 = vadd.f32 %v349, %v1789
    %v1791 = vpop.f32.mrf.mxu0
    %v1792 = vadd.f32 %v353, %v1791
    %1793 = vdwg.mxu0
    %1794 = vmatprep.subr.mxu0 %v145
    %1795 = vmatpush1.msra.mxu0 %v144
    %1796 = vmatprep.subr.mxu0 %v141
    %1797 = vmatpush1.msra.mxu0 %v140
    %1798 = vmatprep.subr.mxu0 %v137
    %1799 = vmatpush1.msra.mxu0 %v136
    %1800 = vmatprep.subr.mxu0 %v133
    %1801 = vmatpush1.msra.mxu0 %v132
    %1802 = vmatprep.subr.mxu0 %v129
    %1803 = vmatpush1.msra.mxu0 %v128
    %1804 = vmatprep.subr.mxu0 %v125
    %1805 = vmatpush1.msra.mxu0 %v124
    %1806 = vmatprep.subr.mxu0 %v121
    %1807 = vmatpush1.msra.mxu0 %v120
    %1808 = vmatprep.subr.mxu0 %v117
    %1809 = vmatpush1.msra.mxu0 %v116
    %1810 = vmatprep.subr.mxu0 %v113
    %1811 = vmatpush1.msra.mxu0 %v112
    %1812 = vmatprep.subr.mxu0 %v109
    %1813 = vmatpush1.msra.mxu0 %v108
    %1814 = vmatprep.subr.mxu0 %v105
    %1815 = vmatpush1.msra.mxu0 %v104
    %1816 = vmatprep.subr.mxu0 %v101
    %1817 = vmatpush1.msra.mxu0 %v100
    %1818 = vmatprep.subr.mxu0 %v97
    %1819 = vmatpush1.msra.mxu0 %v96
    %1820 = vmatprep.subr.mxu0 %v93
    %1821 = vmatpush1.msra.mxu0 %v92
    %1822 = vmatprep.subr.mxu0 %v89
    %1823 = vmatpush1.msra.mxu0 %v88
    %1824 = vmatprep.subr.mxu0 %v85
    %1825 = vmatpush1.msra.mxu0 %v84
    %1826 = vmatprep.subr.mxu0 %v209
    %1827 = vmatpush2.msra.mxu0 %v208
    %1828 = vmatprep.subr.mxu0 %v205
    %1829 = vmatpush2.msra.mxu0 %v204
    %1830 = vmatprep.subr.mxu0 %v201
    %1831 = vmatpush2.msra.mxu0 %v200
    %1832 = vmatprep.subr.mxu0 %v197
    %1833 = vmatpush2.msra.mxu0 %v196
    %1834 = vmatprep.subr.mxu0 %v193
    %1835 = vmatpush2.msra.mxu0 %v192
    %1836 = vmatprep.subr.mxu0 %v189
    %1837 = vmatpush2.msra.mxu0 %v188
    %1838 = vmatprep.subr.mxu0 %v185
    %1839 = vmatpush2.msra.mxu0 %v184
    %1840 = vmatprep.subr.mxu0 %v181
    %1841 = vmatpush2.msra.mxu0 %v180
    %1842 = vmatprep.subr.mxu0 %v177
    %1843 = vmatpush2.msra.mxu0 %v176
    %1844 = vmatprep.subr.mxu0 %v173
    %1845 = vmatpush2.msra.mxu0 %v172
    %1846 = vmatprep.subr.mxu0 %v169
    %1847 = vmatpush2.msra.mxu0 %v168
    %1848 = vmatprep.subr.mxu0 %v165
    %1849 = vmatpush2.msra.mxu0 %v164
    %1850 = vmatprep.subr.mxu0 %v161
    %1851 = vmatpush2.msra.mxu0 %v160
    %1852 = vmatprep.subr.mxu0 %v157
    %1853 = vmatpush2.msra.mxu0 %v156
    %1854 = vmatprep.subr.mxu0 %v153
    %1855 = vmatpush2.msra.mxu0 %v152
    %1856 = vmatprep.subr.mxu0 %v149
    %1857 = vmatpush2.msra.mxu0 %v148
    %1858 = vmatprep.mubr.f32.mxu0 %v1554
    %1859 = vmatmul.mubr.f32.gmra.mxu0 %v1722
    %v1860 = vpop.f32.mrf.mxu0
    %v1861 = vadd.f32 %v357, %v1860
    %v1862 = vpop.f32.mrf.mxu0
    %v1863 = vadd.f32 %v361, %v1862
    %1864 = vdwg.mxu0
    %v1865 = vxor.u32 %v1790, 2147483648
    %v1866 = vmul.f32 %v1865, 1.442695
    %v1867 = vpow.pop %v1866
    %v1868 = vadd.f32 %v1867, 1.0
    %v1869 = vrcp.pop %v1868
    %v1870 = vmul.f32 1.0, %v1869
    %v1871 = vxor.u32 %v1792, 2147483648
    %v1872 = vmul.f32 %v1871, 1.442695
    %v1873 = vpow.pop %v1872
    %v1874 = vadd.f32 %v1873, 1.0
    %v1875 = vrcp.pop %v1874
    %v1876 = vmul.f32 1.0, %v1875
    %v1877 = vtanh.pop %v1861
    %v1878 = vxor.u32 %v1863, 2147483648
    %v1879 = vmul.f32 %v1878, 1.442695
    %v1880 = vpow.pop %v1879
    %v1881 = vadd.f32 %v1880, 1.0
    %v1882 = vrcp.pop %v1881
    %v1883 = vmul.f32 1.0, %v1882
    %v1884 = vmul.f32 %v1876, %v1552
    %v1885 = vmul.f32 %v1870, %v1877
    %v1886 = vadd.f32 %v1884, %v1885
    %v1887 = vtanh.pop %v1886
    %v1888 = vmul.f32 %v1883, %v1887
    %1889 = vmatprep.subr.mxu0 %v272
    %1890 = vmatpush1.msra.mxu0 %v271
    %1891 = vmatprep.subr.mxu0 %v268
    %1892 = vmatpush1.msra.mxu0 %v267
    %1893 = vmatprep.subr.mxu0 %v264
    %1894 = vmatpush1.msra.mxu0 %v263
    %1895 = vmatprep.subr.mxu0 %v260
    %1896 = vmatpush1.msra.mxu0 %v259
    %1897 = vmatprep.subr.mxu0 %v256
    %1898 = vmatpush1.msra.mxu0 %v255
    %1899 = vmatprep.subr.mxu0 %v252
    %1900 = vmatpush1.msra.mxu0 %v251
    %1901 = vmatprep.subr.mxu0 %v248
    %1902 = vmatpush1.msra.mxu0 %v247
    %1903 = vmatprep.subr.mxu0 %v244
    %1904 = vmatpush1.msra.mxu0 %v243
    %1905 = vmatprep.subr.mxu0 %v240
    %1906 = vmatpush1.msra.mxu0 %v239
    %1907 = vmatprep.subr.mxu0 %v236
    %1908 = vmatpush1.msra.mxu0 %v235
    %1909 = vmatprep.subr.mxu0 %v232
    %1910 = vmatpush1.msra.mxu0 %v231
    %1911 = vmatprep.subr.mxu0 %v228
    %1912 = vmatpush1.msra.mxu0 %v227
    %1913 = vmatprep.subr.mxu0 %v224
    %1914 = vmatpush1.msra.mxu0 %v223
    %1915 = vmatprep.subr.mxu0 %v220
    %1916 = vmatpush1.msra.mxu0 %v219
    %1917 = vmatprep.subr.mxu0 %v216
    %1918 = vmatpush1.msra.mxu0 %v215
    %1919 = vmatprep.subr.mxu0 %v212
    %1920 = vmatpush1.msra.mxu0 %v211
    %1921 = vmatprep.subr.mxu0 %v336
    %1922 = vmatpush2.msra.mxu0 %v335
    %1923 = vmatprep.subr.mxu0 %v332
    %1924 = vmatpush2.msra.mxu0 %v331
    %1925 = vmatprep.subr.mxu0 %v328
    %1926 = vmatpush2.msra.mxu0 %v327
    %1927 = vmatprep.subr.mxu0 %v324
    %1928 = vmatpush2.msra.mxu0 %v323
    %1929 = vmatprep.subr.mxu0 %v320
    %1930 = vmatpush2.msra.mxu0 %v319
    %1931 = vmatprep.subr.mxu0 %v316
    %1932 = vmatpush2.msra.mxu0 %v315
    %1933 = vmatprep.subr.mxu0 %v312
    %1934 = vmatpush2.msra.mxu0 %v311
    %1935 = vmatprep.subr.mxu0 %v308
    %1936 = vmatpush2.msra.mxu0 %v307
    %1937 = vmatprep.subr.mxu0 %v304
    %1938 = vmatpush2.msra.mxu0 %v303
    %1939 = vmatprep.subr.mxu0 %v300
    %1940 = vmatpush2.msra.mxu0 %v299
    %1941 = vmatprep.subr.mxu0 %v296
    %1942 = vmatpush2.msra.mxu0 %v295
    %1943 = vmatprep.subr.mxu0 %v292
    %1944 = vmatpush2.msra.mxu0 %v291
    %1945 = vmatprep.subr.mxu0 %v288
    %1946 = vmatpush2.msra.mxu0 %v287
    %1947 = vmatprep.subr.mxu0 %v284
    %1948 = vmatpush2.msra.mxu0 %v283
    %1949 = vmatprep.subr.mxu0 %v280
    %1950 = vmatpush2.msra.mxu0 %v279
    %1951 = vmatprep.subr.mxu0 %v276
    %1952 = vmatpush2.msra.mxu0 %v275
    %1953 = vmatprep.mubr.f32.mxu0 %v1720
    %1954 = vmatmul.mubr.f32.gmra.mxu0 %v1888
    %v1955 = vpop.f32.mrf.mxu0
    %v1956 = vadd.f32 %v536, %v1955
    %v1957 = vpop.f32.mrf.mxu0
    %v1958 = vadd.f32 %v540, %v1957
    %1959 = vdwg.mxu0
    %1960 = vmatprep.subr.mxu0 %v274
    %1961 = vmatpush1.msra.mxu0 %v273
    %1962 = vmatprep.subr.mxu0 %v270
    %1963 = vmatpush1.msra.mxu0 %v269
    %1964 = vmatprep.subr.mxu0 %v266
    %1965 = vmatpush1.msra.mxu0 %v265
    %1966 = vmatprep.subr.mxu0 %v262
    %1967 = vmatpush1.msra.mxu0 %v261
    %1968 = vmatprep.subr.mxu0 %v258
    %1969 = vmatpush1.msra.mxu0 %v257
    %1970 = vmatprep.subr.mxu0 %v254
    %1971 = vmatpush1.msra.mxu0 %v253
    %1972 = vmatprep.subr.mxu0 %v250
    %1973 = vmatpush1.msra.mxu0 %v249
    %1974 = vmatprep.subr.mxu0 %v246
    %1975 = vmatpush1.msra.mxu0 %v245
    %1976 = vmatprep.subr.mxu0 %v242
    %1977 = vmatpush1.msra.mxu0 %v241
    %1978 = vmatprep.subr.mxu0 %v238
    %1979 = vmatpush1.msra.mxu0 %v237
    %1980 = vmatprep.subr.mxu0 %v234
    %1981 = vmatpush1.msra.mxu0 %v233
    %1982 = vmatprep.subr.mxu0 %v230
    %1983 = vmatpush1.msra.mxu0 %v229
    %1984 = vmatprep.subr.mxu0 %v226
    %1985 = vmatpush1.msra.mxu0 %v225
    %1986 = vmatprep.subr.mxu0 %v222
    %1987 = vmatpush1.msra.mxu0 %v221
    %1988 = vmatprep.subr.mxu0 %v218
    %1989 = vmatpush1.msra.mxu0 %v217
    %1990 = vmatprep.subr.mxu0 %v214
    %1991 = vmatpush1.msra.mxu0 %v213
    %1992 = vmatprep.subr.mxu0 %v338
    %1993 = vmatpush2.msra.mxu0 %v337
    %1994 = vmatprep.subr.mxu0 %v334
    %1995 = vmatpush2.msra.mxu0 %v333
    %1996 = vmatprep.subr.mxu0 %v330
    %1997 = vmatpush2.msra.mxu0 %v329
    %1998 = vmatprep.subr.mxu0 %v326
    %1999 = vmatpush2.msra.mxu0 %v325
    %2000 = vmatprep.subr.mxu0 %v322
    %2001 = vmatpush2.msra.mxu0 %v321
    %2002 = vmatprep.subr.mxu0 %v318
    %2003 = vmatpush2.msra.mxu0 %v317
    %2004 = vmatprep.subr.mxu0 %v314
    %2005 = vmatpush2.msra.mxu0 %v313
    %2006 = vmatprep.subr.mxu0 %v310
    %2007 = vmatpush2.msra.mxu0 %v309
    %2008 = vmatprep.subr.mxu0 %v306
    %2009 = vmatpush2.msra.mxu0 %v305
    %2010 = vmatprep.subr.mxu0 %v302
    %2011 = vmatpush2.msra.mxu0 %v301
    %2012 = vmatprep.subr.mxu0 %v298
    %2013 = vmatpush2.msra.mxu0 %v297
    %2014 = vmatprep.subr.mxu0 %v294
    %2015 = vmatpush2.msra.mxu0 %v293
    %2016 = vmatprep.subr.mxu0 %v290
    %2017 = vmatpush2.msra.mxu0 %v289
    %2018 = vmatprep.subr.mxu0 %v286
    %2019 = vmatpush2.msra.mxu0 %v285
    %2020 = vmatprep.subr.mxu0 %v282
    %2021 = vmatpush2.msra.mxu0 %v281
    %2022 = vmatprep.subr.mxu0 %v278
    %2023 = vmatpush2.msra.mxu0 %v277
    %2024 = vmatprep.mubr.f32.mxu0 %v1720
    %2025 = vmatmul.mubr.f32.gmra.mxu0 %v1888
    %v2026 = vpop.f32.mrf.mxu0
    %v2027 = vadd.f32 %v544, %v2026
    %v2028 = vpop.f32.mrf.mxu0
    %v2029 = vadd.f32 %v548, %v2028
    %2030 = vdwg.mxu0
    %v2031 = vxor.u32 %v1956, 2147483648
    %v2032 = vmul.f32 %v2031, 1.442695
    %v2033 = vpow.pop %v2032
    %v2034 = vadd.f32 %v2033, 1.0
    %v2035 = vrcp.pop %v2034
    %v2036 = vmul.f32 1.0, %v2035
    %v2037 = vxor.u32 %v1958, 2147483648
    %v2038 = vmul.f32 %v2037, 1.442695
    %v2039 = vpow.pop %v2038
    %v2040 = vadd.f32 %v2039, 1.0
    %v2041 = vrcp.pop %v2040
    %v2042 = vmul.f32 1.0, %v2041
    %v2043 = vtanh.pop %v2027
    %v2044 = vxor.u32 %v2029, 2147483648
    %v2045 = vmul.f32 %v2044, 1.442695
    %v2046 = vpow.pop %v2045
    %v2047 = vadd.f32 %v2046, 1.0
    %v2048 = vrcp.pop %v2047
    %v2049 = vmul.f32 1.0, %v2048
    %v2050 = vmul.f32 %v2042, %v1718
    %v2051 = vmul.f32 %v2036, %v2043
    %v2052 = vadd.f32 %v2050, %v2051
    %v2053 = vtanh.pop %v2052
    %v2054 = vmul.f32 %v2049, %v2053
    %s2055 = scalar_lea.vmem [#allocation6], 40
    %v2056 = vld [vmem:[%s2055] sm:$0xff]
    %2057 = vmatprep.subr.mxu0 %v143
    %2058 = vmatpush1.msra.mxu0 %v142
    %2059 = vmatprep.subr.mxu0 %v139
    %2060 = vmatpush1.msra.mxu0 %v138
    %2061 = vmatprep.subr.mxu0 %v135
    %2062 = vmatpush1.msra.mxu0 %v134
    %2063 = vmatprep.subr.mxu0 %v131
    %2064 = vmatpush1.msra.mxu0 %v130
    %2065 = vmatprep.subr.mxu0 %v127
    %2066 = vmatpush1.msra.mxu0 %v126
    %2067 = vmatprep.subr.mxu0 %v123
    %2068 = vmatpush1.msra.mxu0 %v122
    %2069 = vmatprep.subr.mxu0 %v119
    %2070 = vmatpush1.msra.mxu0 %v118
    %2071 = vmatprep.subr.mxu0 %v115
    %2072 = vmatpush1.msra.mxu0 %v114
    %2073 = vmatprep.subr.mxu0 %v111
    %2074 = vmatpush1.msra.mxu0 %v110
    %2075 = vmatprep.subr.mxu0 %v107
    %2076 = vmatpush1.msra.mxu0 %v106
    %2077 = vmatprep.subr.mxu0 %v103
    %2078 = vmatpush1.msra.mxu0 %v102
    %2079 = vmatprep.subr.mxu0 %v99
    %2080 = vmatpush1.msra.mxu0 %v98
    %2081 = vmatprep.subr.mxu0 %v95
    %2082 = vmatpush1.msra.mxu0 %v94
    %2083 = vmatprep.subr.mxu0 %v91
    %2084 = vmatpush1.msra.mxu0 %v90
    %2085 = vmatprep.subr.mxu0 %v87
    %2086 = vmatpush1.msra.mxu0 %v86
    %2087 = vmatprep.subr.mxu0 %v83
    %2088 = vmatpush1.msra.mxu0 %v82
    %2089 = vmatprep.subr.mxu0 %v207
    %2090 = vmatpush2.msra.mxu0 %v206
    %2091 = vmatprep.subr.mxu0 %v203
    %2092 = vmatpush2.msra.mxu0 %v202
    %2093 = vmatprep.subr.mxu0 %v199
    %2094 = vmatpush2.msra.mxu0 %v198
    %2095 = vmatprep.subr.mxu0 %v195
    %2096 = vmatpush2.msra.mxu0 %v194
    %2097 = vmatprep.subr.mxu0 %v191
    %2098 = vmatpush2.msra.mxu0 %v190
    %2099 = vmatprep.subr.mxu0 %v187
    %2100 = vmatpush2.msra.mxu0 %v186
    %2101 = vmatprep.subr.mxu0 %v183
    %2102 = vmatpush2.msra.mxu0 %v182
    %2103 = vmatprep.subr.mxu0 %v179
    %2104 = vmatpush2.msra.mxu0 %v178
    %2105 = vmatprep.subr.mxu0 %v175
    %2106 = vmatpush2.msra.mxu0 %v174
    %2107 = vmatprep.subr.mxu0 %v171
    %2108 = vmatpush2.msra.mxu0 %v170
    %2109 = vmatprep.subr.mxu0 %v167
    %2110 = vmatpush2.msra.mxu0 %v166
    %2111 = vmatprep.subr.mxu0 %v163
    %2112 = vmatpush2.msra.mxu0 %v162
    %2113 = vmatprep.subr.mxu0 %v159
    %2114 = vmatpush2.msra.mxu0 %v158
    %2115 = vmatprep.subr.mxu0 %v155
    %2116 = vmatpush2.msra.mxu0 %v154
    %2117 = vmatprep.subr.mxu0 %v151
    %2118 = vmatpush2.msra.mxu0 %v150
    %2119 = vmatprep.subr.mxu0 %v147
    %2120 = vmatpush2.msra.mxu0 %v146
    %2121 = vmatprep.mubr.f32.mxu0 %v1888
    %2122 = vmatmul.mubr.f32.gmra.mxu0 %v2056
    %v2123 = vpop.f32.mrf.mxu0
    %v2124 = vadd.f32 %v349, %v2123
    %v2125 = vpop.f32.mrf.mxu0
    %v2126 = vadd.f32 %v353, %v2125
    %2127 = vdwg.mxu0
    %2128 = vmatprep.subr.mxu0 %v145
    %2129 = vmatpush1.msra.mxu0 %v144
    %2130 = vmatprep.subr.mxu0 %v141
    %2131 = vmatpush1.msra.mxu0 %v140
    %2132 = vmatprep.subr.mxu0 %v137
    %2133 = vmatpush1.msra.mxu0 %v136
    %2134 = vmatprep.subr.mxu0 %v133
    %2135 = vmatpush1.msra.mxu0 %v132
    %2136 = vmatprep.subr.mxu0 %v129
    %2137 = vmatpush1.msra.mxu0 %v128
    %2138 = vmatprep.subr.mxu0 %v125
    %2139 = vmatpush1.msra.mxu0 %v124
    %2140 = vmatprep.subr.mxu0 %v121
    %2141 = vmatpush1.msra.mxu0 %v120
    %2142 = vmatprep.subr.mxu0 %v117
    %2143 = vmatpush1.msra.mxu0 %v116
    %2144 = vmatprep.subr.mxu0 %v113
    %2145 = vmatpush1.msra.mxu0 %v112
    %2146 = vmatprep.subr.mxu0 %v109
    %2147 = vmatpush1.msra.mxu0 %v108
    %2148 = vmatprep.subr.mxu0 %v105
    %2149 = vmatpush1.msra.mxu0 %v104
    %2150 = vmatprep.subr.mxu0 %v101
    %2151 = vmatpush1.msra.mxu0 %v100
    %2152 = vmatprep.subr.mxu0 %v97
    %2153 = vmatpush1.msra.mxu0 %v96
    %2154 = vmatprep.subr.mxu0 %v93
    %2155 = vmatpush1.msra.mxu0 %v92
    %2156 = vmatprep.subr.mxu0 %v89
    %2157 = vmatpush1.msra.mxu0 %v88
    %2158 = vmatprep.subr.mxu0 %v85
    %2159 = vmatpush1.msra.mxu0 %v84
    %2160 = vmatprep.subr.mxu0 %v209
    %2161 = vmatpush2.msra.mxu0 %v208
    %2162 = vmatprep.subr.mxu0 %v205
    %2163 = vmatpush2.msra.mxu0 %v204
    %2164 = vmatprep.subr.mxu0 %v201
    %2165 = vmatpush2.msra.mxu0 %v200
    %2166 = vmatprep.subr.mxu0 %v197
    %2167 = vmatpush2.msra.mxu0 %v196
    %2168 = vmatprep.subr.mxu0 %v193
    %2169 = vmatpush2.msra.mxu0 %v192
    %2170 = vmatprep.subr.mxu0 %v189
    %2171 = vmatpush2.msra.mxu0 %v188
    %2172 = vmatprep.subr.mxu0 %v185
    %2173 = vmatpush2.msra.mxu0 %v184
    %2174 = vmatprep.subr.mxu0 %v181
    %2175 = vmatpush2.msra.mxu0 %v180
    %2176 = vmatprep.subr.mxu0 %v177
    %2177 = vmatpush2.msra.mxu0 %v176
    %2178 = vmatprep.subr.mxu0 %v173
    %2179 = vmatpush2.msra.mxu0 %v172
    %2180 = vmatprep.subr.mxu0 %v169
    %2181 = vmatpush2.msra.mxu0 %v168
    %2182 = vmatprep.subr.mxu0 %v165
    %2183 = vmatpush2.msra.mxu0 %v164
    %2184 = vmatprep.subr.mxu0 %v161
    %2185 = vmatpush2.msra.mxu0 %v160
    %2186 = vmatprep.subr.mxu0 %v157
    %2187 = vmatpush2.msra.mxu0 %v156
    %2188 = vmatprep.subr.mxu0 %v153
    %2189 = vmatpush2.msra.mxu0 %v152
    %2190 = vmatprep.subr.mxu0 %v149
    %2191 = vmatpush2.msra.mxu0 %v148
    %2192 = vmatprep.mubr.f32.mxu0 %v1888
    %2193 = vmatmul.mubr.f32.gmra.mxu0 %v2056
    %v2194 = vpop.f32.mrf.mxu0
    %v2195 = vadd.f32 %v357, %v2194
    %v2196 = vpop.f32.mrf.mxu0
    %v2197 = vadd.f32 %v361, %v2196
    %2198 = vdwg.mxu0
    %v2199 = vxor.u32 %v2124, 2147483648
    %v2200 = vmul.f32 %v2199, 1.442695
    %v2201 = vpow.pop %v2200
    %v2202 = vadd.f32 %v2201, 1.0
    %v2203 = vrcp.pop %v2202
    %v2204 = vmul.f32 1.0, %v2203
    %v2205 = vxor.u32 %v2126, 2147483648
    %v2206 = vmul.f32 %v2205, 1.442695
    %v2207 = vpow.pop %v2206
    %v2208 = vadd.f32 %v2207, 1.0
    %v2209 = vrcp.pop %v2208
    %v2210 = vmul.f32 1.0, %v2209
    %v2211 = vtanh.pop %v2195
    %v2212 = vxor.u32 %v2197, 2147483648
    %v2213 = vmul.f32 %v2212, 1.442695
    %v2214 = vpow.pop %v2213
    %v2215 = vadd.f32 %v2214, 1.0
    %v2216 = vrcp.pop %v2215
    %v2217 = vmul.f32 1.0, %v2216
    %v2218 = vmul.f32 %v2210, %v1886
    %v2219 = vmul.f32 %v2204, %v2211
    %v2220 = vadd.f32 %v2218, %v2219
    %v2221 = vtanh.pop %v2220
    %v2222 = vmul.f32 %v2217, %v2221
    %2223 = vmatprep.subr.mxu0 %v272
    %2224 = vmatpush1.msra.mxu0 %v271
    %2225 = vmatprep.subr.mxu0 %v268
    %2226 = vmatpush1.msra.mxu0 %v267
    %2227 = vmatprep.subr.mxu0 %v264
    %2228 = vmatpush1.msra.mxu0 %v263
    %2229 = vmatprep.subr.mxu0 %v260
    %2230 = vmatpush1.msra.mxu0 %v259
    %2231 = vmatprep.subr.mxu0 %v256
    %2232 = vmatpush1.msra.mxu0 %v255
    %2233 = vmatprep.subr.mxu0 %v252
    %2234 = vmatpush1.msra.mxu0 %v251
    %2235 = vmatprep.subr.mxu0 %v248
    %2236 = vmatpush1.msra.mxu0 %v247
    %2237 = vmatprep.subr.mxu0 %v244
    %2238 = vmatpush1.msra.mxu0 %v243
    %2239 = vmatprep.subr.mxu0 %v240
    %2240 = vmatpush1.msra.mxu0 %v239
    %2241 = vmatprep.subr.mxu0 %v236
    %2242 = vmatpush1.msra.mxu0 %v235
    %2243 = vmatprep.subr.mxu0 %v232
    %2244 = vmatpush1.msra.mxu0 %v231
    %2245 = vmatprep.subr.mxu0 %v228
    %2246 = vmatpush1.msra.mxu0 %v227
    %2247 = vmatprep.subr.mxu0 %v224
    %2248 = vmatpush1.msra.mxu0 %v223
    %2249 = vmatprep.subr.mxu0 %v220
    %2250 = vmatpush1.msra.mxu0 %v219
    %2251 = vmatprep.subr.mxu0 %v216
    %2252 = vmatpush1.msra.mxu0 %v215
    %2253 = vmatprep.subr.mxu0 %v212
    %2254 = vmatpush1.msra.mxu0 %v211
    %2255 = vmatprep.subr.mxu0 %v336
    %2256 = vmatpush2.msra.mxu0 %v335
    %2257 = vmatprep.subr.mxu0 %v332
    %2258 = vmatpush2.msra.mxu0 %v331
    %2259 = vmatprep.subr.mxu0 %v328
    %2260 = vmatpush2.msra.mxu0 %v327
    %2261 = vmatprep.subr.mxu0 %v324
    %2262 = vmatpush2.msra.mxu0 %v323
    %2263 = vmatprep.subr.mxu0 %v320
    %2264 = vmatpush2.msra.mxu0 %v319
    %2265 = vmatprep.subr.mxu0 %v316
    %2266 = vmatpush2.msra.mxu0 %v315
    %2267 = vmatprep.subr.mxu0 %v312
    %2268 = vmatpush2.msra.mxu0 %v311
    %2269 = vmatprep.subr.mxu0 %v308
    %2270 = vmatpush2.msra.mxu0 %v307
    %2271 = vmatprep.subr.mxu0 %v304
    %2272 = vmatpush2.msra.mxu0 %v303
    %2273 = vmatprep.subr.mxu0 %v300
    %2274 = vmatpush2.msra.mxu0 %v299
    %2275 = vmatprep.subr.mxu0 %v296
    %2276 = vmatpush2.msra.mxu0 %v295
    %2277 = vmatprep.subr.mxu0 %v292
    %2278 = vmatpush2.msra.mxu0 %v291
    %2279 = vmatprep.subr.mxu0 %v288
    %2280 = vmatpush2.msra.mxu0 %v287
    %2281 = vmatprep.subr.mxu0 %v284
    %2282 = vmatpush2.msra.mxu0 %v283
    %2283 = vmatprep.subr.mxu0 %v280
    %2284 = vmatpush2.msra.mxu0 %v279
    %2285 = vmatprep.subr.mxu0 %v276
    %2286 = vmatpush2.msra.mxu0 %v275
    %2287 = vmatprep.mubr.f32.mxu0 %v2054
    %2288 = vmatmul.mubr.f32.gmra.mxu0 %v2222
    %v2289 = vpop.f32.mrf.mxu0
    %v2290 = vadd.f32 %v536, %v2289
    %v2291 = vpop.f32.mrf.mxu0
    %v2292 = vadd.f32 %v540, %v2291
    %2293 = vdwg.mxu0
    %2294 = vmatprep.subr.mxu0 %v274
    %2295 = vmatpush1.msra.mxu0 %v273
    %2296 = vmatprep.subr.mxu0 %v270
    %2297 = vmatpush1.msra.mxu0 %v269
    %2298 = vmatprep.subr.mxu0 %v266
    %2299 = vmatpush1.msra.mxu0 %v265
    %2300 = vmatprep.subr.mxu0 %v262
    %2301 = vmatpush1.msra.mxu0 %v261
    %2302 = vmatprep.subr.mxu0 %v258
    %2303 = vmatpush1.msra.mxu0 %v257
    %2304 = vmatprep.subr.mxu0 %v254
    %2305 = vmatpush1.msra.mxu0 %v253
    %2306 = vmatprep.subr.mxu0 %v250
    %2307 = vmatpush1.msra.mxu0 %v249
    %2308 = vmatprep.subr.mxu0 %v246
    %2309 = vmatpush1.msra.mxu0 %v245
    %2310 = vmatprep.subr.mxu0 %v242
    %2311 = vmatpush1.msra.mxu0 %v241
    %2312 = vmatprep.subr.mxu0 %v238
    %2313 = vmatpush1.msra.mxu0 %v237
    %2314 = vmatprep.subr.mxu0 %v234
    %2315 = vmatpush1.msra.mxu0 %v233
    %2316 = vmatprep.subr.mxu0 %v230
    %2317 = vmatpush1.msra.mxu0 %v229
    %2318 = vmatprep.subr.mxu0 %v226
    %2319 = vmatpush1.msra.mxu0 %v225
    %2320 = vmatprep.subr.mxu0 %v222
    %2321 = vmatpush1.msra.mxu0 %v221
    %2322 = vmatprep.subr.mxu0 %v218
    %2323 = vmatpush1.msra.mxu0 %v217
    %2324 = vmatprep.subr.mxu0 %v214
    %2325 = vmatpush1.msra.mxu0 %v213
    %2326 = vmatprep.subr.mxu0 %v338
    %2327 = vmatpush2.msra.mxu0 %v337
    %2328 = vmatprep.subr.mxu0 %v334
    %2329 = vmatpush2.msra.mxu0 %v333
    %2330 = vmatprep.subr.mxu0 %v330
    %2331 = vmatpush2.msra.mxu0 %v329
    %2332 = vmatprep.subr.mxu0 %v326
    %2333 = vmatpush2.msra.mxu0 %v325
    %2334 = vmatprep.subr.mxu0 %v322
    %2335 = vmatpush2.msra.mxu0 %v321
    %2336 = vmatprep.subr.mxu0 %v318
    %2337 = vmatpush2.msra.mxu0 %v317
    %2338 = vmatprep.subr.mxu0 %v314
    %2339 = vmatpush2.msra.mxu0 %v313
    %2340 = vmatprep.subr.mxu0 %v310
    %2341 = vmatpush2.msra.mxu0 %v309
    %2342 = vmatprep.subr.mxu0 %v306
    %2343 = vmatpush2.msra.mxu0 %v305
    %2344 = vmatprep.subr.mxu0 %v302
    %2345 = vmatpush2.msra.mxu0 %v301
    %2346 = vmatprep.subr.mxu0 %v298
    %2347 = vmatpush2.msra.mxu0 %v297
    %2348 = vmatprep.subr.mxu0 %v294
    %2349 = vmatpush2.msra.mxu0 %v293
    %2350 = vmatprep.subr.mxu0 %v290
    %2351 = vmatpush2.msra.mxu0 %v289
    %2352 = vmatprep.subr.mxu0 %v286
    %2353 = vmatpush2.msra.mxu0 %v285
    %2354 = vmatprep.subr.mxu0 %v282
    %2355 = vmatpush2.msra.mxu0 %v281
    %2356 = vmatprep.subr.mxu0 %v278
    %2357 = vmatpush2.msra.mxu0 %v277
    %2358 = vmatprep.mubr.f32.mxu0 %v2054
    %2359 = vmatmul.mubr.f32.gmra.mxu0 %v2222
    %v2360 = vpop.f32.mrf.mxu0
    %v2361 = vadd.f32 %v544, %v2360
    %v2362 = vpop.f32.mrf.mxu0
    %v2363 = vadd.f32 %v548, %v2362
    %2364 = vdwg.mxu0
    %v2365 = vxor.u32 %v2290, 2147483648
    %v2366 = vmul.f32 %v2365, 1.442695
    %v2367 = vpow.pop %v2366
    %v2368 = vadd.f32 %v2367, 1.0
    %v2369 = vrcp.pop %v2368
    %v2370 = vmul.f32 1.0, %v2369
    %v2371 = vxor.u32 %v2292, 2147483648
    %v2372 = vmul.f32 %v2371, 1.442695
    %v2373 = vpow.pop %v2372
    %v2374 = vadd.f32 %v2373, 1.0
    %v2375 = vrcp.pop %v2374
    %v2376 = vmul.f32 1.0, %v2375
    %v2377 = vtanh.pop %v2361
    %v2378 = vxor.u32 %v2363, 2147483648
    %v2379 = vmul.f32 %v2378, 1.442695
    %v2380 = vpow.pop %v2379
    %v2381 = vadd.f32 %v2380, 1.0
    %v2382 = vrcp.pop %v2381
    %v2383 = vmul.f32 1.0, %v2382
    %v2384 = vmul.f32 %v2376, %v2052
    %v2385 = vmul.f32 %v2370, %v2377
    %v2386 = vadd.f32 %v2384, %v2385
    %v2387 = vtanh.pop %v2386
    %v2388 = vmul.f32 %v2383, %v2387
    %s2389 = scalar_lea.vmem [#allocation6], 48
    %v2390 = vld [vmem:[%s2389] sm:$0xff]
    %2391 = vmatprep.subr.mxu0 %v143
    %2392 = vmatpush1.msra.mxu0 %v142
    %2393 = vmatprep.subr.mxu0 %v139
    %2394 = vmatpush1.msra.mxu0 %v138
    %2395 = vmatprep.subr.mxu0 %v135
    %2396 = vmatpush1.msra.mxu0 %v134
    %2397 = vmatprep.subr.mxu0 %v131
    %2398 = vmatpush1.msra.mxu0 %v130
    %2399 = vmatprep.subr.mxu0 %v127
    %2400 = vmatpush1.msra.mxu0 %v126
    %2401 = vmatprep.subr.mxu0 %v123
    %2402 = vmatpush1.msra.mxu0 %v122
    %2403 = vmatprep.subr.mxu0 %v119
    %2404 = vmatpush1.msra.mxu0 %v118
    %2405 = vmatprep.subr.mxu0 %v115
    %2406 = vmatpush1.msra.mxu0 %v114
    %2407 = vmatprep.subr.mxu0 %v111
    %2408 = vmatpush1.msra.mxu0 %v110
    %2409 = vmatprep.subr.mxu0 %v107
    %2410 = vmatpush1.msra.mxu0 %v106
    %2411 = vmatprep.subr.mxu0 %v103
    %2412 = vmatpush1.msra.mxu0 %v102
    %2413 = vmatprep.subr.mxu0 %v99
    %2414 = vmatpush1.msra.mxu0 %v98
    %2415 = vmatprep.subr.mxu0 %v95
    %2416 = vmatpush1.msra.mxu0 %v94
    %2417 = vmatprep.subr.mxu0 %v91
    %2418 = vmatpush1.msra.mxu0 %v90
    %2419 = vmatprep.subr.mxu0 %v87
    %2420 = vmatpush1.msra.mxu0 %v86
    %2421 = vmatprep.subr.mxu0 %v83
    %2422 = vmatpush1.msra.mxu0 %v82
    %2423 = vmatprep.subr.mxu0 %v207
    %2424 = vmatpush2.msra.mxu0 %v206
    %2425 = vmatprep.subr.mxu0 %v203
    %2426 = vmatpush2.msra.mxu0 %v202
    %2427 = vmatprep.subr.mxu0 %v199
    %2428 = vmatpush2.msra.mxu0 %v198
    %2429 = vmatprep.subr.mxu0 %v195
    %2430 = vmatpush2.msra.mxu0 %v194
    %2431 = vmatprep.subr.mxu0 %v191
    %2432 = vmatpush2.msra.mxu0 %v190
    %2433 = vmatprep.subr.mxu0 %v187
    %2434 = vmatpush2.msra.mxu0 %v186
    %2435 = vmatprep.subr.mxu0 %v183
    %2436 = vmatpush2.msra.mxu0 %v182
    %2437 = vmatprep.subr.mxu0 %v179
    %2438 = vmatpush2.msra.mxu0 %v178
    %2439 = vmatprep.subr.mxu0 %v175
    %2440 = vmatpush2.msra.mxu0 %v174
    %2441 = vmatprep.subr.mxu0 %v171
    %2442 = vmatpush2.msra.mxu0 %v170
    %2443 = vmatprep.subr.mxu0 %v167
    %2444 = vmatpush2.msra.mxu0 %v166
    %2445 = vmatprep.subr.mxu0 %v163
    %2446 = vmatpush2.msra.mxu0 %v162
    %2447 = vmatprep.subr.mxu0 %v159
    %2448 = vmatpush2.msra.mxu0 %v158
    %2449 = vmatprep.subr.mxu0 %v155
    %2450 = vmatpush2.msra.mxu0 %v154
    %2451 = vmatprep.subr.mxu0 %v151
    %2452 = vmatpush2.msra.mxu0 %v150
    %2453 = vmatprep.subr.mxu0 %v147
    %2454 = vmatpush2.msra.mxu0 %v146
    %2455 = vmatprep.mubr.f32.mxu0 %v2222
    %2456 = vmatmul.mubr.f32.gmra.mxu0 %v2390
    %v2457 = vpop.f32.mrf.mxu0
    %v2458 = vadd.f32 %v349, %v2457
    %v2459 = vpop.f32.mrf.mxu0
    %v2460 = vadd.f32 %v353, %v2459
    %2461 = vdwg.mxu0
    %2462 = vmatprep.subr.mxu0 %v145
    %2463 = vmatpush1.msra.mxu0 %v144
    %2464 = vmatprep.subr.mxu0 %v141
    %2465 = vmatpush1.msra.mxu0 %v140
    %2466 = vmatprep.subr.mxu0 %v137
    %2467 = vmatpush1.msra.mxu0 %v136
    %2468 = vmatprep.subr.mxu0 %v133
    %2469 = vmatpush1.msra.mxu0 %v132
    %2470 = vmatprep.subr.mxu0 %v129
    %2471 = vmatpush1.msra.mxu0 %v128
    %2472 = vmatprep.subr.mxu0 %v125
    %2473 = vmatpush1.msra.mxu0 %v124
    %2474 = vmatprep.subr.mxu0 %v121
    %2475 = vmatpush1.msra.mxu0 %v120
    %2476 = vmatprep.subr.mxu0 %v117
    %2477 = vmatpush1.msra.mxu0 %v116
    %2478 = vmatprep.subr.mxu0 %v113
    %2479 = vmatpush1.msra.mxu0 %v112
    %2480 = vmatprep.subr.mxu0 %v109
    %2481 = vmatpush1.msra.mxu0 %v108
    %2482 = vmatprep.subr.mxu0 %v105
    %2483 = vmatpush1.msra.mxu0 %v104
    %2484 = vmatprep.subr.mxu0 %v101
    %2485 = vmatpush1.msra.mxu0 %v100
    %2486 = vmatprep.subr.mxu0 %v97
    %2487 = vmatpush1.msra.mxu0 %v96
    %2488 = vmatprep.subr.mxu0 %v93
    %2489 = vmatpush1.msra.mxu0 %v92
    %2490 = vmatprep.subr.mxu0 %v89
    %2491 = vmatpush1.msra.mxu0 %v88
    %2492 = vmatprep.subr.mxu0 %v85
    %2493 = vmatpush1.msra.mxu0 %v84
    %2494 = vmatprep.subr.mxu0 %v209
    %2495 = vmatpush2.msra.mxu0 %v208
    %2496 = vmatprep.subr.mxu0 %v205
    %2497 = vmatpush2.msra.mxu0 %v204
    %2498 = vmatprep.subr.mxu0 %v201
    %2499 = vmatpush2.msra.mxu0 %v200
    %2500 = vmatprep.subr.mxu0 %v197
    %2501 = vmatpush2.msra.mxu0 %v196
    %2502 = vmatprep.subr.mxu0 %v193
    %2503 = vmatpush2.msra.mxu0 %v192
    %2504 = vmatprep.subr.mxu0 %v189
    %2505 = vmatpush2.msra.mxu0 %v188
    %2506 = vmatprep.subr.mxu0 %v185
    %2507 = vmatpush2.msra.mxu0 %v184
    %2508 = vmatprep.subr.mxu0 %v181
    %2509 = vmatpush2.msra.mxu0 %v180
    %2510 = vmatprep.subr.mxu0 %v177
    %2511 = vmatpush2.msra.mxu0 %v176
    %2512 = vmatprep.subr.mxu0 %v173
    %2513 = vmatpush2.msra.mxu0 %v172
    %2514 = vmatprep.subr.mxu0 %v169
    %2515 = vmatpush2.msra.mxu0 %v168
    %2516 = vmatprep.subr.mxu0 %v165
    %2517 = vmatpush2.msra.mxu0 %v164
    %2518 = vmatprep.subr.mxu0 %v161
    %2519 = vmatpush2.msra.mxu0 %v160
    %2520 = vmatprep.subr.mxu0 %v157
    %2521 = vmatpush2.msra.mxu0 %v156
    %2522 = vmatprep.subr.mxu0 %v153
    %2523 = vmatpush2.msra.mxu0 %v152
    %2524 = vmatprep.subr.mxu0 %v149
    %2525 = vmatpush2.msra.mxu0 %v148
    %2526 = vmatprep.mubr.f32.mxu0 %v2222
    %2527 = vmatmul.mubr.f32.gmra.mxu0 %v2390
    %v2528 = vpop.f32.mrf.mxu0
    %v2529 = vadd.f32 %v357, %v2528
    %v2530 = vpop.f32.mrf.mxu0
    %v2531 = vadd.f32 %v361, %v2530
    %2532 = vdwg.mxu0
    %v2533 = vxor.u32 %v2458, 2147483648
    %v2534 = vmul.f32 %v2533, 1.442695
    %v2535 = vpow.pop %v2534
    %v2536 = vadd.f32 %v2535, 1.0
    %v2537 = vrcp.pop %v2536
    %v2538 = vmul.f32 1.0, %v2537
    %v2539 = vxor.u32 %v2460, 2147483648
    %v2540 = vmul.f32 %v2539, 1.442695
    %v2541 = vpow.pop %v2540
    %v2542 = vadd.f32 %v2541, 1.0
    %v2543 = vrcp.pop %v2542
    %v2544 = vmul.f32 1.0, %v2543
    %v2545 = vtanh.pop %v2529
    %v2546 = vxor.u32 %v2531, 2147483648
    %v2547 = vmul.f32 %v2546, 1.442695
    %v2548 = vpow.pop %v2547
    %v2549 = vadd.f32 %v2548, 1.0
    %v2550 = vrcp.pop %v2549
    %v2551 = vmul.f32 1.0, %v2550
    %v2552 = vmul.f32 %v2544, %v2220
    %v2553 = vmul.f32 %v2538, %v2545
    %v2554 = vadd.f32 %v2552, %v2553
    %v2555 = vtanh.pop %v2554
    %v2556 = vmul.f32 %v2551, %v2555
    %2557 = vmatprep.subr.mxu0 %v272
    %2558 = vmatpush1.msra.mxu0 %v271
    %2559 = vmatprep.subr.mxu0 %v268
    %2560 = vmatpush1.msra.mxu0 %v267
    %2561 = vmatprep.subr.mxu0 %v264
    %2562 = vmatpush1.msra.mxu0 %v263
    %2563 = vmatprep.subr.mxu0 %v260
    %2564 = vmatpush1.msra.mxu0 %v259
    %2565 = vmatprep.subr.mxu0 %v256
    %2566 = vmatpush1.msra.mxu0 %v255
    %2567 = vmatprep.subr.mxu0 %v252
    %2568 = vmatpush1.msra.mxu0 %v251
    %2569 = vmatprep.subr.mxu0 %v248
    %2570 = vmatpush1.msra.mxu0 %v247
    %2571 = vmatprep.subr.mxu0 %v244
    %2572 = vmatpush1.msra.mxu0 %v243
    %2573 = vmatprep.subr.mxu0 %v240
    %2574 = vmatpush1.msra.mxu0 %v239
    %2575 = vmatprep.subr.mxu0 %v236
    %2576 = vmatpush1.msra.mxu0 %v235
    %2577 = vmatprep.subr.mxu0 %v232
    %2578 = vmatpush1.msra.mxu0 %v231
    %2579 = vmatprep.subr.mxu0 %v228
    %2580 = vmatpush1.msra.mxu0 %v227
    %2581 = vmatprep.subr.mxu0 %v224
    %2582 = vmatpush1.msra.mxu0 %v223
    %2583 = vmatprep.subr.mxu0 %v220
    %2584 = vmatpush1.msra.mxu0 %v219
    %2585 = vmatprep.subr.mxu0 %v216
    %2586 = vmatpush1.msra.mxu0 %v215
    %2587 = vmatprep.subr.mxu0 %v212
    %2588 = vmatpush1.msra.mxu0 %v211
    %2589 = vmatprep.subr.mxu0 %v336
    %2590 = vmatpush2.msra.mxu0 %v335
    %2591 = vmatprep.subr.mxu0 %v332
    %2592 = vmatpush2.msra.mxu0 %v331
    %2593 = vmatprep.subr.mxu0 %v328
    %2594 = vmatpush2.msra.mxu0 %v327
    %2595 = vmatprep.subr.mxu0 %v324
    %2596 = vmatpush2.msra.mxu0 %v323
    %2597 = vmatprep.subr.mxu0 %v320
    %2598 = vmatpush2.msra.mxu0 %v319
    %2599 = vmatprep.subr.mxu0 %v316
    %2600 = vmatpush2.msra.mxu0 %v315
    %2601 = vmatprep.subr.mxu0 %v312
    %2602 = vmatpush2.msra.mxu0 %v311
    %2603 = vmatprep.subr.mxu0 %v308
    %2604 = vmatpush2.msra.mxu0 %v307
    %2605 = vmatprep.subr.mxu0 %v304
    %2606 = vmatpush2.msra.mxu0 %v303
    %2607 = vmatprep.subr.mxu0 %v300
    %2608 = vmatpush2.msra.mxu0 %v299
    %2609 = vmatprep.subr.mxu0 %v296
    %2610 = vmatpush2.msra.mxu0 %v295
    %2611 = vmatprep.subr.mxu0 %v292
    %2612 = vmatpush2.msra.mxu0 %v291
    %2613 = vmatprep.subr.mxu0 %v288
    %2614 = vmatpush2.msra.mxu0 %v287
    %2615 = vmatprep.subr.mxu0 %v284
    %2616 = vmatpush2.msra.mxu0 %v283
    %2617 = vmatprep.subr.mxu0 %v280
    %2618 = vmatpush2.msra.mxu0 %v279
    %2619 = vmatprep.subr.mxu0 %v276
    %2620 = vmatpush2.msra.mxu0 %v275
    %2621 = vmatprep.mubr.f32.mxu0 %v2388
    %2622 = vmatmul.mubr.f32.gmra.mxu0 %v2556
    %v2623 = vpop.f32.mrf.mxu0
    %v2624 = vadd.f32 %v536, %v2623
    %v2625 = vpop.f32.mrf.mxu0
    %v2626 = vadd.f32 %v540, %v2625
    %2627 = vdwg.mxu0
    %2628 = vmatprep.subr.mxu0 %v274
    %2629 = vmatpush1.msra.mxu0 %v273
    %2630 = vmatprep.subr.mxu0 %v270
    %2631 = vmatpush1.msra.mxu0 %v269
    %2632 = vmatprep.subr.mxu0 %v266
    %2633 = vmatpush1.msra.mxu0 %v265
    %2634 = vmatprep.subr.mxu0 %v262
    %2635 = vmatpush1.msra.mxu0 %v261
    %2636 = vmatprep.subr.mxu0 %v258
    %2637 = vmatpush1.msra.mxu0 %v257
    %2638 = vmatprep.subr.mxu0 %v254
    %2639 = vmatpush1.msra.mxu0 %v253
    %2640 = vmatprep.subr.mxu0 %v250
    %2641 = vmatpush1.msra.mxu0 %v249
    %2642 = vmatprep.subr.mxu0 %v246
    %2643 = vmatpush1.msra.mxu0 %v245
    %2644 = vmatprep.subr.mxu0 %v242
    %2645 = vmatpush1.msra.mxu0 %v241
    %2646 = vmatprep.subr.mxu0 %v238
    %2647 = vmatpush1.msra.mxu0 %v237
    %2648 = vmatprep.subr.mxu0 %v234
    %2649 = vmatpush1.msra.mxu0 %v233
    %2650 = vmatprep.subr.mxu0 %v230
    %2651 = vmatpush1.msra.mxu0 %v229
    %2652 = vmatprep.subr.mxu0 %v226
    %2653 = vmatpush1.msra.mxu0 %v225
    %2654 = vmatprep.subr.mxu0 %v222
    %2655 = vmatpush1.msra.mxu0 %v221
    %2656 = vmatprep.subr.mxu0 %v218
    %2657 = vmatpush1.msra.mxu0 %v217
    %2658 = vmatprep.subr.mxu0 %v214
    %2659 = vmatpush1.msra.mxu0 %v213
    %2660 = vmatprep.subr.mxu0 %v338
    %2661 = vmatpush2.msra.mxu0 %v337
    %2662 = vmatprep.subr.mxu0 %v334
    %2663 = vmatpush2.msra.mxu0 %v333
    %2664 = vmatprep.subr.mxu0 %v330
    %2665 = vmatpush2.msra.mxu0 %v329
    %2666 = vmatprep.subr.mxu0 %v326
    %2667 = vmatpush2.msra.mxu0 %v325
    %2668 = vmatprep.subr.mxu0 %v322
    %2669 = vmatpush2.msra.mxu0 %v321
    %2670 = vmatprep.subr.mxu0 %v318
    %2671 = vmatpush2.msra.mxu0 %v317
    %2672 = vmatprep.subr.mxu0 %v314
    %2673 = vmatpush2.msra.mxu0 %v313
    %2674 = vmatprep.subr.mxu0 %v310
    %2675 = vmatpush2.msra.mxu0 %v309
    %2676 = vmatprep.subr.mxu0 %v306
    %2677 = vmatpush2.msra.mxu0 %v305
    %2678 = vmatprep.subr.mxu0 %v302
    %2679 = vmatpush2.msra.mxu0 %v301
    %2680 = vmatprep.subr.mxu0 %v298
    %2681 = vmatpush2.msra.mxu0 %v297
    %2682 = vmatprep.subr.mxu0 %v294
    %2683 = vmatpush2.msra.mxu0 %v293
    %2684 = vmatprep.subr.mxu0 %v290
    %2685 = vmatpush2.msra.mxu0 %v289
    %2686 = vmatprep.subr.mxu0 %v286
    %2687 = vmatpush2.msra.mxu0 %v285
    %2688 = vmatprep.subr.mxu0 %v282
    %2689 = vmatpush2.msra.mxu0 %v281
    %2690 = vmatprep.subr.mxu0 %v278
    %2691 = vmatpush2.msra.mxu0 %v277
    %2692 = vmatprep.mubr.f32.mxu0 %v2388
    %2693 = vmatmul.mubr.f32.gmra.mxu0 %v2556
    %v2694 = vpop.f32.mrf.mxu0
    %v2695 = vadd.f32 %v544, %v2694
    %v2696 = vpop.f32.mrf.mxu0
    %v2697 = vadd.f32 %v548, %v2696
    %2698 = vdwg.mxu0
    %v2699 = vxor.u32 %v2624, 2147483648
    %v2700 = vmul.f32 %v2699, 1.442695
    %v2701 = vpow.pop %v2700
    %v2702 = vadd.f32 %v2701, 1.0
    %v2703 = vrcp.pop %v2702
    %v2704 = vmul.f32 1.0, %v2703
    %v2705 = vxor.u32 %v2626, 2147483648
    %v2706 = vmul.f32 %v2705, 1.442695
    %v2707 = vpow.pop %v2706
    %v2708 = vadd.f32 %v2707, 1.0
    %v2709 = vrcp.pop %v2708
    %v2710 = vmul.f32 1.0, %v2709
    %v2711 = vtanh.pop %v2695
    %v2712 = vxor.u32 %v2697, 2147483648
    %v2713 = vmul.f32 %v2712, 1.442695
    %v2714 = vpow.pop %v2713
    %v2715 = vadd.f32 %v2714, 1.0
    %v2716 = vrcp.pop %v2715
    %v2717 = vmul.f32 1.0, %v2716
    %v2718 = vmul.f32 %v2710, %v2386
    %v2719 = vmul.f32 %v2704, %v2711
    %v2720 = vadd.f32 %v2718, %v2719
    %v2721 = vtanh.pop %v2720
    %v2722 = vmul.f32 %v2717, %v2721
    %s2723 = scalar_lea.vmem [#allocation6], 56
    %v2724 = vld [vmem:[%s2723] sm:$0xff]
    %2725 = vmatprep.subr.mxu0 %v143
    %2726 = vmatpush1.msra.mxu0 %v142
    %2727 = vmatprep.subr.mxu0 %v139
    %2728 = vmatpush1.msra.mxu0 %v138
    %2729 = vmatprep.subr.mxu0 %v135
    %2730 = vmatpush1.msra.mxu0 %v134
    %2731 = vmatprep.subr.mxu0 %v131
    %2732 = vmatpush1.msra.mxu0 %v130
    %2733 = vmatprep.subr.mxu0 %v127
    %2734 = vmatpush1.msra.mxu0 %v126
    %2735 = vmatprep.subr.mxu0 %v123
    %2736 = vmatpush1.msra.mxu0 %v122
    %2737 = vmatprep.subr.mxu0 %v119
    %2738 = vmatpush1.msra.mxu0 %v118
    %2739 = vmatprep.subr.mxu0 %v115
    %2740 = vmatpush1.msra.mxu0 %v114
    %2741 = vmatprep.subr.mxu0 %v111
    %2742 = vmatpush1.msra.mxu0 %v110
    %2743 = vmatprep.subr.mxu0 %v107
    %2744 = vmatpush1.msra.mxu0 %v106
    %2745 = vmatprep.subr.mxu0 %v103
    %2746 = vmatpush1.msra.mxu0 %v102
    %2747 = vmatprep.subr.mxu0 %v99
    %2748 = vmatpush1.msra.mxu0 %v98
    %2749 = vmatprep.subr.mxu0 %v95
    %2750 = vmatpush1.msra.mxu0 %v94
    %2751 = vmatprep.subr.mxu0 %v91
    %2752 = vmatpush1.msra.mxu0 %v90
    %2753 = vmatprep.subr.mxu0 %v87
    %2754 = vmatpush1.msra.mxu0 %v86
    %2755 = vmatprep.subr.mxu0 %v83
    %2756 = vmatpush1.msra.mxu0 %v82
    %2757 = vmatprep.subr.mxu0 %v207
    %2758 = vmatpush2.msra.mxu0 %v206
    %2759 = vmatprep.subr.mxu0 %v203
    %2760 = vmatpush2.msra.mxu0 %v202
    %2761 = vmatprep.subr.mxu0 %v199
    %2762 = vmatpush2.msra.mxu0 %v198
    %2763 = vmatprep.subr.mxu0 %v195
    %2764 = vmatpush2.msra.mxu0 %v194
    %2765 = vmatprep.subr.mxu0 %v191
    %2766 = vmatpush2.msra.mxu0 %v190
    %2767 = vmatprep.subr.mxu0 %v187
    %2768 = vmatpush2.msra.mxu0 %v186
    %2769 = vmatprep.subr.mxu0 %v183
    %2770 = vmatpush2.msra.mxu0 %v182
    %2771 = vmatprep.subr.mxu0 %v179
    %2772 = vmatpush2.msra.mxu0 %v178
    %2773 = vmatprep.subr.mxu0 %v175
    %2774 = vmatpush2.msra.mxu0 %v174
    %2775 = vmatprep.subr.mxu0 %v171
    %2776 = vmatpush2.msra.mxu0 %v170
    %2777 = vmatprep.subr.mxu0 %v167
    %2778 = vmatpush2.msra.mxu0 %v166
    %2779 = vmatprep.subr.mxu0 %v163
    %2780 = vmatpush2.msra.mxu0 %v162
    %2781 = vmatprep.subr.mxu0 %v159
    %2782 = vmatpush2.msra.mxu0 %v158
    %2783 = vmatprep.subr.mxu0 %v155
    %2784 = vmatpush2.msra.mxu0 %v154
    %2785 = vmatprep.subr.mxu0 %v151
    %2786 = vmatpush2.msra.mxu0 %v150
    %2787 = vmatprep.subr.mxu0 %v147
    %2788 = vmatpush2.msra.mxu0 %v146
    %2789 = vmatprep.mubr.f32.mxu0 %v2556
    %2790 = vmatmul.mubr.f32.gmra.mxu0 %v2724
    %v2791 = vpop.f32.mrf.mxu0
    %v2792 = vadd.f32 %v349, %v2791
    %v2793 = vpop.f32.mrf.mxu0
    %v2794 = vadd.f32 %v353, %v2793
    %2795 = vdwg.mxu0
    %2796 = vmatprep.subr.mxu0 %v145
    %2797 = vmatpush1.msra.mxu0 %v144
    %2798 = vmatprep.subr.mxu0 %v141
    %2799 = vmatpush1.msra.mxu0 %v140
    %2800 = vmatprep.subr.mxu0 %v137
    %2801 = vmatpush1.msra.mxu0 %v136
    %2802 = vmatprep.subr.mxu0 %v133
    %2803 = vmatpush1.msra.mxu0 %v132
    %2804 = vmatprep.subr.mxu0 %v129
    %2805 = vmatpush1.msra.mxu0 %v128
    %2806 = vmatprep.subr.mxu0 %v125
    %2807 = vmatpush1.msra.mxu0 %v124
    %2808 = vmatprep.subr.mxu0 %v121
    %2809 = vmatpush1.msra.mxu0 %v120
    %2810 = vmatprep.subr.mxu0 %v117
    %2811 = vmatpush1.msra.mxu0 %v116
    %2812 = vmatprep.subr.mxu0 %v113
    %2813 = vmatpush1.msra.mxu0 %v112
    %2814 = vmatprep.subr.mxu0 %v109
    %2815 = vmatpush1.msra.mxu0 %v108
    %2816 = vmatprep.subr.mxu0 %v105
    %2817 = vmatpush1.msra.mxu0 %v104
    %2818 = vmatprep.subr.mxu0 %v101
    %2819 = vmatpush1.msra.mxu0 %v100
    %2820 = vmatprep.subr.mxu0 %v97
    %2821 = vmatpush1.msra.mxu0 %v96
    %2822 = vmatprep.subr.mxu0 %v93
    %2823 = vmatpush1.msra.mxu0 %v92
    %2824 = vmatprep.subr.mxu0 %v89
    %2825 = vmatpush1.msra.mxu0 %v88
    %2826 = vmatprep.subr.mxu0 %v85
    %2827 = vmatpush1.msra.mxu0 %v84
    %2828 = vmatprep.subr.mxu0 %v209
    %2829 = vmatpush2.msra.mxu0 %v208
    %2830 = vmatprep.subr.mxu0 %v205
    %2831 = vmatpush2.msra.mxu0 %v204
    %2832 = vmatprep.subr.mxu0 %v201
    %2833 = vmatpush2.msra.mxu0 %v200
    %2834 = vmatprep.subr.mxu0 %v197
    %2835 = vmatpush2.msra.mxu0 %v196
    %2836 = vmatprep.subr.mxu0 %v193
    %2837 = vmatpush2.msra.mxu0 %v192
    %2838 = vmatprep.subr.mxu0 %v189
    %2839 = vmatpush2.msra.mxu0 %v188
    %2840 = vmatprep.subr.mxu0 %v185
    %2841 = vmatpush2.msra.mxu0 %v184
    %2842 = vmatprep.subr.mxu0 %v181
    %2843 = vmatpush2.msra.mxu0 %v180
    %2844 = vmatprep.subr.mxu0 %v177
    %2845 = vmatpush2.msra.mxu0 %v176
    %2846 = vmatprep.subr.mxu0 %v173
    %2847 = vmatpush2.msra.mxu0 %v172
    %2848 = vmatprep.subr.mxu0 %v169
    %2849 = vmatpush2.msra.mxu0 %v168
    %2850 = vmatprep.subr.mxu0 %v165
    %2851 = vmatpush2.msra.mxu0 %v164
    %2852 = vmatprep.subr.mxu0 %v161
    %2853 = vmatpush2.msra.mxu0 %v160
    %2854 = vmatprep.subr.mxu0 %v157
    %2855 = vmatpush2.msra.mxu0 %v156
    %2856 = vmatprep.subr.mxu0 %v153
    %2857 = vmatpush2.msra.mxu0 %v152
    %2858 = vmatprep.subr.mxu0 %v149
    %2859 = vmatpush2.msra.mxu0 %v148
    %2860 = vmatprep.mubr.f32.mxu0 %v2556
    %2861 = vmatmul.mubr.f32.gmra.mxu0 %v2724
    %v2862 = vpop.f32.mrf.mxu0
    %v2863 = vadd.f32 %v357, %v2862
    %v2864 = vpop.f32.mrf.mxu0
    %v2865 = vadd.f32 %v361, %v2864
    %2866 = vdwg.mxu0
    %v2867 = vxor.u32 %v2792, 2147483648
    %v2868 = vmul.f32 %v2867, 1.442695
    %v2869 = vpow.pop %v2868
    %v2870 = vadd.f32 %v2869, 1.0
    %v2871 = vrcp.pop %v2870
    %v2872 = vmul.f32 1.0, %v2871
    %v2873 = vxor.u32 %v2794, 2147483648
    %v2874 = vmul.f32 %v2873, 1.442695
    %v2875 = vpow.pop %v2874
    %v2876 = vadd.f32 %v2875, 1.0
    %v2877 = vrcp.pop %v2876
    %v2878 = vmul.f32 1.0, %v2877
    %v2879 = vtanh.pop %v2863
    %v2880 = vxor.u32 %v2865, 2147483648
    %v2881 = vmul.f32 %v2880, 1.442695
    %v2882 = vpow.pop %v2881
    %v2883 = vadd.f32 %v2882, 1.0
    %v2884 = vrcp.pop %v2883
    %v2885 = vmul.f32 1.0, %v2884
    %v2886 = vmul.f32 %v2878, %v2554
    %v2887 = vmul.f32 %v2872, %v2879
    %v2888 = vadd.f32 %v2886, %v2887
    %v2889 = vtanh.pop %v2888
    %v2890 = vmul.f32 %v2885, %v2889
    %2891 = vmatprep.subr.mxu0 %v272
    %2892 = vmatpush1.msra.mxu0 %v271
    %2893 = vmatprep.subr.mxu0 %v268
    %2894 = vmatpush1.msra.mxu0 %v267
    %2895 = vmatprep.subr.mxu0 %v264
    %2896 = vmatpush1.msra.mxu0 %v263
    %2897 = vmatprep.subr.mxu0 %v260
    %2898 = vmatpush1.msra.mxu0 %v259
    %2899 = vmatprep.subr.mxu0 %v256
    %2900 = vmatpush1.msra.mxu0 %v255
    %2901 = vmatprep.subr.mxu0 %v252
    %2902 = vmatpush1.msra.mxu0 %v251
    %2903 = vmatprep.subr.mxu0 %v248
    %2904 = vmatpush1.msra.mxu0 %v247
    %2905 = vmatprep.subr.mxu0 %v244
    %2906 = vmatpush1.msra.mxu0 %v243
    %2907 = vmatprep.subr.mxu0 %v240
    %2908 = vmatpush1.msra.mxu0 %v239
    %2909 = vmatprep.subr.mxu0 %v236
    %2910 = vmatpush1.msra.mxu0 %v235
    %2911 = vmatprep.subr.mxu0 %v232
    %2912 = vmatpush1.msra.mxu0 %v231
    %2913 = vmatprep.subr.mxu0 %v228
    %2914 = vmatpush1.msra.mxu0 %v227
    %2915 = vmatprep.subr.mxu0 %v224
    %2916 = vmatpush1.msra.mxu0 %v223
    %2917 = vmatprep.subr.mxu0 %v220
    %2918 = vmatpush1.msra.mxu0 %v219
    %2919 = vmatprep.subr.mxu0 %v216
    %2920 = vmatpush1.msra.mxu0 %v215
    %2921 = vmatprep.subr.mxu0 %v212
    %2922 = vmatpush1.msra.mxu0 %v211
    %2923 = vmatprep.subr.mxu0 %v336
    %2924 = vmatpush2.msra.mxu0 %v335
    %2925 = vmatprep.subr.mxu0 %v332
    %2926 = vmatpush2.msra.mxu0 %v331
    %2927 = vmatprep.subr.mxu0 %v328
    %2928 = vmatpush2.msra.mxu0 %v327
    %2929 = vmatprep.subr.mxu0 %v324
    %2930 = vmatpush2.msra.mxu0 %v323
    %2931 = vmatprep.subr.mxu0 %v320
    %2932 = vmatpush2.msra.mxu0 %v319
    %2933 = vmatprep.subr.mxu0 %v316
    %2934 = vmatpush2.msra.mxu0 %v315
    %2935 = vmatprep.subr.mxu0 %v312
    %2936 = vmatpush2.msra.mxu0 %v311
    %2937 = vmatprep.subr.mxu0 %v308
    %2938 = vmatpush2.msra.mxu0 %v307
    %2939 = vmatprep.subr.mxu0 %v304
    %2940 = vmatpush2.msra.mxu0 %v303
    %2941 = vmatprep.subr.mxu0 %v300
    %2942 = vmatpush2.msra.mxu0 %v299
    %2943 = vmatprep.subr.mxu0 %v296
    %2944 = vmatpush2.msra.mxu0 %v295
    %2945 = vmatprep.subr.mxu0 %v292
    %2946 = vmatpush2.msra.mxu0 %v291
    %2947 = vmatprep.subr.mxu0 %v288
    %2948 = vmatpush2.msra.mxu0 %v287
    %2949 = vmatprep.subr.mxu0 %v284
    %2950 = vmatpush2.msra.mxu0 %v283
    %2951 = vmatprep.subr.mxu0 %v280
    %2952 = vmatpush2.msra.mxu0 %v279
    %2953 = vmatprep.subr.mxu0 %v276
    %2954 = vmatpush2.msra.mxu0 %v275
    %2955 = vmatprep.mubr.f32.mxu0 %v2722
    %2956 = vmatmul.mubr.f32.gmra.mxu0 %v2890
    %v2957 = vpop.f32.mrf.mxu0
    %v2958 = vadd.f32 %v536, %v2957
    %v2959 = vpop.f32.mrf.mxu0
    %v2960 = vadd.f32 %v540, %v2959
    %2961 = vdwg.mxu0
    %2962 = vmatprep.subr.mxu0 %v274
    %2963 = vmatpush1.msra.mxu0 %v273
    %2964 = vmatprep.subr.mxu0 %v270
    %2965 = vmatpush1.msra.mxu0 %v269
    %2966 = vmatprep.subr.mxu0 %v266
    %2967 = vmatpush1.msra.mxu0 %v265
    %2968 = vmatprep.subr.mxu0 %v262
    %2969 = vmatpush1.msra.mxu0 %v261
    %2970 = vmatprep.subr.mxu0 %v258
    %2971 = vmatpush1.msra.mxu0 %v257
    %2972 = vmatprep.subr.mxu0 %v254
    %2973 = vmatpush1.msra.mxu0 %v253
    %2974 = vmatprep.subr.mxu0 %v250
    %2975 = vmatpush1.msra.mxu0 %v249
    %2976 = vmatprep.subr.mxu0 %v246
    %2977 = vmatpush1.msra.mxu0 %v245
    %2978 = vmatprep.subr.mxu0 %v242
    %2979 = vmatpush1.msra.mxu0 %v241
    %2980 = vmatprep.subr.mxu0 %v238
    %2981 = vmatpush1.msra.mxu0 %v237
    %2982 = vmatprep.subr.mxu0 %v234
    %2983 = vmatpush1.msra.mxu0 %v233
    %2984 = vmatprep.subr.mxu0 %v230
    %2985 = vmatpush1.msra.mxu0 %v229
    %2986 = vmatprep.subr.mxu0 %v226
    %2987 = vmatpush1.msra.mxu0 %v225
    %2988 = vmatprep.subr.mxu0 %v222
    %2989 = vmatpush1.msra.mxu0 %v221
    %2990 = vmatprep.subr.mxu0 %v218
    %2991 = vmatpush1.msra.mxu0 %v217
    %2992 = vmatprep.subr.mxu0 %v214
    %2993 = vmatpush1.msra.mxu0 %v213
    %2994 = vmatprep.subr.mxu0 %v338
    %2995 = vmatpush2.msra.mxu0 %v337
    %2996 = vmatprep.subr.mxu0 %v334
    %2997 = vmatpush2.msra.mxu0 %v333
    %2998 = vmatprep.subr.mxu0 %v330
    %2999 = vmatpush2.msra.mxu0 %v329
    %3000 = vmatprep.subr.mxu0 %v326
    %3001 = vmatpush2.msra.mxu0 %v325
    %3002 = vmatprep.subr.mxu0 %v322
    %3003 = vmatpush2.msra.mxu0 %v321
    %3004 = vmatprep.subr.mxu0 %v318
    %3005 = vmatpush2.msra.mxu0 %v317
    %3006 = vmatprep.subr.mxu0 %v314
    %3007 = vmatpush2.msra.mxu0 %v313
    %3008 = vmatprep.subr.mxu0 %v310
    %3009 = vmatpush2.msra.mxu0 %v309
    %3010 = vmatprep.subr.mxu0 %v306
    %3011 = vmatpush2.msra.mxu0 %v305
    %3012 = vmatprep.subr.mxu0 %v302
    %3013 = vmatpush2.msra.mxu0 %v301
    %3014 = vmatprep.subr.mxu0 %v298
    %3015 = vmatpush2.msra.mxu0 %v297
    %3016 = vmatprep.subr.mxu0 %v294
    %3017 = vmatpush2.msra.mxu0 %v293
    %3018 = vmatprep.subr.mxu0 %v290
    %3019 = vmatpush2.msra.mxu0 %v289
    %3020 = vmatprep.subr.mxu0 %v286
    %3021 = vmatpush2.msra.mxu0 %v285
    %3022 = vmatprep.subr.mxu0 %v282
    %3023 = vmatpush2.msra.mxu0 %v281
    %3024 = vmatprep.subr.mxu0 %v278
    %3025 = vmatpush2.msra.mxu0 %v277
    %3026 = vmatprep.mubr.f32.mxu0 %v2722
    %3027 = vmatmul.mubr.f32.gmra.mxu0 %v2890
    %v3028 = vpop.f32.mrf.mxu0
    %v3029 = vadd.f32 %v544, %v3028
    %v3030 = vpop.f32.mrf.mxu0
    %v3031 = vadd.f32 %v548, %v3030
    %3032 = vdwg.mxu0
    %v3033 = vxor.u32 %v2958, 2147483648
    %v3034 = vmul.f32 %v3033, 1.442695
    %v3035 = vpow.pop %v3034
    %v3036 = vadd.f32 %v3035, 1.0
    %v3037 = vrcp.pop %v3036
    %v3038 = vmul.f32 1.0, %v3037
    %v3039 = vxor.u32 %v2960, 2147483648
    %v3040 = vmul.f32 %v3039, 1.442695
    %v3041 = vpow.pop %v3040
    %v3042 = vadd.f32 %v3041, 1.0
    %v3043 = vrcp.pop %v3042
    %v3044 = vmul.f32 1.0, %v3043
    %v3045 = vtanh.pop %v3029
    %v3046 = vxor.u32 %v3031, 2147483648
    %v3047 = vmul.f32 %v3046, 1.442695
    %v3048 = vpow.pop %v3047
    %v3049 = vadd.f32 %v3048, 1.0
    %v3050 = vrcp.pop %v3049
    %v3051 = vmul.f32 1.0, %v3050
    %v3052 = vmul.f32 %v3044, %v2720
    %v3053 = vmul.f32 %v3038, %v3045
    %v3054 = vadd.f32 %v3052, %v3053
    %v3055 = vtanh.pop %v3054
    %v3056 = vmul.f32 %v3051, %v3055
    %3057 = vst [vmem:[#allocation2] sm:$0xff] %v2890
    %3058 = vst [vmem:[#allocation3] sm:$0xff] %v2888
    %3059 = vst [vmem:[#allocation4] sm:$0xff] %v3056
    %3060 = vst [vmem:[#allocation5] sm:$0xff] %v3054
    // Predicated region
    $region42: #{tpu_custom_call.1} parent=1 // pred_check
      %p3061 = pneg %p74
    $region43: #{tpu_custom_call.1} parent=1 // pred_check_branch
      %3063 = sbr.rel (%p3061) target = $region45
    $region44: #{tpu_custom_call.1} parent=1 // pred_region
      %3064 = vst [vmem:[#allocation14] sm:$0xff] %v3056
    $region45: #{tpu_custom_call.1} parent=1 // pred_fallthru
      _
    // Predicated region
    $region46: #{tpu_custom_call.1} parent=1 // pred_check
      _
    $region47: #{tpu_custom_call.1} parent=1 // pred_check_branch
      %3066 = sbr.rel (0) target = $region49
    $region48: #{tpu_custom_call.1} parent=1 // pred_region
      %s3068 = ssub.s32 128, 128
      %3069 = vsyncadd [#allocation8], %s3068
      %s3071 = sshll.u32 [#allocation14], 4
      %s3072 = int_to_ptr.vmem [resolvable:$true] %s3071
      %3074 = dma.vmem_to_hbm [thread:$0]  %s3072, 128, %s5, [#allocation8]
    $region49: #{tpu_custom_call.1} parent=1 // pred_fallthru
      _
    // Predicated region
    $region50: #{tpu_custom_call.1} parent=1 // pred_check
      _
    $region51: #{tpu_custom_call.1} parent=1 // pred_check_branch
      %3076 = sbr.rel (0) target = $region53
    $region52: #{tpu_custom_call.1} parent=1 // pred_region
      %3077 = dma.done [#allocation8], 128
    $region53: #{tpu_custom_call.1} parent=1 // pred_fallthru
      _
    %3078 = vsyncpa [#allocation7], 1
    %3079 = vsyncpa [#allocation10], 1
    %3080 = vsyncpa [#allocation13], 1
    %3081 = vsyncpa [#allocation8], 1

</llo_original>
